<compile_context>
chip_gen: v7x
topology: tpu7x:2x2x1
jax: 0.10.0
libtpu: 0.0.40
codegen_flags: <defaults>
</compile_context>

<pallas_src>
import numpy as np
import jax
import jax.numpy as jnp
from jax import lax
from jax.experimental import pallas as pl
from jax.experimental.pallas import tpu as pltpu


_HEAD_ARG_ORDER = ('wqc', 'bqc', 'wr', 'br', 'wx1', 'wx2', 'wv', 'seg', 'ball',
                   'wm', 'bm', 'wd1', 'bd1', 'wd2', 'bd2')


# ----------------------------------------------------------------------------
# Fused head kernel
# ----------------------------------------------------------------------------
def _fused_head_kernel(h0_ref, h1_ref, h2_ref, h3_ref, h4_ref,
                       wqc_ref, bqc_ref, wr_ref, br_ref,
                       wx1_ref, wx2_ref, wv_ref, seg_ref, ball_ref,
                       wm_ref, bm_ref, wd1_ref, bd1_ref, wd2_ref, bd2_ref,
                       o_ref):
    f32 = jnp.float32
    bf16 = jnp.bfloat16
    h_refs = (h0_ref, h1_ref, h2_ref, h3_ref, h4_ref)
    tm = h0_ref.shape[0]
    eps2 = 1e-16      # (torch cosine_similarity eps = 1e-8)^2

    # --- attention logits + cts_proj1: ONE matmul on the row-stacked block ---
    # xs is a sublane-aligned concat (free layout op).
    xs = jnp.concatenate([r[...] for r in h_refs], axis=0)            # (5tm,256) bf16
    qc = jnp.dot(xs, wqc_ref[...], preferred_element_type=f32) + bqc_ref[...]
    # lanes 0:20 = attention logits (20:32 biased to -1e30), lanes 32:64 = cts.
    logits = qc[:, :32]
    lmax = jnp.max(logits, axis=-1, keepdims=True)
    e = jnp.exp(logits - lmax)
    att = e * pl.reciprocal(jnp.sum(e, axis=-1, keepdims=True), approx=True)  # (5tm,32)
    ct = qc[:, 32:64].astype(bf16)                                     # (5tm,32)

    # lane-concat per-time cts slices -> C (tm, 160)
    c = jnp.concatenate([ct[t * tm:(t + 1) * tm] for t in range(5)], axis=-1)

    # --- all five NTNs batched (block-placed weights; shared seg-sum RHS) ---
    x1t = jnp.dot(c, wx1_ref[...], preferred_element_type=f32).astype(bf16)   # (tm,960)
    x2t = jnp.dot(c, wx2_ref[...], preferred_element_type=f32).astype(bf16)   # (tm,960)
    p2 = jnp.dot(c, wv_ref[...], preferred_element_type=f32)                  # (tm,32)
    # row-stack the three elementwise products -> one bf16 segment-sum matmul
    prods = jnp.concatenate([x1t * x2t, x1t * x1t, x2t * x2t], axis=0)        # (3tm,960)
    red = jnp.dot(prods, seg_ref[...], preferred_element_type=f32)            # (3tm,32)
    num = red[:tm]
    n1sq = jnp.maximum(red[tm:2 * tm], eps2)
    n2sq = jnp.maximum(red[2 * tm:3 * tm], eps2)
    cos = num * lax.rsqrt(n1sq * n2sq)                 # == num / (max(|x1|,eps)*max(|x2|,eps))
    sim = jnp.maximum(cos + p2 + ball_ref[...], 0.0)   # (tm,32); lanes 25:32 stay 0

    # --- meta weights (cts_proj2 folded; W and b fused into one matmul) ---
    wlog = (jnp.dot(sim.astype(bf16), wm_ref[...], preferred_element_type=f32)
            + bm_ref[...])                                              # (tm,11)
    mw_logits = wlog[:, :10]
    wmax = jnp.max(mw_logits, axis=-1, keepdims=True)
    we = jnp.exp(mw_logits - wmax)
    w = we * pl.reciprocal(jnp.sum(we, axis=-1, keepdims=True), approx=True)  # (tm,10)
    b_meta = wlog[:, 10:11]                                             # (tm,1)

    # --- meta-weighted combination (res_mem folded through the linear sum) ---
    # hm slices are re-read from the resident input refs (no long live ranges).
    hid = h_refs[0][...] * w[:, 0:1]
    att_comb = att[:tm] * w[:, 5:6]
    for t in range(1, 5):
        hid = hid + h_refs[t][...] * w[:, t:t + 1]
        att_comb = att_comb + att[t * tm:(t + 1) * tm] * w[:, 5 + t:6 + t]
    w_res = jnp.sum(w[:, 5:10], axis=-1, keepdims=True)                 # (tm,1)
    hid = (hid
           + jnp.dot(att_comb.astype(bf16), wr_ref[...], preferred_element_type=f32)
           + br_ref[...] * w_res
           + b_meta)                                                    # (tm,256)

    # --- decoder MLP 256 -> 512 -> 12 (weights lane-padded -> dense store) ---
    h1 = jnp.maximum(jnp.dot(hid.astype(bf16), wd1_ref[...],
                             preferred_element_type=f32) + bd1_ref[...], 0.0)
    o_ref[...] = (jnp.dot(h1.astype(bf16), wd2_ref[...],
                          preferred_element_type=f32) + bd2_ref[...])


# ----------------------------------------------------------------------------
# pallas_call wrapper
# ----------------------------------------------------------------------------
def _round_up(x, m):
    return ((x + m - 1) // m) * m


def _pick_tm(m2, cap=256):
    """Multiple-of-16 divisor of m2 (no wrapper padding), <= cap, preferring a
    grid of >= 2 steps so both v7x TensorCores get work."""
    div16 = [t for t in range(16, min(cap, m2) + 1, 16) if m2 % t == 0]
    if div16:
        multi = [t for t in div16 if m2 // t >= 2]
        return max(multi) if multi else max(div16)
    div8 = [t for t in range(8, min(cap, m2) + 1, 8) if m2 % t == 0]
    if div8:
        multi = [t for t in div8 if m2 // t >= 2]
        return max(multi) if multi else max(div8)
    return min(cap, _round_up(max(m2, 8), 16))        # fallback: pad


def fused_head_call(slices, prep, tm=None):
    """slices: list of 5 (M2, 256) bf16 arrays.  Returns (M2p, 128) f32
    (lanes 0..11 valid)."""
    assert len(slices) == 5
    M2, C = slices[0].shape
    assert C == 256, C
    if tm is None:
        # Safe default on v5e/v6e/v7x; on v6e with large M2 a cap of 512-1024
        # (with vmem_limit_bytes raised) feeds the MXU even better.
        tm = _pick_tm(M2)
    M2p = _round_up(M2, tm)
    if M2p != M2:
        slices = [jnp.pad(s, ((0, M2p - M2), (0, 0))) for s in slices]
    weights = [prep[k] for k in _HEAD_ARG_ORDER]

    def w_spec(w):
        nd = w.ndim
        return pl.BlockSpec(w.shape, lambda i, _nd=nd: (0,) * _nd)

    return pl.pallas_call(
        _fused_head_kernel,
        out_shape=jax.ShapeDtypeStruct((M2p, 128), jnp.float32),
        grid=(M2p // tm,),
        in_specs=[pl.BlockSpec((tm, C), lambda i: (i, 0)) for _ in range(5)]
                 + [w_spec(w) for w in weights],
        out_specs=pl.BlockSpec((tm, 128), lambda i: (i, 0)),
        compiler_params=pltpu.CompilerParams(
            dimension_semantics=("parallel",)),
    )(*slices, *weights)


# ----------------------------------------------------------------------------
# Parameter preparation (folding / block placement / bf16 casts)
# ----------------------------------------------------------------------------
def _prep_head_params(p):
    bf16 = jnp.bfloat16
    f32 = jnp.float32
    mem = p['memory']                                               # (20, 32)

    # fused [attention logits (20 pad 32) | cts_proj1 (32)] weight/bias.
    wq = p['mem_proj1_w'] @ mem.T                                   # (256, 20)
    bq = p['mem_proj1_b'] @ mem.T                                   # (1, 20)
    wqc = jnp.zeros((256, 64), f32)
    wqc = wqc.at[:, :20].set(wq).at[:, 32:64].set(p['cts_proj1_w'])
    bqc = jnp.zeros((1, 64), f32)
    bqc = (bqc.at[:, :20].set(bq)
               .at[:, 20:32].set(-1e30)                 # dead softmax lanes
               .at[:, 32:64].set(p['cts_proj1_b']))

    # res_mem read-out: memory / mem_proj2 folded, padded to 32 att lanes.
    wr = jnp.zeros((32, 256), f32).at[:20].set(mem @ p['mem_proj2_w'])
    br = p['mem_proj2_b']                                           # (1, 256)

    # NTN block-placed weights over C = [cts0|cts1|cts2|cts3|cts4] (tm, 160).
    pairs = ((0, 1), (1, 3), (0, 3), (2, 4))                        # NTN1..NTN4
    wx1 = jnp.zeros((160, 960), f32)
    wx2 = jnp.zeros((160, 960), f32)
    wv = jnp.zeros((160, 32), f32)
    ball = jnp.zeros((1, 32), f32)
    seg_np = np.zeros((960, 32), np.float32)
    for j, (a, b) in enumerate(pairs):
        q = p['NTN%d' % (j + 1)]
        d = 32
        w1b = jnp.transpose(q['W1'], (1, 0, 2)).reshape(d, 5 * d)   # (32, 160)
        w2b = jnp.transpose(q['W2'], (1, 0, 2)).reshape(d, 5 * d)
        v = q['V'][:, :, 0]                                         # (5, 64)
        wx1 = wx1.at[32 * a:32 * a + 32, 160 * j:160 * (j + 1)].set(w1b)
        wx2 = wx2.at[32 * b:32 * b + 32, 160 * j:160 * (j + 1)].set(w2b)
        wv = wv.at[32 * a:32 * a + 32, 5 * j:5 * j + 5].set(v[:, :d].T)
        wv = wv.at[32 * b:32 * b + 32, 5 * j:5 * j + 5].set(v[:, d:].T)
        ball = ball.at[:, 5 * j:5 * j + 5].set(q['b'].reshape(1, 5))
        for i in range(5):
            seg_np[160 * j + 32 * i:160 * j + 32 * (i + 1), 5 * j + i] = 1.0
    # NTN5: x1 = [cts1|cts2], x2 = [cts3|cts4], d = 64.
    q = p['NTN5']
    d = 64
    w1b = jnp.transpose(q['W1'], (1, 0, 2)).reshape(d, 5 * d)       # (64, 320)
    w2b = jnp.transpose(q['W2'], (1, 0, 2)).reshape(d, 5 * d)
    v = q['V'][:, :, 0]                                             # (5, 128)
    wx1 = wx1.at[32:96, 640:960].set(w1b)
    wx2 = wx2.at[96:160, 640:960].set(w2b)
    wv = wv.at[32:96, 20:25].set(v[:, :d].T)
    wv = wv.at[96:160, 20:25].set(v[:, d:].T)
    ball = ball.at[:, 20:25].set(q['b'].reshape(1, 5))
    for i in range(5):
        seg_np[640 + 64 * i:640 + 64 * (i + 1), 20 + i] = 1.0

    # meta weights: cts_proj2 folded into meta_W / meta_b, fused into (32, 11).
    wc2, bc2 = p['cts_proj2_w'], p['cts_proj2_b']
    wm = jnp.zeros((32, 11), f32)
    wm = wm.at[:25, :10].set(wc2 @ p['meta_W_w'])
    wm = wm.at[:25, 10:11].set(wc2 @ p['meta_b_w'])
    bm = jnp.zeros((1, 11), f32)
    bm = bm.at[:, :10].set(bc2 @ p['meta_W_w'] + p['meta_W_b'])
    bm = bm.at[:, 10:11].set(bc2 @ p['meta_b_w'] + p['meta_b_b'])

    # decoder, output lane-padded to 128 for a dense final store.
    wd2 = jnp.zeros((512, 128), f32).at[:, :12].set(p['dec_w2'])
    bd2 = jnp.zeros((1, 128), f32).at[:, :12].set(p['dec_b2'])

    return {
        'wqc': wqc.astype(bf16), 'bqc': bqc,
        'wr': wr.astype(bf16), 'br': br,
        'wx1': wx1.astype(bf16), 'wx2': wx2.astype(bf16),
        'wv': wv.astype(bf16),
        'seg': jnp.asarray(seg_np).astype(bf16),        # 0/1 -> exact in bf16
        'ball': ball,
        'wm': wm.astype(bf16), 'bm': bm,
        'wd1': p['dec_w1'].astype(bf16), 'bd1': p['dec_b1'],
        'wd2': wd2.astype(bf16), 'bd2': bd2,
    }


# ----------------------------------------------------------------------------
# Parameters (deterministic, xavier-normal-like init) + forward wrapper
# ----------------------------------------------------------------------------
def _xavier(key, shape):
    fan_in, fan_out = shape[-2], shape[-1]
    std = (2.0 / (fan_in + fan_out)) ** 0.5
    return std * jax.random.normal(key, shape, jnp.float32)


def init_params(key, in_dim, t_in):
    ks = iter(jax.random.split(key, 64))
    p = {
        # synthetic encoder (stand-in for gwnet_head): (in_dim*T_in) -> 256
        'enc_w': _xavier(next(ks), (in_dim * t_in, 256)),
        'enc_b': jnp.zeros((256,), jnp.float32),
        'memory': _xavier(next(ks), (20, 32)),
        'mem_proj1_w': _xavier(next(ks), (256, 32)),
        'mem_proj1_b': jnp.zeros((1, 32), jnp.float32),
        'mem_proj2_w': _xavier(next(ks), (32, 256)),
        'mem_proj2_b': jnp.zeros((1, 256), jnp.float32),
        'cts_proj1_w': _xavier(next(ks), (256, 32)),
        'cts_proj1_b': jnp.zeros((1, 32), jnp.float32),
        'cts_proj2_w': _xavier(next(ks), (25, 256)),
        'cts_proj2_b': jnp.zeros((1, 256), jnp.float32),
        'meta_W_w': _xavier(next(ks), (256, 10)),
        'meta_W_b': jnp.zeros((1, 10), jnp.float32),
        'meta_b_w': _xavier(next(ks), (256, 1)),
        'meta_b_b': jnp.zeros((1, 1), jnp.float32),
        'dec_w1': _xavier(next(ks), (256, 512)),
        'dec_b1': jnp.zeros((1, 512), jnp.float32),
        'dec_w2': _xavier(next(ks), (512, 12)),
        'dec_b2': jnp.zeros((1, 12), jnp.float32),
    }
    for name, d in (('NTN1', 32), ('NTN2', 32), ('NTN3', 32),
                    ('NTN4', 32), ('NTN5', 64)):
        p[name] = {
            'W1': _xavier(next(ks), (5, d, d)),
            'W2': _xavier(next(ks), (5, d, d)),
            'V': _xavier(next(ks), (5, 2 * d, 1)),      # torch layout
            'b': jnp.zeros((5,), jnp.float32),
        }
    return p


@jax.jit
def mynet_forward(params, x, embedding):
    """x: (B, in_dim, N, T_in) NCHW; embedding: tuple of 4 arrays (B, 256, N, 1)."""
    B, Cin, N, Tin = x.shape
    assert len(embedding) == 4, "mynet_ head expects merged T = 5 slices"
    bf16 = jnp.bfloat16
    M2 = B * N

    # --- encoder (TODO(synk): gwnet_head not provided; simple projection) ---
    xr = jnp.transpose(x, (0, 2, 3, 1)).reshape(B, N, Tin * Cin)
    hx = jnp.maximum(xr @ params['enc_w'] + params['enc_b'], 0.0)      # (B, N, 256)
    hidden_x = jnp.transpose(hx, (0, 2, 1))[:, :, :, None]             # (B, 256, N, 1)

    # five per-time slices as separate (M2, 256) bf16 inputs (no stack copy).
    slices = [hx.reshape(M2, 256).astype(bf16)]
    for e in embedding:
        slices.append(jnp.transpose(e[:, :, :, 0], (0, 2, 1))
                      .reshape(M2, 256).astype(bf16))

    prep = _prep_head_params(params)
    out = fused_head_call(slices, prep)                                # (M2p, 128)
    out = out[:M2, :12]
    output = jnp.transpose(out.reshape(B, N, 12), (0, 2, 1))[:, :, :, None]
    return output, jax.lax.stop_gradient(hidden_x)


if __name__ == "__main__":
    B, IN_DIM, N_NODE, T_IN = 2, 1, 8, 12      # small synthetic shapes
    key = jax.random.PRNGKey(0)
    k_par, k_x, *k_emb = jax.random.split(key, 2 + 4)

    params = init_params(k_par, IN_DIM, T_IN)
    x = jax.random.normal(k_x, (B, IN_DIM, N_NODE, T_IN), jnp.float32)
    # 4 auxiliary embeddings, each (B, 256, N, 1) -> merged T = 5
    embedding = tuple(jax.random.normal(k, (B, 256, N_NODE, 1), jnp.float32)
                      for k in k_emb)

    output, hidden_x = mynet_forward(params, x, embedding)
    jax.block_until_ready(output)
    jax.block_until_ready(hidden_x)

    assert output.shape == (B, 12, N_NODE, 1), output.shape
    assert hidden_x.shape == (B, 256, N_NODE, 1), hidden_x.shape
    assert bool(jnp.all(jnp.isfinite(output))), "non-finite output"
    print("KERNEL_OK")
</pallas_src>

<mosaic_0001>
module attributes {stable_mosaic.version = 11 : i64} {
  func.func @_fused_head_kernel(%arg0: i32, %arg1: memref<16x256xbf16, #tpu.memory_space<vmem>>, %arg2: memref<16x256xbf16, #tpu.memory_space<vmem>>, %arg3: memref<16x256xbf16, #tpu.memory_space<vmem>>, %arg4: memref<16x256xbf16, #tpu.memory_space<vmem>>, %arg5: memref<16x256xbf16, #tpu.memory_space<vmem>>, %arg6: memref<256x64xbf16, #tpu.memory_space<vmem>>, %arg7: memref<1x64xf32, #tpu.memory_space<vmem>>, %arg8: memref<32x256xbf16, #tpu.memory_space<vmem>>, %arg9: memref<1x256xf32, #tpu.memory_space<vmem>>, %arg10: memref<160x960xbf16, #tpu.memory_space<vmem>>, %arg11: memref<160x960xbf16, #tpu.memory_space<vmem>>, %arg12: memref<160x32xbf16, #tpu.memory_space<vmem>>, %arg13: memref<960x32xbf16, #tpu.memory_space<vmem>>, %arg14: memref<1x32xf32, #tpu.memory_space<vmem>>, %arg15: memref<32x11xbf16, #tpu.memory_space<vmem>>, %arg16: memref<1x11xf32, #tpu.memory_space<vmem>>, %arg17: memref<256x512xbf16, #tpu.memory_space<vmem>>, %arg18: memref<1x512xf32, #tpu.memory_space<vmem>>, %arg19: memref<512x128xbf16, #tpu.memory_space<vmem>>, %arg20: memref<1x128xf32, #tpu.memory_space<vmem>>, %arg21: memref<16x128xf32, #tpu.memory_space<vmem>>) attributes {dimension_semantics = [#tpu.dimension_semantics<parallel>], iteration_bounds = array<i64: 1>, scalar_prefetch = 0 : i64, scratch_operands = 0 : i64, tpu.core_type = #tpu.core_type<tc>, window_params = [{transform_indices = @transform_0, window_bounds = array<i64: 16, 256>}, {transform_indices = @transform_1, window_bounds = array<i64: 16, 256>}, {transform_indices = @transform_2, window_bounds = array<i64: 16, 256>}, {transform_indices = @transform_3, window_bounds = array<i64: 16, 256>}, {transform_indices = @transform_4, window_bounds = array<i64: 16, 256>}, {pipeline_mode = #tpu.pipeline_mode<synchronous>, transform_indices = @transform_5, window_bounds = array<i64: 256, 64>}, {pipeline_mode = #tpu.pipeline_mode<synchronous>, transform_indices = @transform_6, window_bounds = array<i64: 1, 64>}, {pipeline_mode = #tpu.pipeline_mode<synchronous>, transform_indices = @transform_7, window_bounds = array<i64: 32, 256>}, {pipeline_mode = #tpu.pipeline_mode<synchronous>, transform_indices = @transform_8, window_bounds = array<i64: 1, 256>}, {pipeline_mode = #tpu.pipeline_mode<synchronous>, transform_indices = @transform_9, window_bounds = array<i64: 160, 960>}, {pipeline_mode = #tpu.pipeline_mode<synchronous>, transform_indices = @transform_10, window_bounds = array<i64: 160, 960>}, {pipeline_mode = #tpu.pipeline_mode<synchronous>, transform_indices = @transform_11, window_bounds = array<i64: 160, 32>}, {pipeline_mode = #tpu.pipeline_mode<synchronous>, transform_indices = @transform_12, window_bounds = array<i64: 960, 32>}, {pipeline_mode = #tpu.pipeline_mode<synchronous>, transform_indices = @transform_13, window_bounds = array<i64: 1, 32>}, {pipeline_mode = #tpu.pipeline_mode<synchronous>, transform_indices = @transform_14, window_bounds = array<i64: 32, 11>}, {pipeline_mode = #tpu.pipeline_mode<synchronous>, transform_indices = @transform_15, window_bounds = array<i64: 1, 11>}, {pipeline_mode = #tpu.pipeline_mode<synchronous>, transform_indices = @transform_16, window_bounds = array<i64: 256, 512>}, {pipeline_mode = #tpu.pipeline_mode<synchronous>, transform_indices = @transform_17, window_bounds = array<i64: 1, 512>}, {pipeline_mode = #tpu.pipeline_mode<synchronous>, transform_indices = @transform_18, window_bounds = array<i64: 512, 128>}, {pipeline_mode = #tpu.pipeline_mode<synchronous>, transform_indices = @transform_19, window_bounds = array<i64: 1, 128>}, {transform_indices = @transform_20, window_bounds = array<i64: 16, 128>}]} {
    %c0 = arith.constant 0 : index
    %c0_0 = arith.constant 0 : index
    %0 = vector.load %arg1[%c0, %c0_0] : memref<16x256xbf16, #tpu.memory_space<vmem>>, vector<16x256xbf16>
    %c0_1 = arith.constant 0 : index
    %c0_2 = arith.constant 0 : index
    %1 = vector.load %arg2[%c0_1, %c0_2] : memref<16x256xbf16, #tpu.memory_space<vmem>>, vector<16x256xbf16>
    %c0_3 = arith.constant 0 : index
    %c0_4 = arith.constant 0 : index
    %2 = vector.load %arg3[%c0_3, %c0_4] : memref<16x256xbf16, #tpu.memory_space<vmem>>, vector<16x256xbf16>
    %c0_5 = arith.constant 0 : index
    %c0_6 = arith.constant 0 : index
    %3 = vector.load %arg4[%c0_5, %c0_6] : memref<16x256xbf16, #tpu.memory_space<vmem>>, vector<16x256xbf16>
    %c0_7 = arith.constant 0 : index
    %c0_8 = arith.constant 0 : index
    %4 = vector.load %arg5[%c0_7, %c0_8] : memref<16x256xbf16, #tpu.memory_space<vmem>>, vector<16x256xbf16>
    %5 = tpu.concatenate %0, %1, %2, %3, %4 in 0 : vector<16x256xbf16>, vector<16x256xbf16>, vector<16x256xbf16>, vector<16x256xbf16>, vector<16x256xbf16> -> vector<80x256xbf16>
    %c0_9 = arith.constant 0 : index
    %c0_10 = arith.constant 0 : index
    %6 = vector.load %arg6[%c0_9, %c0_10] : memref<256x64xbf16, #tpu.memory_space<vmem>>, vector<256x64xbf16>
    %cst = arith.constant dense<0.000000e+00> : vector<80x64xf32>
    %7 = tpu.matmul %5, %6, %cst {dimension_numbers = #tpu.dot_dimension_numbers<[1], [0], [0], [1], [0, 0, 1, 1], [], []>} : vector<80x256xbf16>, vector<256x64xbf16>, vector<80x64xf32> -> vector<80x64xf32>
    %c0_11 = arith.constant 0 : index
    %c0_12 = arith.constant 0 : index
    %8 = vector.load %arg7[%c0_11, %c0_12] : memref<1x64xf32, #tpu.memory_space<vmem>>, vector<1x64xf32>
    %9 = vector.broadcast %8 : vector<1x64xf32> to vector<80x64xf32>
    %10 = arith.addf %7, %9 : vector<80x64xf32>
    %11 = vector.extract_strided_slice %10 {offsets = [0, 0], sizes = [80, 32], strides = [1, 1]} : vector<80x64xf32> to vector<80x32xf32>
    %cst_13 = arith.constant dense<0xFF800000> : vector<80xf32>
    %12 = vector.multi_reduction <maximumf>, %11, %cst_13 [1] : vector<80x32xf32> to vector<80xf32>
    %13 = vector.shape_cast %12 : vector<80xf32> to vector<80x1xf32>
    %14 = vector.broadcast %13 : vector<80x1xf32> to vector<80x32xf32>
    %15 = arith.subf %11, %14 : vector<80x32xf32>
    %16 = math.exp %15 : vector<80x32xf32>
    %cst_14 = arith.constant dense<0.000000e+00> : vector<80xf32>
    %17 = vector.multi_reduction <add>, %16, %cst_14 [1] : vector<80x32xf32> to vector<80xf32>
    %18 = vector.shape_cast %17 : vector<80xf32> to vector<80x1xf32>
    %19 = tpu.reciprocal %18 {approx = true} : vector<80x1xf32> -> vector<80x1xf32>
    %20 = vector.broadcast %19 : vector<80x1xf32> to vector<80x32xf32>
    %21 = arith.mulf %16, %20 : vector<80x32xf32>
    %22 = vector.extract_strided_slice %10 {offsets = [0, 32], sizes = [80, 32], strides = [1, 1]} : vector<80x64xf32> to vector<80x32xf32>
    %23 = arith.truncf %22 : vector<80x32xf32> to vector<80x32xbf16>
    %24 = vector.extract_strided_slice %23 {offsets = [0, 0], sizes = [16, 32], strides = [1, 1]} : vector<80x32xbf16> to vector<16x32xbf16>
    %25 = vector.extract_strided_slice %23 {offsets = [16, 0], sizes = [16, 32], strides = [1, 1]} : vector<80x32xbf16> to vector<16x32xbf16>
    %26 = vector.extract_strided_slice %23 {offsets = [32, 0], sizes = [16, 32], strides = [1, 1]} : vector<80x32xbf16> to vector<16x32xbf16>
    %27 = vector.extract_strided_slice %23 {offsets = [48, 0], sizes = [16, 32], strides = [1, 1]} : vector<80x32xbf16> to vector<16x32xbf16>
    %28 = vector.extract_strided_slice %23 {offsets = [64, 0], sizes = [16, 32], strides = [1, 1]} : vector<80x32xbf16> to vector<16x32xbf16>
    %29 = tpu.concatenate %24, %25, %26, %27, %28 in 1 : vector<16x32xbf16>, vector<16x32xbf16>, vector<16x32xbf16>, vector<16x32xbf16>, vector<16x32xbf16> -> vector<16x160xbf16>
    %c0_15 = arith.constant 0 : index
    %c0_16 = arith.constant 0 : index
    %30 = vector.load %arg10[%c0_15, %c0_16] : memref<160x960xbf16, #tpu.memory_space<vmem>>, vector<160x960xbf16>
    %cst_17 = arith.constant dense<0.000000e+00> : vector<16x960xf32>
    %31 = tpu.matmul %29, %30, %cst_17 {dimension_numbers = #tpu.dot_dimension_numbers<[1], [0], [0], [1], [0, 0, 1, 1], [], []>} : vector<16x160xbf16>, vector<160x960xbf16>, vector<16x960xf32> -> vector<16x960xf32>
    %32 = arith.truncf %31 : vector<16x960xf32> to vector<16x960xbf16>
    %c0_18 = arith.constant 0 : index
    %c0_19 = arith.constant 0 : index
    %33 = vector.load %arg11[%c0_18, %c0_19] : memref<160x960xbf16, #tpu.memory_space<vmem>>, vector<160x960xbf16>
    %cst_20 = arith.constant dense<0.000000e+00> : vector<16x960xf32>
    %34 = tpu.matmul %29, %33, %cst_20 {dimension_numbers = #tpu.dot_dimension_numbers<[1], [0], [0], [1], [0, 0, 1, 1], [], []>} : vector<16x160xbf16>, vector<160x960xbf16>, vector<16x960xf32> -> vector<16x960xf32>
    %35 = arith.truncf %34 : vector<16x960xf32> to vector<16x960xbf16>
    %c0_21 = arith.constant 0 : index
    %c0_22 = arith.constant 0 : index
    %36 = vector.load %arg12[%c0_21, %c0_22] : memref<160x32xbf16, #tpu.memory_space<vmem>>, vector<160x32xbf16>
    %cst_23 = arith.constant dense<0.000000e+00> : vector<16x32xf32>
    %37 = tpu.matmul %29, %36, %cst_23 {dimension_numbers = #tpu.dot_dimension_numbers<[1], [0], [0], [1], [0, 0, 1, 1], [], []>} : vector<16x160xbf16>, vector<160x32xbf16>, vector<16x32xf32> -> vector<16x32xf32>
    %38 = arith.mulf %32, %35 : vector<16x960xbf16>
    %39 = arith.mulf %32, %32 : vector<16x960xbf16>
    %40 = arith.mulf %35, %35 : vector<16x960xbf16>
    %41 = tpu.concatenate %38, %39, %40 in 0 : vector<16x960xbf16>, vector<16x960xbf16>, vector<16x960xbf16> -> vector<48x960xbf16>
    %c0_24 = arith.constant 0 : index
    %c0_25 = arith.constant 0 : index
    %42 = vector.load %arg13[%c0_24, %c0_25] : memref<960x32xbf16, #tpu.memory_space<vmem>>, vector<960x32xbf16>
    %cst_26 = arith.constant dense<0.000000e+00> : vector<48x32xf32>
    %43 = tpu.matmul %41, %42, %cst_26 {dimension_numbers = #tpu.dot_dimension_numbers<[1], [0], [0], [1], [0, 0, 1, 1], [], []>} : vector<48x960xbf16>, vector<960x32xbf16>, vector<48x32xf32> -> vector<48x32xf32>
    %44 = vector.extract_strided_slice %43 {offsets = [0, 0], sizes = [16, 32], strides = [1, 1]} : vector<48x32xf32> to vector<16x32xf32>
    %45 = vector.extract_strided_slice %43 {offsets = [16, 0], sizes = [16, 32], strides = [1, 1]} : vector<48x32xf32> to vector<16x32xf32>
    %cst_27 = arith.constant 1.000000e-16 : f32
    %46 = vector.broadcast %cst_27 : f32 to vector<16x32xf32>
    %47 = arith.maximumf %45, %46 : vector<16x32xf32>
    %48 = vector.extract_strided_slice %43 {offsets = [32, 0], sizes = [16, 32], strides = [1, 1]} : vector<48x32xf32> to vector<16x32xf32>
    %cst_28 = arith.constant 1.000000e-16 : f32
    %49 = vector.broadcast %cst_28 : f32 to vector<16x32xf32>
    %50 = arith.maximumf %48, %49 : vector<16x32xf32>
    %51 = arith.mulf %47, %50 : vector<16x32xf32>
    %52 = math.rsqrt %51 : vector<16x32xf32>
    %53 = arith.mulf %44, %52 : vector<16x32xf32>
    %54 = arith.addf %53, %37 : vector<16x32xf32>
    %c0_29 = arith.constant 0 : index
    %c0_30 = arith.constant 0 : index
    %55 = vector.load %arg14[%c0_29, %c0_30] : memref<1x32xf32, #tpu.memory_space<vmem>>, vector<1x32xf32>
    %56 = vector.broadcast %55 : vector<1x32xf32> to vector<16x32xf32>
    %57 = arith.addf %54, %56 : vector<16x32xf32>
    %cst_31 = arith.constant 0.000000e+00 : f32
    %58 = vector.broadcast %cst_31 : f32 to vector<16x32xf32>
    %59 = arith.maximumf %57, %58 : vector<16x32xf32>
    %60 = arith.truncf %59 : vector<16x32xf32> to vector<16x32xbf16>
    %c0_32 = arith.constant 0 : index
    %c0_33 = arith.constant 0 : index
    %61 = vector.load %arg15[%c0_32, %c0_33] : memref<32x11xbf16, #tpu.memory_space<vmem>>, vector<32x11xbf16>
    %cst_34 = arith.constant dense<0.000000e+00> : vector<16x11xf32>
    %62 = tpu.matmul %60, %61, %cst_34 {dimension_numbers = #tpu.dot_dimension_numbers<[1], [0], [0], [1], [0, 0, 1, 1], [], []>} : vector<16x32xbf16>, vector<32x11xbf16>, vector<16x11xf32> -> vector<16x11xf32>
    %c0_35 = arith.constant 0 : index
    %c0_36 = arith.constant 0 : index
    %63 = vector.load %arg16[%c0_35, %c0_36] : memref<1x11xf32, #tpu.memory_space<vmem>>, vector<1x11xf32>
    %64 = vector.broadcast %63 : vector<1x11xf32> to vector<16x11xf32>
    %65 = arith.addf %62, %64 : vector<16x11xf32>
    %66 = vector.extract_strided_slice %65 {offsets = [0, 0], sizes = [16, 10], strides = [1, 1]} : vector<16x11xf32> to vector<16x10xf32>
    %cst_37 = arith.constant dense<0xFF800000> : vector<16xf32>
    %67 = vector.multi_reduction <maximumf>, %66, %cst_37 [1] : vector<16x10xf32> to vector<16xf32>
    %68 = vector.shape_cast %67 : vector<16xf32> to vector<16x1xf32>
    %69 = vector.broadcast %68 : vector<16x1xf32> to vector<16x10xf32>
    %70 = arith.subf %66, %69 : vector<16x10xf32>
    %71 = math.exp %70 : vector<16x10xf32>
    %cst_38 = arith.constant dense<0.000000e+00> : vector<16xf32>
    %72 = vector.multi_reduction <add>, %71, %cst_38 [1] : vector<16x10xf32> to vector<16xf32>
    %73 = vector.shape_cast %72 : vector<16xf32> to vector<16x1xf32>
    %74 = tpu.reciprocal %73 {approx = true} : vector<16x1xf32> -> vector<16x1xf32>
    %75 = vector.broadcast %74 : vector<16x1xf32> to vector<16x10xf32>
    %76 = arith.mulf %71, %75 : vector<16x10xf32>
    %77 = vector.extract_strided_slice %65 {offsets = [0, 10], sizes = [16, 1], strides = [1, 1]} : vector<16x11xf32> to vector<16x1xf32>
    %c0_39 = arith.constant 0 : index
    %c0_40 = arith.constant 0 : index
    %78 = vector.load %arg1[%c0_39, %c0_40] : memref<16x256xbf16, #tpu.memory_space<vmem>>, vector<16x256xbf16>
    %79 = vector.extract_strided_slice %76 {offsets = [0, 0], sizes = [16, 1], strides = [1, 1]} : vector<16x10xf32> to vector<16x1xf32>
    %80 = arith.extf %78 : vector<16x256xbf16> to vector<16x256xf32>
    %81 = vector.broadcast %79 : vector<16x1xf32> to vector<16x256xf32>
    %82 = arith.mulf %80, %81 : vector<16x256xf32>
    %83 = vector.extract_strided_slice %21 {offsets = [0, 0], sizes = [16, 32], strides = [1, 1]} : vector<80x32xf32> to vector<16x32xf32>
    %84 = vector.extract_strided_slice %76 {offsets = [0, 5], sizes = [16, 1], strides = [1, 1]} : vector<16x10xf32> to vector<16x1xf32>
    %85 = vector.broadcast %84 : vector<16x1xf32> to vector<16x32xf32>
    %86 = arith.mulf %83, %85 : vector<16x32xf32>
    %c0_41 = arith.constant 0 : index
    %c0_42 = arith.constant 0 : index
    %87 = vector.load %arg2[%c0_41, %c0_42] : memref<16x256xbf16, #tpu.memory_space<vmem>>, vector<16x256xbf16>
    %88 = vector.extract_strided_slice %76 {offsets = [0, 1], sizes = [16, 1], strides = [1, 1]} : vector<16x10xf32> to vector<16x1xf32>
    %89 = arith.extf %87 : vector<16x256xbf16> to vector<16x256xf32>
    %90 = vector.broadcast %88 : vector<16x1xf32> to vector<16x256xf32>
    %91 = arith.mulf %89, %90 : vector<16x256xf32>
    %92 = arith.addf %82, %91 : vector<16x256xf32>
    %93 = vector.extract_strided_slice %21 {offsets = [16, 0], sizes = [16, 32], strides = [1, 1]} : vector<80x32xf32> to vector<16x32xf32>
    %94 = vector.extract_strided_slice %76 {offsets = [0, 6], sizes = [16, 1], strides = [1, 1]} : vector<16x10xf32> to vector<16x1xf32>
    %95 = vector.broadcast %94 : vector<16x1xf32> to vector<16x32xf32>
    %96 = arith.mulf %93, %95 : vector<16x32xf32>
    %97 = arith.addf %86, %96 : vector<16x32xf32>
    %c0_43 = arith.constant 0 : index
    %c0_44 = arith.constant 0 : index
    %98 = vector.load %arg3[%c0_43, %c0_44] : memref<16x256xbf16, #tpu.memory_space<vmem>>, vector<16x256xbf16>
    %99 = vector.extract_strided_slice %76 {offsets = [0, 2], sizes = [16, 1], strides = [1, 1]} : vector<16x10xf32> to vector<16x1xf32>
    %100 = arith.extf %98 : vector<16x256xbf16> to vector<16x256xf32>
    %101 = vector.broadcast %99 : vector<16x1xf32> to vector<16x256xf32>
    %102 = arith.mulf %100, %101 : vector<16x256xf32>
    %103 = arith.addf %92, %102 : vector<16x256xf32>
    %104 = vector.extract_strided_slice %21 {offsets = [32, 0], sizes = [16, 32], strides = [1, 1]} : vector<80x32xf32> to vector<16x32xf32>
    %105 = vector.extract_strided_slice %76 {offsets = [0, 7], sizes = [16, 1], strides = [1, 1]} : vector<16x10xf32> to vector<16x1xf32>
    %106 = vector.broadcast %105 : vector<16x1xf32> to vector<16x32xf32>
    %107 = arith.mulf %104, %106 : vector<16x32xf32>
    %108 = arith.addf %97, %107 : vector<16x32xf32>
    %c0_45 = arith.constant 0 : index
    %c0_46 = arith.constant 0 : index
    %109 = vector.load %arg4[%c0_45, %c0_46] : memref<16x256xbf16, #tpu.memory_space<vmem>>, vector<16x256xbf16>
    %110 = vector.extract_strided_slice %76 {offsets = [0, 3], sizes = [16, 1], strides = [1, 1]} : vector<16x10xf32> to vector<16x1xf32>
    %111 = arith.extf %109 : vector<16x256xbf16> to vector<16x256xf32>
    %112 = vector.broadcast %110 : vector<16x1xf32> to vector<16x256xf32>
    %113 = arith.mulf %111, %112 : vector<16x256xf32>
    %114 = arith.addf %103, %113 : vector<16x256xf32>
    %115 = vector.extract_strided_slice %21 {offsets = [48, 0], sizes = [16, 32], strides = [1, 1]} : vector<80x32xf32> to vector<16x32xf32>
    %116 = vector.extract_strided_slice %76 {offsets = [0, 8], sizes = [16, 1], strides = [1, 1]} : vector<16x10xf32> to vector<16x1xf32>
    %117 = vector.broadcast %116 : vector<16x1xf32> to vector<16x32xf32>
    %118 = arith.mulf %115, %117 : vector<16x32xf32>
    %119 = arith.addf %108, %118 : vector<16x32xf32>
    %c0_47 = arith.constant 0 : index
    %c0_48 = arith.constant 0 : index
    %120 = vector.load %arg5[%c0_47, %c0_48] : memref<16x256xbf16, #tpu.memory_space<vmem>>, vector<16x256xbf16>
    %121 = vector.extract_strided_slice %76 {offsets = [0, 4], sizes = [16, 1], strides = [1, 1]} : vector<16x10xf32> to vector<16x1xf32>
    %122 = arith.extf %120 : vector<16x256xbf16> to vector<16x256xf32>
    %123 = vector.broadcast %121 : vector<16x1xf32> to vector<16x256xf32>
    %124 = arith.mulf %122, %123 : vector<16x256xf32>
    %125 = arith.addf %114, %124 : vector<16x256xf32>
    %126 = vector.extract_strided_slice %21 {offsets = [64, 0], sizes = [16, 32], strides = [1, 1]} : vector<80x32xf32> to vector<16x32xf32>
    %127 = vector.extract_strided_slice %76 {offsets = [0, 9], sizes = [16, 1], strides = [1, 1]} : vector<16x10xf32> to vector<16x1xf32>
    %128 = vector.broadcast %127 : vector<16x1xf32> to vector<16x32xf32>
    %129 = arith.mulf %126, %128 : vector<16x32xf32>
    %130 = arith.addf %119, %129 : vector<16x32xf32>
    %131 = vector.extract_strided_slice %76 {offsets = [0, 5], sizes = [16, 5], strides = [1, 1]} : vector<16x10xf32> to vector<16x5xf32>
    %cst_49 = arith.constant dense<0.000000e+00> : vector<16xf32>
    %132 = vector.multi_reduction <add>, %131, %cst_49 [1] : vector<16x5xf32> to vector<16xf32>
    %133 = vector.shape_cast %132 : vector<16xf32> to vector<16x1xf32>
    %134 = arith.truncf %130 : vector<16x32xf32> to vector<16x32xbf16>
    %c0_50 = arith.constant 0 : index
    %c0_51 = arith.constant 0 : index
    %135 = vector.load %arg8[%c0_50, %c0_51] : memref<32x256xbf16, #tpu.memory_space<vmem>>, vector<32x256xbf16>
    %cst_52 = arith.constant dense<0.000000e+00> : vector<16x256xf32>
    %136 = tpu.matmul %134, %135, %cst_52 {dimension_numbers = #tpu.dot_dimension_numbers<[1], [0], [0], [1], [0, 0, 1, 1], [], []>} : vector<16x32xbf16>, vector<32x256xbf16>, vector<16x256xf32> -> vector<16x256xf32>
    %137 = arith.addf %125, %136 : vector<16x256xf32>
    %c0_53 = arith.constant 0 : index
    %c0_54 = arith.constant 0 : index
    %138 = vector.load %arg9[%c0_53, %c0_54] : memref<1x256xf32, #tpu.memory_space<vmem>>, vector<1x256xf32>
    %139 = vector.broadcast %138 : vector<1x256xf32> to vector<16x256xf32>
    %140 = vector.broadcast %133 : vector<16x1xf32> to vector<16x256xf32>
    %141 = arith.mulf %139, %140 : vector<16x256xf32>
    %142 = arith.addf %137, %141 : vector<16x256xf32>
    %143 = vector.broadcast %77 : vector<16x1xf32> to vector<16x256xf32>
    %144 = arith.addf %142, %143 : vector<16x256xf32>
    %145 = arith.truncf %144 : vector<16x256xf32> to vector<16x256xbf16>
    %c0_55 = arith.constant 0 : index
    %c0_56 = arith.constant 0 : index
    %146 = vector.load %arg17[%c0_55, %c0_56] : memref<256x512xbf16, #tpu.memory_space<vmem>>, vector<256x512xbf16>
    %cst_57 = arith.constant dense<0.000000e+00> : vector<16x512xf32>
    %147 = tpu.matmul %145, %146, %cst_57 {dimension_numbers = #tpu.dot_dimension_numbers<[1], [0], [0], [1], [0, 0, 1, 1], [], []>} : vector<16x256xbf16>, vector<256x512xbf16>, vector<16x512xf32> -> vector<16x512xf32>
    %c0_58 = arith.constant 0 : index
    %c0_59 = arith.constant 0 : index
    %148 = vector.load %arg18[%c0_58, %c0_59] : memref<1x512xf32, #tpu.memory_space<vmem>>, vector<1x512xf32>
    %149 = vector.broadcast %148 : vector<1x512xf32> to vector<16x512xf32>
    %150 = arith.addf %147, %149 : vector<16x512xf32>
    %cst_60 = arith.constant 0.000000e+00 : f32
    %151 = vector.broadcast %cst_60 : f32 to vector<16x512xf32>
    %152 = arith.maximumf %150, %151 : vector<16x512xf32>
    %153 = arith.truncf %152 : vector<16x512xf32> to vector<16x512xbf16>
    %c0_61 = arith.constant 0 : index
    %c0_62 = arith.constant 0 : index
    %154 = vector.load %arg19[%c0_61, %c0_62] : memref<512x128xbf16, #tpu.memory_space<vmem>>, vector<512x128xbf16>
    %cst_63 = arith.constant dense<0.000000e+00> : vector<16x128xf32>
    %155 = tpu.matmul %153, %154, %cst_63 {dimension_numbers = #tpu.dot_dimension_numbers<[1], [0], [0], [1], [0, 0, 1, 1], [], []>} : vector<16x512xbf16>, vector<512x128xbf16>, vector<16x128xf32> -> vector<16x128xf32>
    %c0_64 = arith.constant 0 : index
    %c0_65 = arith.constant 0 : index
    %156 = vector.load %arg20[%c0_64, %c0_65] : memref<1x128xf32, #tpu.memory_space<vmem>>, vector<1x128xf32>
    %157 = vector.broadcast %156 : vector<1x128xf32> to vector<16x128xf32>
    %158 = arith.addf %155, %157 : vector<16x128xf32>
    %c0_66 = arith.constant 0 : index
    %c0_67 = arith.constant 0 : index
    %159 = vector.load %arg21[%c0_66, %c0_67] : memref<16x128xf32, #tpu.memory_space<vmem>>, vector<16x128xf32>
    tpu.vector_store %arg21[%c0_66, %c0_67], %158 {strides = array<i32>} : memref<16x128xf32, #tpu.memory_space<vmem>>, vector<16x128xf32>,
    return
  }
  func.func @transform_0(%arg0: i32) -> (i32, i32) {
    %c0_i32 = arith.constant 0 : i32
    %c0_i32_0 = arith.constant 0 : i32
    return %arg0, %c0_i32 : i32, i32
  }
  func.func @transform_1(%arg0: i32) -> (i32, i32) {
    %c0_i32 = arith.constant 0 : i32
    %c0_i32_0 = arith.constant 0 : i32
    return %arg0, %c0_i32 : i32, i32
  }
  func.func @transform_2(%arg0: i32) -> (i32, i32) {
    %c0_i32 = arith.constant 0 : i32
    %c0_i32_0 = arith.constant 0 : i32
    return %arg0, %c0_i32 : i32, i32
  }
  func.func @transform_3(%arg0: i32) -> (i32, i32) {
    %c0_i32 = arith.constant 0 : i32
    %c0_i32_0 = arith.constant 0 : i32
    return %arg0, %c0_i32 : i32, i32
  }
  func.func @transform_4(%arg0: i32) -> (i32, i32) {
    %c0_i32 = arith.constant 0 : i32
    %c0_i32_0 = arith.constant 0 : i32
    return %arg0, %c0_i32 : i32, i32
  }
  func.func @transform_5(%arg0: i32) -> (i32, i32) {
    %c0_i32 = arith.constant 0 : i32
    %c0_i32_0 = arith.constant 0 : i32
    %c0_i32_1 = arith.constant 0 : i32
    return %c0_i32, %c0_i32_0 : i32, i32
  }
  func.func @transform_6(%arg0: i32) -> (i32, i32) {
    %c0_i32 = arith.constant 0 : i32
    %c0_i32_0 = arith.constant 0 : i32
    %c0_i32_1 = arith.constant 0 : i32
    return %c0_i32, %c0_i32_0 : i32, i32
  }
  func.func @transform_7(%arg0: i32) -> (i32, i32) {
    %c0_i32 = arith.constant 0 : i32
    %c0_i32_0 = arith.constant 0 : i32
    %c0_i32_1 = arith.constant 0 : i32
    return %c0_i32, %c0_i32_0 : i32, i32
  }
  func.func @transform_8(%arg0: i32) -> (i32, i32) {
    %c0_i32 = arith.constant 0 : i32
    %c0_i32_0 = arith.constant 0 : i32
    %c0_i32_1 = arith.constant 0 : i32
    return %c0_i32, %c0_i32_0 : i32, i32
  }
  func.func @transform_9(%arg0: i32) -> (i32, i32) {
    %c0_i32 = arith.constant 0 : i32
    %c0_i32_0 = arith.constant 0 : i32
    %c0_i32_1 = arith.constant 0 : i32
    return %c0_i32, %c0_i32_0 : i32, i32
  }
  func.func @transform_10(%arg0: i32) -> (i32, i32) {
    %c0_i32 = arith.constant 0 : i32
    %c0_i32_0 = arith.constant 0 : i32
    %c0_i32_1 = arith.constant 0 : i32
    return %c0_i32, %c0_i32_0 : i32, i32
  }
  func.func @transform_11(%arg0: i32) -> (i32, i32) {
    %c0_i32 = arith.constant 0 : i32
    %c0_i32_0 = arith.constant 0 : i32
    %c0_i32_1 = arith.constant 0 : i32
    return %c0_i32, %c0_i32_0 : i32, i32
  }
  func.func @transform_12(%arg0: i32) -> (i32, i32) {
    %c0_i32 = arith.constant 0 : i32
    %c0_i32_0 = arith.constant 0 : i32
    %c0_i32_1 = arith.constant 0 : i32
    return %c0_i32, %c0_i32_0 : i32, i32
  }
  func.func @transform_13(%arg0: i32) -> (i32, i32) {
    %c0_i32 = arith.constant 0 : i32
    %c0_i32_0 = arith.constant 0 : i32
    %c0_i32_1 = arith.constant 0 : i32
    return %c0_i32, %c0_i32_0 : i32, i32
  }
  func.func @transform_14(%arg0: i32) -> (i32, i32) {
    %c0_i32 = arith.constant 0 : i32
    %c0_i32_0 = arith.constant 0 : i32
    %c0_i32_1 = arith.constant 0 : i32
    return %c0_i32, %c0_i32_0 : i32, i32
  }
  func.func @transform_15(%arg0: i32) -> (i32, i32) {
    %c0_i32 = arith.constant 0 : i32
    %c0_i32_0 = arith.constant 0 : i32
    %c0_i32_1 = arith.constant 0 : i32
    return %c0_i32, %c0_i32_0 : i32, i32
  }
  func.func @transform_16(%arg0: i32) -> (i32, i32) {
    %c0_i32 = arith.constant 0 : i32
    %c0_i32_0 = arith.constant 0 : i32
    %c0_i32_1 = arith.constant 0 : i32
    return %c0_i32, %c0_i32_0 : i32, i32
  }
  func.func @transform_17(%arg0: i32) -> (i32, i32) {
    %c0_i32 = arith.constant 0 : i32
    %c0_i32_0 = arith.constant 0 : i32
    %c0_i32_1 = arith.constant 0 : i32
    return %c0_i32, %c0_i32_0 : i32, i32
  }
  func.func @transform_18(%arg0: i32) -> (i32, i32) {
    %c0_i32 = arith.constant 0 : i32
    %c0_i32_0 = arith.constant 0 : i32
    %c0_i32_1 = arith.constant 0 : i32
    return %c0_i32, %c0_i32_0 : i32, i32
  }
  func.func @transform_19(%arg0: i32) -> (i32, i32) {
    %c0_i32 = arith.constant 0 : i32
    %c0_i32_0 = arith.constant 0 : i32
    %c0_i32_1 = arith.constant 0 : i32
    return %c0_i32, %c0_i32_0 : i32, i32
  }
  func.func @transform_20(%arg0: i32) -> (i32, i32) {
    %c0_i32 = arith.constant 0 : i32
    %c0_i32_0 = arith.constant 0 : i32
    return %arg0, %c0_i32 : i32, i32
  }
}

</mosaic_0001>

<llo_original>
// kernel: mynet_forward.1
$region0: #{mynet_forward.1}
  #allocation0 [shape = 'u32[]', space=smem, size = 0x4, offset = 0x4, fixed_abs, tag = 'smem constant byte address 0x4 - core index']
  #allocation1 [shape = 'u32[144,128]{1,0:T(1,128)}', space=vmem, size = 0x12000, scoped, tag = 'internal scratch']
  %s0 = inlined_call_operand.vmem [shape: bf16[16,256], index: 0, kind: input, shape index: {}]
  %s1 = inlined_call_operand.vmem [shape: bf16[16,256], index: 1, kind: input, shape index: {}]
  %s2 = inlined_call_operand.vmem [shape: bf16[16,256], index: 2, kind: input, shape index: {}]
  %s3 = inlined_call_operand.vmem [shape: bf16[16,256], index: 3, kind: input, shape index: {}]
  %s4 = inlined_call_operand.vmem [shape: bf16[16,256], index: 4, kind: input, shape index: {}]
  %s5 = inlined_call_operand.vmem [shape: bf16[256,64], index: 5, kind: input, shape index: {}]
  %s6 = inlined_call_operand.vmem [shape: f32[1,64], index: 6, kind: input, shape index: {}]
  %s7 = inlined_call_operand.vmem [shape: bf16[32,256], index: 7, kind: input, shape index: {}]
  %s8 = inlined_call_operand.vmem [shape: f32[1,256], index: 8, kind: input, shape index: {}]
  %s9 = inlined_call_operand.vmem [shape: bf16[160,960], index: 9, kind: input, shape index: {}]
  %s10 = inlined_call_operand.vmem [shape: bf16[160,960], index: 10, kind: input, shape index: {}]
  %s11 = inlined_call_operand.vmem [shape: bf16[160,32], index: 11, kind: input, shape index: {}]
  %s12 = inlined_call_operand.vmem [shape: bf16[960,32], index: 12, kind: input, shape index: {}]
  %s13 = inlined_call_operand.vmem [shape: f32[1,32], index: 13, kind: input, shape index: {}]
  %s14 = inlined_call_operand.vmem [shape: bf16[32,11], index: 14, kind: input, shape index: {}]
  %s15 = inlined_call_operand.vmem [shape: f32[1,11], index: 15, kind: input, shape index: {}]
  %s16 = inlined_call_operand.vmem [shape: bf16[256,512], index: 16, kind: input, shape index: {}]
  %s17 = inlined_call_operand.vmem [shape: f32[1,512], index: 17, kind: input, shape index: {}]
  %s18 = inlined_call_operand.vmem [shape: bf16[512,128], index: 18, kind: input, shape index: {}]
  %s19 = inlined_call_operand.vmem [shape: f32[1,128], index: 19, kind: input, shape index: {}]
  %s20 = inlined_call_operand.hbm [shape: f32[16,128], index: 20, kind: output, shape index: {}]
  %s21 = sld [smem:[#allocation0]]
  $region90: #{mynet_forward.1} parent=0
    _
  %s23 = ssub.s32 1, %s21
  %s24 = scalar_select 0, %s23, %s21
  $region1: #{mynet_forward.1} parent=0
    #allocation2 [shape = 'u8[8192]{0}', space=vmem, size = 0x2000, scoped, tag = 'output window, operand 0, single buffered']
    #allocation3 [shape = 's32[1]{0}', space=sflag, size = 0x4, scoped, tag = 'scoped memory for mynet_forward.1']
    %25 = vsyncpa [#allocation3], 0
    // Predicated region
    $region2: #{mynet_forward.1} parent=1 // pred_check
      _
    $region3: #{mynet_forward.1} parent=1 // pred_check_branch
      %27 = sbr.rel (0) target = $region5
    $region4: #{mynet_forward.1} parent=1 // pred_region
      _
    $region5: #{mynet_forward.1} parent=1 // pred_fallthru
      _
    // Predicated region
    $region6: #{mynet_forward.1} parent=1 // pred_check
      _
    $region7: #{mynet_forward.1} parent=1 // pred_check_branch
      %29 = sbr.rel (0) target = $region9
    $region8: #{mynet_forward.1} parent=1 // pred_region
      _
    $region9: #{mynet_forward.1} parent=1 // pred_fallthru
      _
    // Predicated region
    $region10: #{mynet_forward.1} parent=1 // pred_check
      _
    $region11: #{mynet_forward.1} parent=1 // pred_check_branch
      %31 = sbr.rel (0) target = $region13
    $region12: #{mynet_forward.1} parent=1 // pred_region
      _
    $region13: #{mynet_forward.1} parent=1 // pred_fallthru
      _
    // Predicated region
    $region14: #{mynet_forward.1} parent=1 // pred_check
      _
    $region15: #{mynet_forward.1} parent=1 // pred_check_branch
      %33 = sbr.rel (0) target = $region17
    $region16: #{mynet_forward.1} parent=1 // pred_region
      _
    $region17: #{mynet_forward.1} parent=1 // pred_fallthru
      _
    // Predicated region
    $region18: #{mynet_forward.1} parent=1 // pred_check
      _
    $region19: #{mynet_forward.1} parent=1 // pred_check_branch
      %35 = sbr.rel (0) target = $region21
    $region20: #{mynet_forward.1} parent=1 // pred_region
      _
    $region21: #{mynet_forward.1} parent=1 // pred_fallthru
      _
    // Predicated region
    $region22: #{mynet_forward.1} parent=1 // pred_check
      _
    $region23: #{mynet_forward.1} parent=1 // pred_check_branch
      %37 = sbr.rel (0) target = $region25
    $region24: #{mynet_forward.1} parent=1 // pred_region
      _
    $region25: #{mynet_forward.1} parent=1 // pred_fallthru
      _
    // Predicated region
    $region26: #{mynet_forward.1} parent=1 // pred_check
      _
    $region27: #{mynet_forward.1} parent=1 // pred_check_branch
      %39 = sbr.rel (0) target = $region29
    $region28: #{mynet_forward.1} parent=1 // pred_region
      _
    $region29: #{mynet_forward.1} parent=1 // pred_fallthru
      _
    // Predicated region
    $region30: #{mynet_forward.1} parent=1 // pred_check
      _
    $region31: #{mynet_forward.1} parent=1 // pred_check_branch
      %41 = sbr.rel (0) target = $region33
    $region32: #{mynet_forward.1} parent=1 // pred_region
      _
    $region33: #{mynet_forward.1} parent=1 // pred_fallthru
      _
    // Predicated region
    $region34: #{mynet_forward.1} parent=1 // pred_check
      _
    $region35: #{mynet_forward.1} parent=1 // pred_check_branch
      %43 = sbr.rel (0) target = $region37
    $region36: #{mynet_forward.1} parent=1 // pred_region
      _
    $region37: #{mynet_forward.1} parent=1 // pred_fallthru
      _
    // Predicated region
    $region38: #{mynet_forward.1} parent=1 // pred_check
      _
    $region39: #{mynet_forward.1} parent=1 // pred_check_branch
      %45 = sbr.rel (0) target = $region41
    $region40: #{mynet_forward.1} parent=1 // pred_region
      _
    $region41: #{mynet_forward.1} parent=1 // pred_fallthru
      _
    // Predicated region
    $region42: #{mynet_forward.1} parent=1 // pred_check
      _
    $region43: #{mynet_forward.1} parent=1 // pred_check_branch
      %47 = sbr.rel (0) target = $region45
    $region44: #{mynet_forward.1} parent=1 // pred_region
      _
    $region45: #{mynet_forward.1} parent=1 // pred_fallthru
      _
    // Predicated region
    $region46: #{mynet_forward.1} parent=1 // pred_check
      _
    $region47: #{mynet_forward.1} parent=1 // pred_check_branch
      %49 = sbr.rel (0) target = $region49
    $region48: #{mynet_forward.1} parent=1 // pred_region
      _
    $region49: #{mynet_forward.1} parent=1 // pred_fallthru
      _
    // Predicated region
    $region50: #{mynet_forward.1} parent=1 // pred_check
      _
    $region51: #{mynet_forward.1} parent=1 // pred_check_branch
      %51 = sbr.rel (0) target = $region53
    $region52: #{mynet_forward.1} parent=1 // pred_region
      _
    $region53: #{mynet_forward.1} parent=1 // pred_fallthru
      _
    // Predicated region
    $region54: #{mynet_forward.1} parent=1 // pred_check
      _
    $region55: #{mynet_forward.1} parent=1 // pred_check_branch
      %53 = sbr.rel (0) target = $region57
    $region56: #{mynet_forward.1} parent=1 // pred_region
      _
    $region57: #{mynet_forward.1} parent=1 // pred_fallthru
      _
    // Predicated region
    $region58: #{mynet_forward.1} parent=1 // pred_check
      _
    $region59: #{mynet_forward.1} parent=1 // pred_check_branch
      %55 = sbr.rel (0) target = $region61
    $region60: #{mynet_forward.1} parent=1 // pred_region
      _
    $region61: #{mynet_forward.1} parent=1 // pred_fallthru
      _
    // Predicated region
    $region62: #{mynet_forward.1} parent=1 // pred_check
      _
    $region63: #{mynet_forward.1} parent=1 // pred_check_branch
      %57 = sbr.rel (0) target = $region65
    $region64: #{mynet_forward.1} parent=1 // pred_region
      _
    $region65: #{mynet_forward.1} parent=1 // pred_fallthru
      _
    // Predicated region
    $region66: #{mynet_forward.1} parent=1 // pred_check
      _
    $region67: #{mynet_forward.1} parent=1 // pred_check_branch
      %59 = sbr.rel (0) target = $region69
    $region68: #{mynet_forward.1} parent=1 // pred_region
      _
    $region69: #{mynet_forward.1} parent=1 // pred_fallthru
      _
    // Predicated region
    $region70: #{mynet_forward.1} parent=1 // pred_check
      _
    $region71: #{mynet_forward.1} parent=1 // pred_check_branch
      %61 = sbr.rel (0) target = $region73
    $region72: #{mynet_forward.1} parent=1 // pred_region
      _
    $region73: #{mynet_forward.1} parent=1 // pred_fallthru
      _
    // Predicated region
    $region74: #{mynet_forward.1} parent=1 // pred_check
      _
    $region75: #{mynet_forward.1} parent=1 // pred_check_branch
      %63 = sbr.rel (0) target = $region77
    $region76: #{mynet_forward.1} parent=1 // pred_region
      _
    $region77: #{mynet_forward.1} parent=1 // pred_fallthru
      _
    // Predicated region
    $region78: #{mynet_forward.1} parent=1 // pred_check
      _
    $region79: #{mynet_forward.1} parent=1 // pred_check_branch
      %65 = sbr.rel (0) target = $region81
    $region80: #{mynet_forward.1} parent=1 // pred_region
      _
    $region81: #{mynet_forward.1} parent=1 // pred_fallthru
      _
    %v67 = vld [vmem:[%s0] sm:$0xff]
    %v68 = vld [vmem:[%s0 + $0x8] sm:$0xff]
    %v69 = vld [vmem:[%s1] sm:$0xff]
    %v70 = vld [vmem:[%s1 + $0x8] sm:$0xff]
    %v71 = vld [vmem:[%s2] sm:$0xff]
    %v72 = vld [vmem:[%s2 + $0x8] sm:$0xff]
    %v73 = vld [vmem:[%s3] sm:$0xff]
    %v74 = vld [vmem:[%s3 + $0x8] sm:$0xff]
    %v75 = vld [vmem:[%s4] sm:$0xff]
    %v76 = vld [vmem:[%s4 + $0x8] sm:$0xff]
    %v79 = vunpack.c.l.b16 %v67
    %v80 = vunpack.c.h.b16 %v67
    %v81 = vunpack.c.l.b16 %v68
    %v82 = vunpack.c.h.b16 %v68
    %v83 = vpack.c.b16 %v81, %v79
    %v84 = vpack.c.b16 %v82, %v80
    %v89 = vunpack.c.l.b16 %v69
    %v90 = vunpack.c.h.b16 %v69
    %v91 = vunpack.c.l.b16 %v70
    %v92 = vunpack.c.h.b16 %v70
    %v93 = vpack.c.b16 %v91, %v89
    %v94 = vpack.c.b16 %v92, %v90
    %v99 = vunpack.c.l.b16 %v71
    %v100 = vunpack.c.h.b16 %v71
    %v101 = vunpack.c.l.b16 %v72
    %v102 = vunpack.c.h.b16 %v72
    %v103 = vpack.c.b16 %v101, %v99
    %v104 = vpack.c.b16 %v102, %v100
    %v109 = vunpack.c.l.b16 %v73
    %v110 = vunpack.c.h.b16 %v73
    %v111 = vunpack.c.l.b16 %v74
    %v112 = vunpack.c.h.b16 %v74
    %v113 = vpack.c.b16 %v111, %v109
    %v114 = vpack.c.b16 %v112, %v110
    %v119 = vunpack.c.l.b16 %v75
    %v120 = vunpack.c.h.b16 %v75
    %v121 = vunpack.c.l.b16 %v76
    %v122 = vunpack.c.h.b16 %v76
    %v123 = vpack.c.b16 %v121, %v119
    %v124 = vpack.c.b16 %v122, %v120
    %v127 = vld [vmem:[%s5] sm:$0xf]
    %v128 = vld [vmem:[%s5 + $0x4] sm:$0xf]
    %v129 = vld [vmem:[%s5 + $0x8] sm:$0xf]
    %v130 = vld [vmem:[%s5 + $0xc] sm:$0xf]
    %v131 = vld [vmem:[%s5 + $0x10] sm:$0xf]
    %v132 = vld [vmem:[%s5 + $0x14] sm:$0xf]
    %v133 = vld [vmem:[%s5 + $0x18] sm:$0xf]
    %v134 = vld [vmem:[%s5 + $0x1c] sm:$0xf]
    %v135 = vld [vmem:[%s5 + $0x20] sm:$0xf]
    %v136 = vld [vmem:[%s5 + $0x24] sm:$0xf]
    %v137 = vld [vmem:[%s5 + $0x28] sm:$0xf]
    %v138 = vld [vmem:[%s5 + $0x2c] sm:$0xf]
    %v139 = vld [vmem:[%s5 + $0x30] sm:$0xf]
    %v140 = vld [vmem:[%s5 + $0x34] sm:$0xf]
    %v141 = vld [vmem:[%s5 + $0x38] sm:$0xf]
    %v142 = vld [vmem:[%s5 + $0x3c] sm:$0xf]
    %v143 = vld [vmem:[%s5 + $0x40] sm:$0xf]
    %v144 = vld [vmem:[%s5 + $0x44] sm:$0xf]
    %v145 = vld [vmem:[%s5 + $0x48] sm:$0xf]
    %v146 = vld [vmem:[%s5 + $0x4c] sm:$0xf]
    %v147 = vld [vmem:[%s5 + $0x50] sm:$0xf]
    %v148 = vld [vmem:[%s5 + $0x54] sm:$0xf]
    %v149 = vld [vmem:[%s5 + $0x58] sm:$0xf]
    %v150 = vld [vmem:[%s5 + $0x5c] sm:$0xf]
    %v151 = vld [vmem:[%s5 + $0x60] sm:$0xf]
    %v152 = vld [vmem:[%s5 + $0x64] sm:$0xf]
    %v153 = vld [vmem:[%s5 + $0x68] sm:$0xf]
    %v154 = vld [vmem:[%s5 + $0x6c] sm:$0xf]
    %v155 = vld [vmem:[%s5 + $0x70] sm:$0xf]
    %v156 = vld [vmem:[%s5 + $0x74] sm:$0xf]
    %v157 = vld [vmem:[%s5 + $0x78] sm:$0xf]
    %v158 = vld [vmem:[%s5 + $0x7c] sm:$0xf]
    %v159 = vld [vmem:[%s6] sm:$0x1]
    %v161 = vlaneseq
    %v162 = vshrl.u32 %v161, 7
    %v163 = vsub.s32 0, %v162
    %v164 = vrot.slane %v159, %v163
    %v198 = vunpack.c.l.b16 %v127
    %v199 = vunpack.c.l.b16 %v128
    %v200 = vunpack.c.l.b16 %v129
    %v201 = vunpack.c.l.b16 %v130
    %v202 = vunpack.c.l.b16 %v131
    %v203 = vunpack.c.l.b16 %v132
    %v204 = vunpack.c.l.b16 %v133
    %v205 = vunpack.c.l.b16 %v134
    %v206 = vunpack.c.l.b16 %v135
    %v207 = vunpack.c.l.b16 %v136
    %v208 = vunpack.c.l.b16 %v137
    %v209 = vunpack.c.l.b16 %v138
    %v210 = vunpack.c.l.b16 %v139
    %v211 = vunpack.c.l.b16 %v140
    %v212 = vunpack.c.l.b16 %v141
    %v213 = vunpack.c.l.b16 %v142
    %v214 = vunpack.c.l.b16 %v143
    %v215 = vunpack.c.l.b16 %v144
    %v216 = vunpack.c.l.b16 %v145
    %v217 = vunpack.c.l.b16 %v146
    %v218 = vunpack.c.l.b16 %v147
    %v219 = vunpack.c.l.b16 %v148
    %v220 = vunpack.c.l.b16 %v149
    %v221 = vunpack.c.l.b16 %v150
    %v222 = vunpack.c.l.b16 %v151
    %v223 = vunpack.c.l.b16 %v152
    %v224 = vunpack.c.l.b16 %v153
    %v225 = vunpack.c.l.b16 %v154
    %v226 = vunpack.c.l.b16 %v155
    %v227 = vunpack.c.l.b16 %v156
    %v228 = vunpack.c.l.b16 %v157
    %v229 = vunpack.c.l.b16 %v158
    %v230 = vpack.c.b16 %v199, %v198
    %v231 = vpack.c.b16 %v201, %v200
    %v232 = vpack.c.b16 %v203, %v202
    %v233 = vpack.c.b16 %v205, %v204
    %v234 = vpack.c.b16 %v207, %v206
    %v235 = vpack.c.b16 %v209, %v208
    %v236 = vpack.c.b16 %v211, %v210
    %v237 = vpack.c.b16 %v213, %v212
    %v238 = vpack.c.b16 %v215, %v214
    %v239 = vpack.c.b16 %v217, %v216
    %v240 = vpack.c.b16 %v219, %v218
    %v241 = vpack.c.b16 %v221, %v220
    %v242 = vpack.c.b16 %v223, %v222
    %v243 = vpack.c.b16 %v225, %v224
    %v244 = vpack.c.b16 %v227, %v226
    %v245 = vpack.c.b16 %v229, %v228
    %262 = vmatprep.subr.bf16.mxu0 0
    %263 = vmatpush1.bf16.msra.mxu0 %v230
    %264 = vmatprep.subr.bf16.mxu0 0
    %265 = vmatpush1.bf16.msra.mxu0 %v231
    %266 = vmatprep.subr.bf16.mxu0 0
    %267 = vmatpush1.bf16.msra.mxu0 %v232
    %268 = vmatprep.subr.bf16.mxu0 0
    %269 = vmatpush1.bf16.msra.mxu0 %v233
    %270 = vmatprep.subr.bf16.mxu0 0
    %271 = vmatpush1.bf16.msra.mxu0 %v234
    %272 = vmatprep.subr.bf16.mxu0 0
    %273 = vmatpush1.bf16.msra.mxu0 %v235
    %274 = vmatprep.subr.bf16.mxu0 0
    %275 = vmatpush1.bf16.msra.mxu0 %v236
    %276 = vmatprep.subr.bf16.mxu0 0
    %277 = vmatpush1.bf16.msra.mxu0 %v237
    %278 = vmatprep.subr.bf16.mxu0 0
    %279 = vmatpush1.bf16.msra.mxu0 %v238
    %280 = vmatprep.subr.bf16.mxu0 0
    %281 = vmatpush1.bf16.msra.mxu0 %v239
    %282 = vmatprep.subr.bf16.mxu0 0
    %283 = vmatpush1.bf16.msra.mxu0 %v240
    %284 = vmatprep.subr.bf16.mxu0 0
    %285 = vmatpush1.bf16.msra.mxu0 %v241
    %286 = vmatprep.subr.bf16.mxu0 0
    %287 = vmatpush1.bf16.msra.mxu0 %v242
    %288 = vmatprep.subr.bf16.mxu0 0
    %289 = vmatpush1.bf16.msra.mxu0 %v243
    %290 = vmatprep.subr.bf16.mxu0 0
    %291 = vmatpush1.bf16.msra.mxu0 %v244
    %292 = vmatprep.subr.bf16.mxu0 0
    %293 = vmatpush1.bf16.msra.mxu0 %v245
    %294 = vmatprep.mubr.bf16.mxu0 %v84
    %295 = vmatmul.mubr.bf16.gmra.mrb[0].mxu0 %v83
    %v296 = vpop.f32.mrb[0].mxu0
    %v297 = vadd.f32 %v164, %v296
    %v298 = vpop.f32.mrb[0].mxu0
    %v299 = vpop.f32.mrb[0].mxu0
    %v300 = vadd.f32 %v164, %v299
    %v301 = vpop.f32.mrb[0].mxu0
    %302 = vmatprep.mubr.bf16.mxu0 %v94
    %303 = vmatmul.mubr.bf16.gmra.mrb[0].mxu0 %v93
    %v304 = vpop.f32.mrb[0].mxu0
    %v305 = vadd.f32 %v164, %v304
    %v306 = vpop.f32.mrb[0].mxu0
    %v307 = vpop.f32.mrb[0].mxu0
    %v308 = vadd.f32 %v164, %v307
    %v309 = vpop.f32.mrb[0].mxu0
    %310 = vmatprep.mubr.bf16.mxu0 %v104
    %311 = vmatmul.mubr.bf16.gmra.mrb[0].mxu0 %v103
    %v312 = vpop.f32.mrb[0].mxu0
    %v313 = vadd.f32 %v164, %v312
    %v314 = vpop.f32.mrb[0].mxu0
    %v315 = vpop.f32.mrb[0].mxu0
    %v316 = vadd.f32 %v164, %v315
    %v317 = vpop.f32.mrb[0].mxu0
    %318 = vmatprep.mubr.bf16.mxu0 %v114
    %319 = vmatmul.mubr.bf16.gmra.mrb[0].mxu0 %v113
    %v320 = vpop.f32.mrb[0].mxu0
    %v321 = vadd.f32 %v164, %v320
    %v322 = vpop.f32.mrb[0].mxu0
    %v323 = vpop.f32.mrb[0].mxu0
    %v324 = vadd.f32 %v164, %v323
    %v325 = vpop.f32.mrb[0].mxu0
    %326 = vmatprep.mubr.bf16.mxu0 %v124
    %327 = vmatmul.mubr.bf16.gmra.mrb[0].mxu0 %v123
    %v328 = vpop.f32.mrb[0].mxu0
    %v329 = vadd.f32 %v164, %v328
    %v330 = vpop.f32.mrb[0].mxu0
    %v331 = vpop.f32.mrb[0].mxu0
    %v332 = vadd.f32 %v164, %v331
    %v333 = vpop.f32.mrb[0].mxu0
    %334 = vdwg.mxu0
    %vm335 = vcmask 261120
    %v336 = vsel %vm335, %v297, -inf
    %337 = vmax.xlane.f32.xlu0 %v336
    %v338 = vpop.xlane.xlu0 %337
    %v339 = vsel %vm335, %v300, -inf
    %340 = vmax.xlane.f32.xlu0 %v339
    %v341 = vpop.xlane.xlu0 %340
    %v342 = vsel %vm335, %v305, -inf
    %343 = vmax.xlane.f32.xlu0 %v342
    %v344 = vpop.xlane.xlu0 %343
    %v345 = vsel %vm335, %v308, -inf
    %346 = vmax.xlane.f32.xlu0 %v345
    %v347 = vpop.xlane.xlu0 %346
    %v348 = vsel %vm335, %v313, -inf
    %349 = vmax.xlane.f32.xlu0 %v348
    %v350 = vpop.xlane.xlu0 %349
    %v351 = vsel %vm335, %v316, -inf
    %352 = vmax.xlane.f32.xlu0 %v351
    %v353 = vpop.xlane.xlu0 %352
    %v354 = vsel %vm335, %v321, -inf
    %355 = vmax.xlane.f32.xlu0 %v354
    %v356 = vpop.xlane.xlu0 %355
    %v357 = vsel %vm335, %v324, -inf
    %358 = vmax.xlane.f32.xlu0 %v357
    %v359 = vpop.xlane.xlu0 %358
    %v360 = vsel %vm335, %v329, -inf
    %361 = vmax.xlane.f32.xlu0 %v360
    %v362 = vpop.xlane.xlu0 %361
    %v363 = vsel %vm335, %v332, -inf
    %364 = vmax.xlane.f32.xlu0 %v363
    %v365 = vpop.xlane.xlu0 %364
    %v366 = vsub.f32 %v297, %v338
    %v367 = vsub.f32 %v300, %v341
    %v368 = vsub.f32 %v305, %v344
    %v369 = vsub.f32 %v308, %v347
    %v370 = vsub.f32 %v313, %v350
    %v371 = vsub.f32 %v316, %v353
    %v372 = vsub.f32 %v321, %v356
    %v373 = vsub.f32 %v324, %v359
    %v374 = vsub.f32 %v329, %v362
    %v375 = vsub.f32 %v332, %v365
    %v376 = vmul.f32 %v366, 1.442695
    %v377 = vpow.pop %v376
    %v378 = vmul.f32 %v367, 1.442695
    %v379 = vpow.pop %v378
    %v380 = vmul.f32 %v368, 1.442695
    %v381 = vpow.pop %v380
    %v382 = vmul.f32 %v369, 1.442695
    %v383 = vpow.pop %v382
    %v384 = vmul.f32 %v370, 1.442695
    %v385 = vpow.pop %v384
    %v386 = vmul.f32 %v371, 1.442695
    %v387 = vpow.pop %v386
    %v388 = vmul.f32 %v372, 1.442695
    %v389 = vpow.pop %v388
    %v390 = vmul.f32 %v373, 1.442695
    %v391 = vpow.pop %v390
    %v392 = vmul.f32 %v374, 1.442695
    %v393 = vpow.pop %v392
    %v394 = vmul.f32 %v375, 1.442695
    %v395 = vpow.pop %v394
    %v396 = vsel %vm335, %v377, 0.0
    %397 = vadd.xlane.f32.xlu0 %v396
    %v398 = vpop.xlane.xlu0 %397
    %v399 = vsel %vm335, %v379, 0.0
    %400 = vadd.xlane.f32.xlu0 %v399
    %v401 = vpop.xlane.xlu0 %400
    %v402 = vsel %vm335, %v381, 0.0
    %403 = vadd.xlane.f32.xlu0 %v402
    %v404 = vpop.xlane.xlu0 %403
    %v405 = vsel %vm335, %v383, 0.0
    %406 = vadd.xlane.f32.xlu0 %v405
    %v407 = vpop.xlane.xlu0 %406
    %v408 = vsel %vm335, %v385, 0.0
    %409 = vadd.xlane.f32.xlu0 %v408
    %v410 = vpop.xlane.xlu0 %409
    %v411 = vsel %vm335, %v387, 0.0
    %412 = vadd.xlane.f32.xlu0 %v411
    %v413 = vpop.xlane.xlu0 %412
    %v414 = vsel %vm335, %v389, 0.0
    %415 = vadd.xlane.f32.xlu0 %v414
    %v416 = vpop.xlane.xlu0 %415
    %v417 = vsel %vm335, %v391, 0.0
    %418 = vadd.xlane.f32.xlu0 %v417
    %v419 = vpop.xlane.xlu0 %418
    %v420 = vsel %vm335, %v393, 0.0
    %421 = vadd.xlane.f32.xlu0 %v420
    %v422 = vpop.xlane.xlu0 %421
    %v423 = vsel %vm335, %v395, 0.0
    %424 = vadd.xlane.f32.xlu0 %v423
    %v425 = vpop.xlane.xlu0 %424
    %v426 = vrcp.pop %v398
    %v427 = vrcp.pop %v401
    %v428 = vrcp.pop %v404
    %v429 = vrcp.pop %v407
    %v430 = vrcp.pop %v410
    %v431 = vrcp.pop %v413
    %v432 = vrcp.pop %v416
    %v433 = vrcp.pop %v419
    %v434 = vrcp.pop %v422
    %v435 = vrcp.pop %v425
    %v436 = vmul.f32 %v377, %v426
    %v437 = vmul.f32 %v379, %v427
    %v438 = vmul.f32 %v381, %v428
    %v439 = vmul.f32 %v383, %v429
    %v440 = vmul.f32 %v385, %v430
    %v441 = vmul.f32 %v387, %v431
    %v442 = vmul.f32 %v389, %v432
    %v443 = vmul.f32 %v391, %v433
    %v444 = vmul.f32 %v393, %v434
    %v445 = vmul.f32 %v395, %v435
    %v446 = vpack.c.bf16 %v300, %v297
    %v447 = vpack.c.bf16 %v308, %v305
    %v448 = vpack.c.bf16 %v316, %v313
    %v449 = vpack.c.bf16 %v324, %v321
    %v450 = vpack.c.bf16 %v332, %v329
    %452 = vrot.lane.b32.xlu0 %v446, 96
    %v453 = vpop.permute.xlu0 %452
    %455 = vrot.lane.b32.xlu0 %v448, 32
    %v456 = vpop.permute.xlu0 %455
    %458 = vrot.lane.b32.xlu0 %v449, 64
    %v459 = vpop.permute.xlu0 %458
    %461 = vrot.lane.b32.xlu0 %v450, 96
    %v462 = vpop.permute.xlu0 %461
    %v465 = vsel %vm335, %v453, %v447
    %vm466 = vcmask 523264
    %v468 = vsel %vm466, %v465, %v456
    %vm469 = vcmask 785408
    %v471 = vsel %vm469, %v468, %v459
    %v473 = vld [vmem:[%s9] sm:$0xff]
    %v474 = vld [vmem:[%s9 + $0x8] sm:$0xff]
    %v475 = vld [vmem:[%s9 + $0x10] sm:$0xff]
    %v476 = vld [vmem:[%s9 + $0x18] sm:$0xff]
    %v477 = vld [vmem:[%s9 + $0x20] sm:$0xff]
    %v478 = vld [vmem:[%s9 + $0x28] sm:$0xff]
    %v479 = vld [vmem:[%s9 + $0x30] sm:$0xff]
    %v480 = vld [vmem:[%s9 + $0x38] sm:$0xff]
    %v481 = vld [vmem:[%s9 + $0x40] sm:$0xff]
    %v482 = vld [vmem:[%s9 + $0x48] sm:$0xff]
    %v483 = vld [vmem:[%s9 + $0x50] sm:$0xff]
    %v484 = vld [vmem:[%s9 + $0x58] sm:$0xff]
    %v485 = vld [vmem:[%s9 + $0x60] sm:$0xff]
    %v486 = vld [vmem:[%s9 + $0x68] sm:$0xff]
    %v487 = vld [vmem:[%s9 + $0x70] sm:$0xff]
    %v488 = vld [vmem:[%s9 + $0x78] sm:$0xff]
    %v489 = vld [vmem:[%s9 + $0x80] sm:$0xff]
    %v490 = vld [vmem:[%s9 + $0x88] sm:$0xff]
    %v491 = vld [vmem:[%s9 + $0x90] sm:$0xff]
    %v492 = vld [vmem:[%s9 + $0x98] sm:$0xff]
    %v493 = vld [vmem:[%s9 + $0xa0] sm:$0xff]
    %v494 = vld [vmem:[%s9 + $0xa8] sm:$0xff]
    %v495 = vld [vmem:[%s9 + $0xb0] sm:$0xff]
    %v496 = vld [vmem:[%s9 + $0xb8] sm:$0xff]
    %v497 = vld [vmem:[%s9 + $0xc0] sm:$0xff]
    %v498 = vld [vmem:[%s9 + $0xc8] sm:$0xff]
    %v499 = vld [vmem:[%s9 + $0xd0] sm:$0xff]
    %v500 = vld [vmem:[%s9 + $0xd8] sm:$0xff]
    %v501 = vld [vmem:[%s9 + $0xe0] sm:$0xff]
    %v502 = vld [vmem:[%s9 + $0xe8] sm:$0xff]
    %v503 = vld [vmem:[%s9 + $0xf0] sm:$0xff]
    %v504 = vld [vmem:[%s9 + $0xf8] sm:$0xff]
    %v505 = vld [vmem:[%s9 + $0x100] sm:$0xff]
    %v506 = vld [vmem:[%s9 + $0x108] sm:$0xff]
    %v507 = vld [vmem:[%s9 + $0x110] sm:$0xff]
    %v508 = vld [vmem:[%s9 + $0x118] sm:$0xff]
    %v509 = vld [vmem:[%s9 + $0x120] sm:$0xff]
    %v510 = vld [vmem:[%s9 + $0x128] sm:$0xff]
    %v511 = vld [vmem:[%s9 + $0x130] sm:$0xff]
    %v512 = vld [vmem:[%s9 + $0x138] sm:$0xff]
    %v513 = vld [vmem:[%s9 + $0x140] sm:$0xff]
    %v514 = vld [vmem:[%s9 + $0x148] sm:$0xff]
    %v515 = vld [vmem:[%s9 + $0x150] sm:$0xff]
    %v516 = vld [vmem:[%s9 + $0x158] sm:$0xff]
    %v517 = vld [vmem:[%s9 + $0x160] sm:$0xff]
    %v518 = vld [vmem:[%s9 + $0x168] sm:$0xff]
    %v519 = vld [vmem:[%s9 + $0x170] sm:$0xff]
    %v520 = vld [vmem:[%s9 + $0x178] sm:$0xff]
    %v521 = vld [vmem:[%s9 + $0x180] sm:$0xff]
    %v522 = vld [vmem:[%s9 + $0x188] sm:$0xff]
    %v523 = vld [vmem:[%s9 + $0x190] sm:$0xff]
    %v524 = vld [vmem:[%s9 + $0x198] sm:$0xff]
    %v525 = vld [vmem:[%s9 + $0x1a0] sm:$0xff]
    %v526 = vld [vmem:[%s9 + $0x1a8] sm:$0xff]
    %v527 = vld [vmem:[%s9 + $0x1b0] sm:$0xff]
    %v528 = vld [vmem:[%s9 + $0x1b8] sm:$0xff]
    %v529 = vld [vmem:[%s9 + $0x1c0] sm:$0xff]
    %v530 = vld [vmem:[%s9 + $0x1c8] sm:$0xff]
    %v531 = vld [vmem:[%s9 + $0x1d0] sm:$0xff]
    %v532 = vld [vmem:[%s9 + $0x1d8] sm:$0xff]
    %v533 = vld [vmem:[%s9 + $0x1e0] sm:$0xff]
    %v534 = vld [vmem:[%s9 + $0x1e8] sm:$0xff]
    %v535 = vld [vmem:[%s9 + $0x1f0] sm:$0xff]
    %v536 = vld [vmem:[%s9 + $0x1f8] sm:$0xff]
    %v537 = vld [vmem:[%s9 + $0x200] sm:$0xff]
    %v538 = vld [vmem:[%s9 + $0x208] sm:$0xff]
    %v539 = vld [vmem:[%s9 + $0x210] sm:$0xff]
    %v540 = vld [vmem:[%s9 + $0x218] sm:$0xff]
    %v541 = vld [vmem:[%s9 + $0x220] sm:$0xff]
    %v542 = vld [vmem:[%s9 + $0x228] sm:$0xff]
    %v543 = vld [vmem:[%s9 + $0x230] sm:$0xff]
    %v544 = vld [vmem:[%s9 + $0x238] sm:$0xff]
    %v545 = vld [vmem:[%s9 + $0x240] sm:$0xff]
    %v546 = vld [vmem:[%s9 + $0x248] sm:$0xff]
    %v547 = vld [vmem:[%s9 + $0x250] sm:$0xff]
    %v548 = vld [vmem:[%s9 + $0x258] sm:$0xff]
    %v549 = vld [vmem:[%s9 + $0x260] sm:$0xff]
    %v550 = vld [vmem:[%s9 + $0x268] sm:$0xff]
    %v551 = vld [vmem:[%s9 + $0x270] sm:$0xff]
    %v552 = vld [vmem:[%s9 + $0x278] sm:$0xff]
    %v633 = vunpack.c.l.b16 %v473
    %v634 = vunpack.c.h.b16 %v473
    %v635 = vunpack.c.l.b16 %v474
    %v636 = vunpack.c.h.b16 %v474
    %v637 = vunpack.c.l.b16 %v475
    %v638 = vunpack.c.h.b16 %v475
    %v639 = vunpack.c.l.b16 %v476
    %v640 = vunpack.c.h.b16 %v476
    %v641 = vunpack.c.l.b16 %v477
    %v642 = vunpack.c.h.b16 %v477
    %v643 = vunpack.c.l.b16 %v478
    %v644 = vunpack.c.h.b16 %v478
    %v645 = vunpack.c.l.b16 %v479
    %v646 = vunpack.c.h.b16 %v479
    %v647 = vunpack.c.l.b16 %v480
    %v648 = vunpack.c.h.b16 %v480
    %v649 = vunpack.c.l.b16 %v481
    %v650 = vunpack.c.h.b16 %v481
    %v651 = vunpack.c.l.b16 %v482
    %v652 = vunpack.c.h.b16 %v482
    %v653 = vunpack.c.l.b16 %v483
    %v654 = vunpack.c.h.b16 %v483
    %v655 = vunpack.c.l.b16 %v484
    %v656 = vunpack.c.h.b16 %v484
    %v657 = vunpack.c.l.b16 %v485
    %v658 = vunpack.c.h.b16 %v485
    %v659 = vunpack.c.l.b16 %v486
    %v660 = vunpack.c.h.b16 %v486
    %v661 = vunpack.c.l.b16 %v487
    %v662 = vunpack.c.h.b16 %v487
    %v663 = vunpack.c.l.b16 %v488
    %v664 = vunpack.c.h.b16 %v488
    %v665 = vunpack.c.l.b16 %v489
    %v666 = vunpack.c.h.b16 %v489
    %v667 = vunpack.c.l.b16 %v490
    %v668 = vunpack.c.h.b16 %v490
    %v669 = vunpack.c.l.b16 %v491
    %v670 = vunpack.c.h.b16 %v491
    %v671 = vunpack.c.l.b16 %v492
    %v672 = vunpack.c.h.b16 %v492
    %v673 = vunpack.c.l.b16 %v493
    %v674 = vunpack.c.h.b16 %v493
    %v675 = vunpack.c.l.b16 %v494
    %v676 = vunpack.c.h.b16 %v494
    %v677 = vunpack.c.l.b16 %v495
    %v678 = vunpack.c.h.b16 %v495
    %v679 = vunpack.c.l.b16 %v496
    %v680 = vunpack.c.h.b16 %v496
    %v681 = vunpack.c.l.b16 %v497
    %v682 = vunpack.c.h.b16 %v497
    %v683 = vunpack.c.l.b16 %v498
    %v684 = vunpack.c.h.b16 %v498
    %v685 = vunpack.c.l.b16 %v499
    %v686 = vunpack.c.h.b16 %v499
    %v687 = vunpack.c.l.b16 %v500
    %v688 = vunpack.c.h.b16 %v500
    %v689 = vunpack.c.l.b16 %v501
    %v690 = vunpack.c.h.b16 %v501
    %v691 = vunpack.c.l.b16 %v502
    %v692 = vunpack.c.h.b16 %v502
    %v693 = vunpack.c.l.b16 %v503
    %v694 = vunpack.c.h.b16 %v503
    %v695 = vunpack.c.l.b16 %v504
    %v696 = vunpack.c.h.b16 %v504
    %v697 = vunpack.c.l.b16 %v505
    %v698 = vunpack.c.h.b16 %v505
    %v699 = vunpack.c.l.b16 %v506
    %v700 = vunpack.c.h.b16 %v506
    %v701 = vunpack.c.l.b16 %v507
    %v702 = vunpack.c.h.b16 %v507
    %v703 = vunpack.c.l.b16 %v508
    %v704 = vunpack.c.h.b16 %v508
    %v705 = vunpack.c.l.b16 %v509
    %v706 = vunpack.c.h.b16 %v509
    %v707 = vunpack.c.l.b16 %v510
    %v708 = vunpack.c.h.b16 %v510
    %v709 = vunpack.c.l.b16 %v511
    %v710 = vunpack.c.h.b16 %v511
    %v711 = vunpack.c.l.b16 %v512
    %v712 = vunpack.c.h.b16 %v512
    %v713 = vunpack.c.l.b16 %v513
    %v714 = vunpack.c.h.b16 %v513
    %v715 = vunpack.c.l.b16 %v514
    %v716 = vunpack.c.h.b16 %v514
    %v717 = vunpack.c.l.b16 %v515
    %v718 = vunpack.c.h.b16 %v515
    %v719 = vunpack.c.l.b16 %v516
    %v720 = vunpack.c.h.b16 %v516
    %v721 = vunpack.c.l.b16 %v517
    %v722 = vunpack.c.h.b16 %v517
    %v723 = vunpack.c.l.b16 %v518
    %v724 = vunpack.c.h.b16 %v518
    %v725 = vunpack.c.l.b16 %v519
    %v726 = vunpack.c.h.b16 %v519
    %v727 = vunpack.c.l.b16 %v520
    %v728 = vunpack.c.h.b16 %v520
    %v729 = vunpack.c.l.b16 %v521
    %v730 = vunpack.c.h.b16 %v521
    %v731 = vunpack.c.l.b16 %v522
    %v732 = vunpack.c.h.b16 %v522
    %v733 = vunpack.c.l.b16 %v523
    %v734 = vunpack.c.h.b16 %v523
    %v735 = vunpack.c.l.b16 %v524
    %v736 = vunpack.c.h.b16 %v524
    %v737 = vunpack.c.l.b16 %v525
    %v738 = vunpack.c.h.b16 %v525
    %v739 = vunpack.c.l.b16 %v526
    %v740 = vunpack.c.h.b16 %v526
    %v741 = vunpack.c.l.b16 %v527
    %v742 = vunpack.c.h.b16 %v527
    %v743 = vunpack.c.l.b16 %v528
    %v744 = vunpack.c.h.b16 %v528
    %v745 = vunpack.c.l.b16 %v529
    %v746 = vunpack.c.h.b16 %v529
    %v747 = vunpack.c.l.b16 %v530
    %v748 = vunpack.c.h.b16 %v530
    %v749 = vunpack.c.l.b16 %v531
    %v750 = vunpack.c.h.b16 %v531
    %v751 = vunpack.c.l.b16 %v532
    %v752 = vunpack.c.h.b16 %v532
    %v753 = vunpack.c.l.b16 %v533
    %v754 = vunpack.c.h.b16 %v533
    %v755 = vunpack.c.l.b16 %v534
    %v756 = vunpack.c.h.b16 %v534
    %v757 = vunpack.c.l.b16 %v535
    %v758 = vunpack.c.h.b16 %v535
    %v759 = vunpack.c.l.b16 %v536
    %v760 = vunpack.c.h.b16 %v536
    %v761 = vunpack.c.l.b16 %v537
    %v762 = vunpack.c.h.b16 %v537
    %v763 = vunpack.c.l.b16 %v538
    %v764 = vunpack.c.h.b16 %v538
    %v765 = vunpack.c.l.b16 %v539
    %v766 = vunpack.c.h.b16 %v539
    %v767 = vunpack.c.l.b16 %v540
    %v768 = vunpack.c.h.b16 %v540
    %v769 = vunpack.c.l.b16 %v541
    %v770 = vunpack.c.h.b16 %v541
    %v771 = vunpack.c.l.b16 %v542
    %v772 = vunpack.c.h.b16 %v542
    %v773 = vunpack.c.l.b16 %v543
    %v774 = vunpack.c.h.b16 %v543
    %v775 = vunpack.c.l.b16 %v544
    %v776 = vunpack.c.h.b16 %v544
    %v777 = vunpack.c.l.b16 %v545
    %v778 = vunpack.c.h.b16 %v545
    %v779 = vunpack.c.l.b16 %v546
    %v780 = vunpack.c.h.b16 %v546
    %v781 = vunpack.c.l.b16 %v547
    %v782 = vunpack.c.h.b16 %v547
    %v783 = vunpack.c.l.b16 %v548
    %v784 = vunpack.c.h.b16 %v548
    %v785 = vunpack.c.l.b16 %v549
    %v786 = vunpack.c.h.b16 %v549
    %v787 = vunpack.c.l.b16 %v550
    %v788 = vunpack.c.h.b16 %v550
    %v789 = vunpack.c.l.b16 %v551
    %v790 = vunpack.c.h.b16 %v551
    %v791 = vunpack.c.l.b16 %v552
    %v792 = vunpack.c.h.b16 %v552
    %v793 = vpack.c.b16 %v641, %v633
    %v794 = vpack.c.b16 %v642, %v634
    %v795 = vpack.c.b16 %v643, %v635
    %v796 = vpack.c.b16 %v644, %v636
    %v797 = vpack.c.b16 %v645, %v637
    %v798 = vpack.c.b16 %v646, %v638
    %v799 = vpack.c.b16 %v647, %v639
    %v800 = vpack.c.b16 %v648, %v640
    %v801 = vpack.c.b16 %v657, %v649
    %v802 = vpack.c.b16 %v658, %v650
    %v803 = vpack.c.b16 %v659, %v651
    %v804 = vpack.c.b16 %v660, %v652
    %v805 = vpack.c.b16 %v661, %v653
    %v806 = vpack.c.b16 %v662, %v654
    %v807 = vpack.c.b16 %v663, %v655
    %v808 = vpack.c.b16 %v664, %v656
    %v809 = vpack.c.b16 %v673, %v665
    %v810 = vpack.c.b16 %v674, %v666
    %v811 = vpack.c.b16 %v675, %v667
    %v812 = vpack.c.b16 %v676, %v668
    %v813 = vpack.c.b16 %v677, %v669
    %v814 = vpack.c.b16 %v678, %v670
    %v815 = vpack.c.b16 %v679, %v671
    %v816 = vpack.c.b16 %v680, %v672
    %v817 = vpack.c.b16 %v689, %v681
    %v818 = vpack.c.b16 %v690, %v682
    %v819 = vpack.c.b16 %v691, %v683
    %v820 = vpack.c.b16 %v692, %v684
    %v821 = vpack.c.b16 %v693, %v685
    %v822 = vpack.c.b16 %v694, %v686
    %v823 = vpack.c.b16 %v695, %v687
    %v824 = vpack.c.b16 %v696, %v688
    %v825 = vpack.c.b16 %v705, %v697
    %v826 = vpack.c.b16 %v706, %v698
    %v827 = vpack.c.b16 %v707, %v699
    %v828 = vpack.c.b16 %v708, %v700
    %v829 = vpack.c.b16 %v709, %v701
    %v830 = vpack.c.b16 %v710, %v702
    %v831 = vpack.c.b16 %v711, %v703
    %v832 = vpack.c.b16 %v712, %v704
    %v833 = vpack.c.b16 %v721, %v713
    %v834 = vpack.c.b16 %v722, %v714
    %v835 = vpack.c.b16 %v723, %v715
    %v836 = vpack.c.b16 %v724, %v716
    %v837 = vpack.c.b16 %v725, %v717
    %v838 = vpack.c.b16 %v726, %v718
    %v839 = vpack.c.b16 %v727, %v719
    %v840 = vpack.c.b16 %v728, %v720
    %v841 = vpack.c.b16 %v737, %v729
    %v842 = vpack.c.b16 %v738, %v730
    %v843 = vpack.c.b16 %v739, %v731
    %v844 = vpack.c.b16 %v740, %v732
    %v845 = vpack.c.b16 %v741, %v733
    %v846 = vpack.c.b16 %v742, %v734
    %v847 = vpack.c.b16 %v743, %v735
    %v848 = vpack.c.b16 %v744, %v736
    %v849 = vpack.c.b16 %v753, %v745
    %v850 = vpack.c.b16 %v754, %v746
    %v851 = vpack.c.b16 %v755, %v747
    %v852 = vpack.c.b16 %v756, %v748
    %v853 = vpack.c.b16 %v757, %v749
    %v854 = vpack.c.b16 %v758, %v750
    %v855 = vpack.c.b16 %v759, %v751
    %v856 = vpack.c.b16 %v760, %v752
    %v857 = vpack.c.b16 %v769, %v761
    %v858 = vpack.c.b16 %v770, %v762
    %v859 = vpack.c.b16 %v771, %v763
    %v860 = vpack.c.b16 %v772, %v764
    %v861 = vpack.c.b16 %v773, %v765
    %v862 = vpack.c.b16 %v774, %v766
    %v863 = vpack.c.b16 %v775, %v767
    %v864 = vpack.c.b16 %v776, %v768
    %v865 = vpack.c.b16 %v785, %v777
    %v866 = vpack.c.b16 %v786, %v778
    %v867 = vpack.c.b16 %v787, %v779
    %v868 = vpack.c.b16 %v788, %v780
    %v869 = vpack.c.b16 %v789, %v781
    %v870 = vpack.c.b16 %v790, %v782
    %v871 = vpack.c.b16 %v791, %v783
    %v872 = vpack.c.b16 %v792, %v784
    %v954 = vsel %vm335, %v462, 0
    %956 = vmatprep.subr.bf16.mxu0 %v794
    %957 = vmatpush1.bf16.msra.mxu0 %v793
    %958 = vmatprep.subr.bf16.mxu0 %v802
    %959 = vmatpush1.bf16.msra.mxu0 %v801
    %960 = vmatprep.subr.bf16.mxu0 %v810
    %961 = vmatpush1.bf16.msra.mxu0 %v809
    %962 = vmatprep.subr.bf16.mxu0 %v818
    %963 = vmatpush1.bf16.msra.mxu0 %v817
    %964 = vmatprep.subr.bf16.mxu0 %v826
    %965 = vmatpush1.bf16.msra.mxu0 %v825
    %966 = vmatprep.subr.bf16.mxu0 %v834
    %967 = vmatpush1.bf16.msra.mxu0 %v833
    %968 = vmatprep.subr.bf16.mxu0 %v842
    %969 = vmatpush1.bf16.msra.mxu0 %v841
    %970 = vmatprep.subr.bf16.mxu0 %v850
    %971 = vmatpush1.bf16.msra.mxu0 %v849
    %972 = vmatprep.subr.bf16.mxu0 %v858
    %973 = vmatpush1.bf16.msra.mxu0 %v857
    %974 = vmatprep.subr.bf16.mxu0 %v866
    %975 = vmatpush1.bf16.msra.mxu0 %v865
    %976 = vmatprep.subr.bf16.mxu0 0
    %977 = vmatpush1.bf16.msra.mxu0 0
    %978 = vmatprep.subr.bf16.mxu0 0
    %979 = vmatpush1.bf16.msra.mxu0 0
    %980 = vmatprep.subr.bf16.mxu0 0
    %981 = vmatpush1.bf16.msra.mxu0 0
    %982 = vmatprep.subr.bf16.mxu0 0
    %983 = vmatpush1.bf16.msra.mxu0 0
    %984 = vmatprep.subr.bf16.mxu0 0
    %985 = vmatpush1.bf16.msra.mxu0 0
    %986 = vmatprep.subr.bf16.mxu0 0
    %987 = vmatpush1.bf16.msra.mxu0 0
    %988 = vmatprep.mubr.bf16.mxu0 %v954
    %989 = vmatmul.mubr.bf16.gmra.mrb[0].mxu0 %v471
    %v990 = vpop.f32.mrb[0].mxu0
    %v991 = vadd.f32 0.0, %v990
    %v992 = vpop.f32.mrb[0].mxu0
    %v993 = vadd.f32 0.0, %v992
    %v994 = vpop.f32.mrb[0].mxu0
    %v995 = vadd.f32 0.0, %v994
    %v996 = vpop.f32.mrb[0].mxu0
    %v997 = vadd.f32 0.0, %v996
    %998 = vdwg.mxu0
    %999 = vmatprep.subr.bf16.mxu0 %v796
    %1000 = vmatpush1.bf16.msra.mxu0 %v795
    %1001 = vmatprep.subr.bf16.mxu0 %v804
    %1002 = vmatpush1.bf16.msra.mxu0 %v803
    %1003 = vmatprep.subr.bf16.mxu0 %v812
    %1004 = vmatpush1.bf16.msra.mxu0 %v811
    %1005 = vmatprep.subr.bf16.mxu0 %v820
    %1006 = vmatpush1.bf16.msra.mxu0 %v819
    %1007 = vmatprep.subr.bf16.mxu0 %v828
    %1008 = vmatpush1.bf16.msra.mxu0 %v827
    %1009 = vmatprep.subr.bf16.mxu0 %v836
    %1010 = vmatpush1.bf16.msra.mxu0 %v835
    %1011 = vmatprep.subr.bf16.mxu0 %v844
    %1012 = vmatpush1.bf16.msra.mxu0 %v843
    %1013 = vmatprep.subr.bf16.mxu0 %v852
    %1014 = vmatpush1.bf16.msra.mxu0 %v851
    %1015 = vmatprep.subr.bf16.mxu0 %v860
    %1016 = vmatpush1.bf16.msra.mxu0 %v859
    %1017 = vmatprep.subr.bf16.mxu0 %v868
    %1018 = vmatpush1.bf16.msra.mxu0 %v867
    %1019 = vmatprep.subr.bf16.mxu0 0
    %1020 = vmatpush1.bf16.msra.mxu0 0
    %1021 = vmatprep.subr.bf16.mxu0 0
    %1022 = vmatpush1.bf16.msra.mxu0 0
    %1023 = vmatprep.subr.bf16.mxu0 0
    %1024 = vmatpush1.bf16.msra.mxu0 0
    %1025 = vmatprep.subr.bf16.mxu0 0
    %1026 = vmatpush1.bf16.msra.mxu0 0
    %1027 = vmatprep.subr.bf16.mxu0 0
    %1028 = vmatpush1.bf16.msra.mxu0 0
    %1029 = vmatprep.subr.bf16.mxu0 0
    %1030 = vmatpush1.bf16.msra.mxu0 0
    %1031 = vmatprep.mubr.bf16.mxu0 %v954
    %1032 = vmatmul.mubr.bf16.gmra.mrb[0].mxu0 %v471
    %v1033 = vpop.f32.mrb[0].mxu0
    %v1034 = vadd.f32 0.0, %v1033
    %v1035 = vpop.f32.mrb[0].mxu0
    %v1036 = vadd.f32 0.0, %v1035
    %v1037 = vpop.f32.mrb[0].mxu0
    %v1038 = vadd.f32 0.0, %v1037
    %v1039 = vpop.f32.mrb[0].mxu0
    %v1040 = vadd.f32 0.0, %v1039
    %1041 = vdwg.mxu0
    %1042 = vmatprep.subr.bf16.mxu0 %v798
    %1043 = vmatpush1.bf16.msra.mxu0 %v797
    %1044 = vmatprep.subr.bf16.mxu0 %v806
    %1045 = vmatpush1.bf16.msra.mxu0 %v805
    %1046 = vmatprep.subr.bf16.mxu0 %v814
    %1047 = vmatpush1.bf16.msra.mxu0 %v813
    %1048 = vmatprep.subr.bf16.mxu0 %v822
    %1049 = vmatpush1.bf16.msra.mxu0 %v821
    %1050 = vmatprep.subr.bf16.mxu0 %v830
    %1051 = vmatpush1.bf16.msra.mxu0 %v829
    %1052 = vmatprep.subr.bf16.mxu0 %v838
    %1053 = vmatpush1.bf16.msra.mxu0 %v837
    %1054 = vmatprep.subr.bf16.mxu0 %v846
    %1055 = vmatpush1.bf16.msra.mxu0 %v845
    %1056 = vmatprep.subr.bf16.mxu0 %v854
    %1057 = vmatpush1.bf16.msra.mxu0 %v853
    %1058 = vmatprep.subr.bf16.mxu0 %v862
    %1059 = vmatpush1.bf16.msra.mxu0 %v861
    %1060 = vmatprep.subr.bf16.mxu0 %v870
    %1061 = vmatpush1.bf16.msra.mxu0 %v869
    %1062 = vmatprep.subr.bf16.mxu0 0
    %1063 = vmatpush1.bf16.msra.mxu0 0
    %1064 = vmatprep.subr.bf16.mxu0 0
    %1065 = vmatpush1.bf16.msra.mxu0 0
    %1066 = vmatprep.subr.bf16.mxu0 0
    %1067 = vmatpush1.bf16.msra.mxu0 0
    %1068 = vmatprep.subr.bf16.mxu0 0
    %1069 = vmatpush1.bf16.msra.mxu0 0
    %1070 = vmatprep.subr.bf16.mxu0 0
    %1071 = vmatpush1.bf16.msra.mxu0 0
    %1072 = vmatprep.subr.bf16.mxu0 0
    %1073 = vmatpush1.bf16.msra.mxu0 0
    %1074 = vmatprep.mubr.bf16.mxu0 %v954
    %1075 = vmatmul.mubr.bf16.gmra.mrb[0].mxu0 %v471
    %v1076 = vpop.f32.mrb[0].mxu0
    %v1077 = vadd.f32 0.0, %v1076
    %v1078 = vpop.f32.mrb[0].mxu0
    %v1079 = vadd.f32 0.0, %v1078
    %v1080 = vpop.f32.mrb[0].mxu0
    %v1081 = vadd.f32 0.0, %v1080
    %v1082 = vpop.f32.mrb[0].mxu0
    %v1083 = vadd.f32 0.0, %v1082
    %1084 = vdwg.mxu0
    %1085 = vmatprep.subr.bf16.mxu0 %v800
    %1086 = vmatpush1.bf16.msra.mxu0 %v799
    %1087 = vmatprep.subr.bf16.mxu0 %v808
    %1088 = vmatpush1.bf16.msra.mxu0 %v807
    %1089 = vmatprep.subr.bf16.mxu0 %v816
    %1090 = vmatpush1.bf16.msra.mxu0 %v815
    %1091 = vmatprep.subr.bf16.mxu0 %v824
    %1092 = vmatpush1.bf16.msra.mxu0 %v823
    %1093 = vmatprep.subr.bf16.mxu0 %v832
    %1094 = vmatpush1.bf16.msra.mxu0 %v831
    %1095 = vmatprep.subr.bf16.mxu0 %v840
    %1096 = vmatpush1.bf16.msra.mxu0 %v839
    %1097 = vmatprep.subr.bf16.mxu0 %v848
    %1098 = vmatpush1.bf16.msra.mxu0 %v847
    %1099 = vmatprep.subr.bf16.mxu0 %v856
    %1100 = vmatpush1.bf16.msra.mxu0 %v855
    %1101 = vmatprep.subr.bf16.mxu0 %v864
    %1102 = vmatpush1.bf16.msra.mxu0 %v863
    %1103 = vmatprep.subr.bf16.mxu0 %v872
    %1104 = vmatpush1.bf16.msra.mxu0 %v871
    %1105 = vmatprep.subr.bf16.mxu0 0
    %1106 = vmatpush1.bf16.msra.mxu0 0
    %1107 = vmatprep.subr.bf16.mxu0 0
    %1108 = vmatpush1.bf16.msra.mxu0 0
    %1109 = vmatprep.subr.bf16.mxu0 0
    %1110 = vmatpush1.bf16.msra.mxu0 0
    %1111 = vmatprep.subr.bf16.mxu0 0
    %1112 = vmatpush1.bf16.msra.mxu0 0
    %1113 = vmatprep.subr.bf16.mxu0 0
    %1114 = vmatpush1.bf16.msra.mxu0 0
    %1115 = vmatprep.subr.bf16.mxu0 0
    %1116 = vmatpush1.bf16.msra.mxu0 0
    %1117 = vmatprep.mubr.bf16.mxu0 %v954
    %1118 = vmatmul.mubr.bf16.gmra.mrb[0].mxu0 %v471
    %v1119 = vpop.f32.mrb[0].mxu0
    %v1120 = vadd.f32 0.0, %v1119
    %v1121 = vpop.f32.mrb[0].mxu0
    %v1122 = vadd.f32 0.0, %v1121
    %v1123 = vpop.f32.mrb[0].mxu0
    %v1124 = vadd.f32 0.0, %v1123
    %v1125 = vpop.f32.mrb[0].mxu0
    %v1126 = vadd.f32 0.0, %v1125
    %1127 = vdwg.mxu0
    %v1128 = vpack.c.bf16 %v995, %v991
    %v1129 = vpack.c.bf16 %v997, %v993
    %v1130 = vpack.c.bf16 %v1038, %v1034
    %v1131 = vpack.c.bf16 %v1040, %v1036
    %v1132 = vpack.c.bf16 %v1081, %v1077
    %v1133 = vpack.c.bf16 %v1083, %v1079
    %v1134 = vpack.c.bf16 %v1124, %v1120
    %v1135 = vpack.c.bf16 %v1126, %v1122
    %v1136 = vld [vmem:[%s10] sm:$0xff]
    %v1137 = vld [vmem:[%s10 + $0x8] sm:$0xff]
    %v1138 = vld [vmem:[%s10 + $0x10] sm:$0xff]
    %v1139 = vld [vmem:[%s10 + $0x18] sm:$0xff]
    %v1140 = vld [vmem:[%s10 + $0x20] sm:$0xff]
    %v1141 = vld [vmem:[%s10 + $0x28] sm:$0xff]
    %v1142 = vld [vmem:[%s10 + $0x30] sm:$0xff]
    %v1143 = vld [vmem:[%s10 + $0x38] sm:$0xff]
    %v1144 = vld [vmem:[%s10 + $0x40] sm:$0xff]
    %v1145 = vld [vmem:[%s10 + $0x48] sm:$0xff]
    %v1146 = vld [vmem:[%s10 + $0x50] sm:$0xff]
    %v1147 = vld [vmem:[%s10 + $0x58] sm:$0xff]
    %v1148 = vld [vmem:[%s10 + $0x60] sm:$0xff]
    %v1149 = vld [vmem:[%s10 + $0x68] sm:$0xff]
    %v1150 = vld [vmem:[%s10 + $0x70] sm:$0xff]
    %v1151 = vld [vmem:[%s10 + $0x78] sm:$0xff]
    %v1152 = vld [vmem:[%s10 + $0x80] sm:$0xff]
    %v1153 = vld [vmem:[%s10 + $0x88] sm:$0xff]
    %v1154 = vld [vmem:[%s10 + $0x90] sm:$0xff]
    %v1155 = vld [vmem:[%s10 + $0x98] sm:$0xff]
    %v1156 = vld [vmem:[%s10 + $0xa0] sm:$0xff]
    %v1157 = vld [vmem:[%s10 + $0xa8] sm:$0xff]
    %v1158 = vld [vmem:[%s10 + $0xb0] sm:$0xff]
    %v1159 = vld [vmem:[%s10 + $0xb8] sm:$0xff]
    %v1160 = vld [vmem:[%s10 + $0xc0] sm:$0xff]
    %v1161 = vld [vmem:[%s10 + $0xc8] sm:$0xff]
    %v1162 = vld [vmem:[%s10 + $0xd0] sm:$0xff]
    %v1163 = vld [vmem:[%s10 + $0xd8] sm:$0xff]
    %v1164 = vld [vmem:[%s10 + $0xe0] sm:$0xff]
    %v1165 = vld [vmem:[%s10 + $0xe8] sm:$0xff]
    %v1166 = vld [vmem:[%s10 + $0xf0] sm:$0xff]
    %v1167 = vld [vmem:[%s10 + $0xf8] sm:$0xff]
    %v1168 = vld [vmem:[%s10 + $0x100] sm:$0xff]
    %v1169 = vld [vmem:[%s10 + $0x108] sm:$0xff]
    %v1170 = vld [vmem:[%s10 + $0x110] sm:$0xff]
    %v1171 = vld [vmem:[%s10 + $0x118] sm:$0xff]
    %v1172 = vld [vmem:[%s10 + $0x120] sm:$0xff]
    %v1173 = vld [vmem:[%s10 + $0x128] sm:$0xff]
    %v1174 = vld [vmem:[%s10 + $0x130] sm:$0xff]
    %v1175 = vld [vmem:[%s10 + $0x138] sm:$0xff]
    %v1176 = vld [vmem:[%s10 + $0x140] sm:$0xff]
    %v1177 = vld [vmem:[%s10 + $0x148] sm:$0xff]
    %v1178 = vld [vmem:[%s10 + $0x150] sm:$0xff]
    %v1179 = vld [vmem:[%s10 + $0x158] sm:$0xff]
    %v1180 = vld [vmem:[%s10 + $0x160] sm:$0xff]
    %v1181 = vld [vmem:[%s10 + $0x168] sm:$0xff]
    %v1182 = vld [vmem:[%s10 + $0x170] sm:$0xff]
    %v1183 = vld [vmem:[%s10 + $0x178] sm:$0xff]
    %v1184 = vld [vmem:[%s10 + $0x180] sm:$0xff]
    %v1185 = vld [vmem:[%s10 + $0x188] sm:$0xff]
    %v1186 = vld [vmem:[%s10 + $0x190] sm:$0xff]
    %v1187 = vld [vmem:[%s10 + $0x198] sm:$0xff]
    %v1188 = vld [vmem:[%s10 + $0x1a0] sm:$0xff]
    %v1189 = vld [vmem:[%s10 + $0x1a8] sm:$0xff]
    %v1190 = vld [vmem:[%s10 + $0x1b0] sm:$0xff]
    %v1191 = vld [vmem:[%s10 + $0x1b8] sm:$0xff]
    %v1192 = vld [vmem:[%s10 + $0x1c0] sm:$0xff]
    %v1193 = vld [vmem:[%s10 + $0x1c8] sm:$0xff]
    %v1194 = vld [vmem:[%s10 + $0x1d0] sm:$0xff]
    %v1195 = vld [vmem:[%s10 + $0x1d8] sm:$0xff]
    %v1196 = vld [vmem:[%s10 + $0x1e0] sm:$0xff]
    %v1197 = vld [vmem:[%s10 + $0x1e8] sm:$0xff]
    %v1198 = vld [vmem:[%s10 + $0x1f0] sm:$0xff]
    %v1199 = vld [vmem:[%s10 + $0x1f8] sm:$0xff]
    %v1200 = vld [vmem:[%s10 + $0x200] sm:$0xff]
    %v1201 = vld [vmem:[%s10 + $0x208] sm:$0xff]
    %v1202 = vld [vmem:[%s10 + $0x210] sm:$0xff]
    %v1203 = vld [vmem:[%s10 + $0x218] sm:$0xff]
    %v1204 = vld [vmem:[%s10 + $0x220] sm:$0xff]
    %v1205 = vld [vmem:[%s10 + $0x228] sm:$0xff]
    %v1206 = vld [vmem:[%s10 + $0x230] sm:$0xff]
    %v1207 = vld [vmem:[%s10 + $0x238] sm:$0xff]
    %v1208 = vld [vmem:[%s10 + $0x240] sm:$0xff]
    %v1209 = vld [vmem:[%s10 + $0x248] sm:$0xff]
    %v1210 = vld [vmem:[%s10 + $0x250] sm:$0xff]
    %v1211 = vld [vmem:[%s10 + $0x258] sm:$0xff]
    %v1212 = vld [vmem:[%s10 + $0x260] sm:$0xff]
    %v1213 = vld [vmem:[%s10 + $0x268] sm:$0xff]
    %v1214 = vld [vmem:[%s10 + $0x270] sm:$0xff]
    %v1215 = vld [vmem:[%s10 + $0x278] sm:$0xff]
    %v1296 = vunpack.c.l.b16 %v1136
    %v1297 = vunpack.c.h.b16 %v1136
    %v1298 = vunpack.c.l.b16 %v1137
    %v1299 = vunpack.c.h.b16 %v1137
    %v1300 = vunpack.c.l.b16 %v1138
    %v1301 = vunpack.c.h.b16 %v1138
    %v1302 = vunpack.c.l.b16 %v1139
    %v1303 = vunpack.c.h.b16 %v1139
    %v1304 = vunpack.c.l.b16 %v1140
    %v1305 = vunpack.c.h.b16 %v1140
    %v1306 = vunpack.c.l.b16 %v1141
    %v1307 = vunpack.c.h.b16 %v1141
    %v1308 = vunpack.c.l.b16 %v1142
    %v1309 = vunpack.c.h.b16 %v1142
    %v1310 = vunpack.c.l.b16 %v1143
    %v1311 = vunpack.c.h.b16 %v1143
    %v1312 = vunpack.c.l.b16 %v1144
    %v1313 = vunpack.c.h.b16 %v1144
    %v1314 = vunpack.c.l.b16 %v1145
    %v1315 = vunpack.c.h.b16 %v1145
    %v1316 = vunpack.c.l.b16 %v1146
    %v1317 = vunpack.c.h.b16 %v1146
    %v1318 = vunpack.c.l.b16 %v1147
    %v1319 = vunpack.c.h.b16 %v1147
    %v1320 = vunpack.c.l.b16 %v1148
    %v1321 = vunpack.c.h.b16 %v1148
    %v1322 = vunpack.c.l.b16 %v1149
    %v1323 = vunpack.c.h.b16 %v1149
    %v1324 = vunpack.c.l.b16 %v1150
    %v1325 = vunpack.c.h.b16 %v1150
    %v1326 = vunpack.c.l.b16 %v1151
    %v1327 = vunpack.c.h.b16 %v1151
    %v1328 = vunpack.c.l.b16 %v1152
    %v1329 = vunpack.c.h.b16 %v1152
    %v1330 = vunpack.c.l.b16 %v1153
    %v1331 = vunpack.c.h.b16 %v1153
    %v1332 = vunpack.c.l.b16 %v1154
    %v1333 = vunpack.c.h.b16 %v1154
    %v1334 = vunpack.c.l.b16 %v1155
    %v1335 = vunpack.c.h.b16 %v1155
    %v1336 = vunpack.c.l.b16 %v1156
    %v1337 = vunpack.c.h.b16 %v1156
    %v1338 = vunpack.c.l.b16 %v1157
    %v1339 = vunpack.c.h.b16 %v1157
    %v1340 = vunpack.c.l.b16 %v1158
    %v1341 = vunpack.c.h.b16 %v1158
    %v1342 = vunpack.c.l.b16 %v1159
    %v1343 = vunpack.c.h.b16 %v1159
    %v1344 = vunpack.c.l.b16 %v1160
    %v1345 = vunpack.c.h.b16 %v1160
    %v1346 = vunpack.c.l.b16 %v1161
    %v1347 = vunpack.c.h.b16 %v1161
    %v1348 = vunpack.c.l.b16 %v1162
    %v1349 = vunpack.c.h.b16 %v1162
    %v1350 = vunpack.c.l.b16 %v1163
    %v1351 = vunpack.c.h.b16 %v1163
    %v1352 = vunpack.c.l.b16 %v1164
    %v1353 = vunpack.c.h.b16 %v1164
    %v1354 = vunpack.c.l.b16 %v1165
    %v1355 = vunpack.c.h.b16 %v1165
    %v1356 = vunpack.c.l.b16 %v1166
    %v1357 = vunpack.c.h.b16 %v1166
    %v1358 = vunpack.c.l.b16 %v1167
    %v1359 = vunpack.c.h.b16 %v1167
    %v1360 = vunpack.c.l.b16 %v1168
    %v1361 = vunpack.c.h.b16 %v1168
    %v1362 = vunpack.c.l.b16 %v1169
    %v1363 = vunpack.c.h.b16 %v1169
    %v1364 = vunpack.c.l.b16 %v1170
    %v1365 = vunpack.c.h.b16 %v1170
    %v1366 = vunpack.c.l.b16 %v1171
    %v1367 = vunpack.c.h.b16 %v1171
    %v1368 = vunpack.c.l.b16 %v1172
    %v1369 = vunpack.c.h.b16 %v1172
    %v1370 = vunpack.c.l.b16 %v1173
    %v1371 = vunpack.c.h.b16 %v1173
    %v1372 = vunpack.c.l.b16 %v1174
    %v1373 = vunpack.c.h.b16 %v1174
    %v1374 = vunpack.c.l.b16 %v1175
    %v1375 = vunpack.c.h.b16 %v1175
    %v1376 = vunpack.c.l.b16 %v1176
    %v1377 = vunpack.c.h.b16 %v1176
    %v1378 = vunpack.c.l.b16 %v1177
    %v1379 = vunpack.c.h.b16 %v1177
    %v1380 = vunpack.c.l.b16 %v1178
    %v1381 = vunpack.c.h.b16 %v1178
    %v1382 = vunpack.c.l.b16 %v1179
    %v1383 = vunpack.c.h.b16 %v1179
    %v1384 = vunpack.c.l.b16 %v1180
    %v1385 = vunpack.c.h.b16 %v1180
    %v1386 = vunpack.c.l.b16 %v1181
    %v1387 = vunpack.c.h.b16 %v1181
    %v1388 = vunpack.c.l.b16 %v1182
    %v1389 = vunpack.c.h.b16 %v1182
    %v1390 = vunpack.c.l.b16 %v1183
    %v1391 = vunpack.c.h.b16 %v1183
    %v1392 = vunpack.c.l.b16 %v1184
    %v1393 = vunpack.c.h.b16 %v1184
    %v1394 = vunpack.c.l.b16 %v1185
    %v1395 = vunpack.c.h.b16 %v1185
    %v1396 = vunpack.c.l.b16 %v1186
    %v1397 = vunpack.c.h.b16 %v1186
    %v1398 = vunpack.c.l.b16 %v1187
    %v1399 = vunpack.c.h.b16 %v1187
    %v1400 = vunpack.c.l.b16 %v1188
    %v1401 = vunpack.c.h.b16 %v1188
    %v1402 = vunpack.c.l.b16 %v1189
    %v1403 = vunpack.c.h.b16 %v1189
    %v1404 = vunpack.c.l.b16 %v1190
    %v1405 = vunpack.c.h.b16 %v1190
    %v1406 = vunpack.c.l.b16 %v1191
    %v1407 = vunpack.c.h.b16 %v1191
    %v1408 = vunpack.c.l.b16 %v1192
    %v1409 = vunpack.c.h.b16 %v1192
    %v1410 = vunpack.c.l.b16 %v1193
    %v1411 = vunpack.c.h.b16 %v1193
    %v1412 = vunpack.c.l.b16 %v1194
    %v1413 = vunpack.c.h.b16 %v1194
    %v1414 = vunpack.c.l.b16 %v1195
    %v1415 = vunpack.c.h.b16 %v1195
    %v1416 = vunpack.c.l.b16 %v1196
    %v1417 = vunpack.c.h.b16 %v1196
    %v1418 = vunpack.c.l.b16 %v1197
    %v1419 = vunpack.c.h.b16 %v1197
    %v1420 = vunpack.c.l.b16 %v1198
    %v1421 = vunpack.c.h.b16 %v1198
    %v1422 = vunpack.c.l.b16 %v1199
    %v1423 = vunpack.c.h.b16 %v1199
    %v1424 = vunpack.c.l.b16 %v1200
    %v1425 = vunpack.c.h.b16 %v1200
    %v1426 = vunpack.c.l.b16 %v1201
    %v1427 = vunpack.c.h.b16 %v1201
    %v1428 = vunpack.c.l.b16 %v1202
    %v1429 = vunpack.c.h.b16 %v1202
    %v1430 = vunpack.c.l.b16 %v1203
    %v1431 = vunpack.c.h.b16 %v1203
    %v1432 = vunpack.c.l.b16 %v1204
    %v1433 = vunpack.c.h.b16 %v1204
    %v1434 = vunpack.c.l.b16 %v1205
    %v1435 = vunpack.c.h.b16 %v1205
    %v1436 = vunpack.c.l.b16 %v1206
    %v1437 = vunpack.c.h.b16 %v1206
    %v1438 = vunpack.c.l.b16 %v1207
    %v1439 = vunpack.c.h.b16 %v1207
    %v1440 = vunpack.c.l.b16 %v1208
    %v1441 = vunpack.c.h.b16 %v1208
    %v1442 = vunpack.c.l.b16 %v1209
    %v1443 = vunpack.c.h.b16 %v1209
    %v1444 = vunpack.c.l.b16 %v1210
    %v1445 = vunpack.c.h.b16 %v1210
    %v1446 = vunpack.c.l.b16 %v1211
    %v1447 = vunpack.c.h.b16 %v1211
    %v1448 = vunpack.c.l.b16 %v1212
    %v1449 = vunpack.c.h.b16 %v1212
    %v1450 = vunpack.c.l.b16 %v1213
    %v1451 = vunpack.c.h.b16 %v1213
    %v1452 = vunpack.c.l.b16 %v1214
    %v1453 = vunpack.c.h.b16 %v1214
    %v1454 = vunpack.c.l.b16 %v1215
    %v1455 = vunpack.c.h.b16 %v1215
    %v1456 = vpack.c.b16 %v1304, %v1296
    %v1457 = vpack.c.b16 %v1305, %v1297
    %v1458 = vpack.c.b16 %v1306, %v1298
    %v1459 = vpack.c.b16 %v1307, %v1299
    %v1460 = vpack.c.b16 %v1308, %v1300
    %v1461 = vpack.c.b16 %v1309, %v1301
    %v1462 = vpack.c.b16 %v1310, %v1302
    %v1463 = vpack.c.b16 %v1311, %v1303
    %v1464 = vpack.c.b16 %v1320, %v1312
    %v1465 = vpack.c.b16 %v1321, %v1313
    %v1466 = vpack.c.b16 %v1322, %v1314
    %v1467 = vpack.c.b16 %v1323, %v1315
    %v1468 = vpack.c.b16 %v1324, %v1316
    %v1469 = vpack.c.b16 %v1325, %v1317
    %v1470 = vpack.c.b16 %v1326, %v1318
    %v1471 = vpack.c.b16 %v1327, %v1319
    %v1472 = vpack.c.b16 %v1336, %v1328
    %v1473 = vpack.c.b16 %v1337, %v1329
    %v1474 = vpack.c.b16 %v1338, %v1330
    %v1475 = vpack.c.b16 %v1339, %v1331
    %v1476 = vpack.c.b16 %v1340, %v1332
    %v1477 = vpack.c.b16 %v1341, %v1333
    %v1478 = vpack.c.b16 %v1342, %v1334
    %v1479 = vpack.c.b16 %v1343, %v1335
    %v1480 = vpack.c.b16 %v1352, %v1344
    %v1481 = vpack.c.b16 %v1353, %v1345
    %v1482 = vpack.c.b16 %v1354, %v1346
    %v1483 = vpack.c.b16 %v1355, %v1347
    %v1484 = vpack.c.b16 %v1356, %v1348
    %v1485 = vpack.c.b16 %v1357, %v1349
    %v1486 = vpack.c.b16 %v1358, %v1350
    %v1487 = vpack.c.b16 %v1359, %v1351
    %v1488 = vpack.c.b16 %v1368, %v1360
    %v1489 = vpack.c.b16 %v1369, %v1361
    %v1490 = vpack.c.b16 %v1370, %v1362
    %v1491 = vpack.c.b16 %v1371, %v1363
    %v1492 = vpack.c.b16 %v1372, %v1364
    %v1493 = vpack.c.b16 %v1373, %v1365
    %v1494 = vpack.c.b16 %v1374, %v1366
    %v1495 = vpack.c.b16 %v1375, %v1367
    %v1496 = vpack.c.b16 %v1384, %v1376
    %v1497 = vpack.c.b16 %v1385, %v1377
    %v1498 = vpack.c.b16 %v1386, %v1378
    %v1499 = vpack.c.b16 %v1387, %v1379
    %v1500 = vpack.c.b16 %v1388, %v1380
    %v1501 = vpack.c.b16 %v1389, %v1381
    %v1502 = vpack.c.b16 %v1390, %v1382
    %v1503 = vpack.c.b16 %v1391, %v1383
    %v1504 = vpack.c.b16 %v1400, %v1392
    %v1505 = vpack.c.b16 %v1401, %v1393
    %v1506 = vpack.c.b16 %v1402, %v1394
    %v1507 = vpack.c.b16 %v1403, %v1395
    %v1508 = vpack.c.b16 %v1404, %v1396
    %v1509 = vpack.c.b16 %v1405, %v1397
    %v1510 = vpack.c.b16 %v1406, %v1398
    %v1511 = vpack.c.b16 %v1407, %v1399
    %v1512 = vpack.c.b16 %v1416, %v1408
    %v1513 = vpack.c.b16 %v1417, %v1409
    %v1514 = vpack.c.b16 %v1418, %v1410
    %v1515 = vpack.c.b16 %v1419, %v1411
    %v1516 = vpack.c.b16 %v1420, %v1412
    %v1517 = vpack.c.b16 %v1421, %v1413
    %v1518 = vpack.c.b16 %v1422, %v1414
    %v1519 = vpack.c.b16 %v1423, %v1415
    %v1520 = vpack.c.b16 %v1432, %v1424
    %v1521 = vpack.c.b16 %v1433, %v1425
    %v1522 = vpack.c.b16 %v1434, %v1426
    %v1523 = vpack.c.b16 %v1435, %v1427
    %v1524 = vpack.c.b16 %v1436, %v1428
    %v1525 = vpack.c.b16 %v1437, %v1429
    %v1526 = vpack.c.b16 %v1438, %v1430
    %v1527 = vpack.c.b16 %v1439, %v1431
    %v1528 = vpack.c.b16 %v1448, %v1440
    %v1529 = vpack.c.b16 %v1449, %v1441
    %v1530 = vpack.c.b16 %v1450, %v1442
    %v1531 = vpack.c.b16 %v1451, %v1443
    %v1532 = vpack.c.b16 %v1452, %v1444
    %v1533 = vpack.c.b16 %v1453, %v1445
    %v1534 = vpack.c.b16 %v1454, %v1446
    %v1535 = vpack.c.b16 %v1455, %v1447
    %1616 = vmatprep.subr.bf16.mxu0 %v1457
    %1617 = vmatpush1.bf16.msra.mxu0 %v1456
    %1618 = vmatprep.subr.bf16.mxu0 %v1465
    %1619 = vmatpush1.bf16.msra.mxu0 %v1464
    %1620 = vmatprep.subr.bf16.mxu0 %v1473
    %1621 = vmatpush1.bf16.msra.mxu0 %v1472
    %1622 = vmatprep.subr.bf16.mxu0 %v1481
    %1623 = vmatpush1.bf16.msra.mxu0 %v1480
    %1624 = vmatprep.subr.bf16.mxu0 %v1489
    %1625 = vmatpush1.bf16.msra.mxu0 %v1488
    %1626 = vmatprep.subr.bf16.mxu0 %v1497
    %1627 = vmatpush1.bf16.msra.mxu0 %v1496
    %1628 = vmatprep.subr.bf16.mxu0 %v1505
    %1629 = vmatpush1.bf16.msra.mxu0 %v1504
    %1630 = vmatprep.subr.bf16.mxu0 %v1513
    %1631 = vmatpush1.bf16.msra.mxu0 %v1512
    %1632 = vmatprep.subr.bf16.mxu0 %v1521
    %1633 = vmatpush1.bf16.msra.mxu0 %v1520
    %1634 = vmatprep.subr.bf16.mxu0 %v1529
    %1635 = vmatpush1.bf16.msra.mxu0 %v1528
    %1636 = vmatprep.subr.bf16.mxu0 0
    %1637 = vmatpush1.bf16.msra.mxu0 0
    %1638 = vmatprep.subr.bf16.mxu0 0
    %1639 = vmatpush1.bf16.msra.mxu0 0
    %1640 = vmatprep.subr.bf16.mxu0 0
    %1641 = vmatpush1.bf16.msra.mxu0 0
    %1642 = vmatprep.subr.bf16.mxu0 0
    %1643 = vmatpush1.bf16.msra.mxu0 0
    %1644 = vmatprep.subr.bf16.mxu0 0
    %1645 = vmatpush1.bf16.msra.mxu0 0
    %1646 = vmatprep.subr.bf16.mxu0 0
    %1647 = vmatpush1.bf16.msra.mxu0 0
    %1648 = vmatprep.mubr.bf16.mxu0 %v954
    %1649 = vmatmul.mubr.bf16.gmra.mrb[0].mxu0 %v471
    %v1650 = vpop.f32.mrb[0].mxu0
    %v1651 = vadd.f32 0.0, %v1650
    %v1652 = vpop.f32.mrb[0].mxu0
    %v1653 = vadd.f32 0.0, %v1652
    %v1654 = vpop.f32.mrb[0].mxu0
    %v1655 = vadd.f32 0.0, %v1654
    %v1656 = vpop.f32.mrb[0].mxu0
    %v1657 = vadd.f32 0.0, %v1656
    %1658 = vdwg.mxu0
    %1659 = vmatprep.subr.bf16.mxu0 %v1459
    %1660 = vmatpush1.bf16.msra.mxu0 %v1458
    %1661 = vmatprep.subr.bf16.mxu0 %v1467
    %1662 = vmatpush1.bf16.msra.mxu0 %v1466
    %1663 = vmatprep.subr.bf16.mxu0 %v1475
    %1664 = vmatpush1.bf16.msra.mxu0 %v1474
    %1665 = vmatprep.subr.bf16.mxu0 %v1483
    %1666 = vmatpush1.bf16.msra.mxu0 %v1482
    %1667 = vmatprep.subr.bf16.mxu0 %v1491
    %1668 = vmatpush1.bf16.msra.mxu0 %v1490
    %1669 = vmatprep.subr.bf16.mxu0 %v1499
    %1670 = vmatpush1.bf16.msra.mxu0 %v1498
    %1671 = vmatprep.subr.bf16.mxu0 %v1507
    %1672 = vmatpush1.bf16.msra.mxu0 %v1506
    %1673 = vmatprep.subr.bf16.mxu0 %v1515
    %1674 = vmatpush1.bf16.msra.mxu0 %v1514
    %1675 = vmatprep.subr.bf16.mxu0 %v1523
    %1676 = vmatpush1.bf16.msra.mxu0 %v1522
    %1677 = vmatprep.subr.bf16.mxu0 %v1531
    %1678 = vmatpush1.bf16.msra.mxu0 %v1530
    %1679 = vmatprep.subr.bf16.mxu0 0
    %1680 = vmatpush1.bf16.msra.mxu0 0
    %1681 = vmatprep.subr.bf16.mxu0 0
    %1682 = vmatpush1.bf16.msra.mxu0 0
    %1683 = vmatprep.subr.bf16.mxu0 0
    %1684 = vmatpush1.bf16.msra.mxu0 0
    %1685 = vmatprep.subr.bf16.mxu0 0
    %1686 = vmatpush1.bf16.msra.mxu0 0
    %1687 = vmatprep.subr.bf16.mxu0 0
    %1688 = vmatpush1.bf16.msra.mxu0 0
    %1689 = vmatprep.subr.bf16.mxu0 0
    %1690 = vmatpush1.bf16.msra.mxu0 0
    %1691 = vmatprep.mubr.bf16.mxu0 %v954
    %1692 = vmatmul.mubr.bf16.gmra.mrb[0].mxu0 %v471
    %v1693 = vpop.f32.mrb[0].mxu0
    %v1694 = vadd.f32 0.0, %v1693
    %v1695 = vpop.f32.mrb[0].mxu0
    %v1696 = vadd.f32 0.0, %v1695
    %v1697 = vpop.f32.mrb[0].mxu0
    %v1698 = vadd.f32 0.0, %v1697
    %v1699 = vpop.f32.mrb[0].mxu0
    %v1700 = vadd.f32 0.0, %v1699
    %1701 = vdwg.mxu0
    %1702 = vmatprep.subr.bf16.mxu0 %v1461
    %1703 = vmatpush1.bf16.msra.mxu0 %v1460
    %1704 = vmatprep.subr.bf16.mxu0 %v1469
    %1705 = vmatpush1.bf16.msra.mxu0 %v1468
    %1706 = vmatprep.subr.bf16.mxu0 %v1477
    %1707 = vmatpush1.bf16.msra.mxu0 %v1476
    %1708 = vmatprep.subr.bf16.mxu0 %v1485
    %1709 = vmatpush1.bf16.msra.mxu0 %v1484
    %1710 = vmatprep.subr.bf16.mxu0 %v1493
    %1711 = vmatpush1.bf16.msra.mxu0 %v1492
    %1712 = vmatprep.subr.bf16.mxu0 %v1501
    %1713 = vmatpush1.bf16.msra.mxu0 %v1500
    %1714 = vmatprep.subr.bf16.mxu0 %v1509
    %1715 = vmatpush1.bf16.msra.mxu0 %v1508
    %1716 = vmatprep.subr.bf16.mxu0 %v1517
    %1717 = vmatpush1.bf16.msra.mxu0 %v1516
    %1718 = vmatprep.subr.bf16.mxu0 %v1525
    %1719 = vmatpush1.bf16.msra.mxu0 %v1524
    %1720 = vmatprep.subr.bf16.mxu0 %v1533
    %1721 = vmatpush1.bf16.msra.mxu0 %v1532
    %1722 = vmatprep.subr.bf16.mxu0 0
    %1723 = vmatpush1.bf16.msra.mxu0 0
    %1724 = vmatprep.subr.bf16.mxu0 0
    %1725 = vmatpush1.bf16.msra.mxu0 0
    %1726 = vmatprep.subr.bf16.mxu0 0
    %1727 = vmatpush1.bf16.msra.mxu0 0
    %1728 = vmatprep.subr.bf16.mxu0 0
    %1729 = vmatpush1.bf16.msra.mxu0 0
    %1730 = vmatprep.subr.bf16.mxu0 0
    %1731 = vmatpush1.bf16.msra.mxu0 0
    %1732 = vmatprep.subr.bf16.mxu0 0
    %1733 = vmatpush1.bf16.msra.mxu0 0
    %1734 = vmatprep.mubr.bf16.mxu0 %v954
    %1735 = vmatmul.mubr.bf16.gmra.mrb[0].mxu0 %v471
    %v1736 = vpop.f32.mrb[0].mxu0
    %v1737 = vadd.f32 0.0, %v1736
    %v1738 = vpop.f32.mrb[0].mxu0
    %v1739 = vadd.f32 0.0, %v1738
    %v1740 = vpop.f32.mrb[0].mxu0
    %v1741 = vadd.f32 0.0, %v1740
    %v1742 = vpop.f32.mrb[0].mxu0
    %v1743 = vadd.f32 0.0, %v1742
    %1744 = vdwg.mxu0
    %1745 = vmatprep.subr.bf16.mxu0 %v1463
    %1746 = vmatpush1.bf16.msra.mxu0 %v1462
    %1747 = vmatprep.subr.bf16.mxu0 %v1471
    %1748 = vmatpush1.bf16.msra.mxu0 %v1470
    %1749 = vmatprep.subr.bf16.mxu0 %v1479
    %1750 = vmatpush1.bf16.msra.mxu0 %v1478
    %1751 = vmatprep.subr.bf16.mxu0 %v1487
    %1752 = vmatpush1.bf16.msra.mxu0 %v1486
    %1753 = vmatprep.subr.bf16.mxu0 %v1495
    %1754 = vmatpush1.bf16.msra.mxu0 %v1494
    %1755 = vmatprep.subr.bf16.mxu0 %v1503
    %1756 = vmatpush1.bf16.msra.mxu0 %v1502
    %1757 = vmatprep.subr.bf16.mxu0 %v1511
    %1758 = vmatpush1.bf16.msra.mxu0 %v1510
    %1759 = vmatprep.subr.bf16.mxu0 %v1519
    %1760 = vmatpush1.bf16.msra.mxu0 %v1518
    %1761 = vmatprep.subr.bf16.mxu0 %v1527
    %1762 = vmatpush1.bf16.msra.mxu0 %v1526
    %1763 = vmatprep.subr.bf16.mxu0 %v1535
    %1764 = vmatpush1.bf16.msra.mxu0 %v1534
    %1765 = vmatprep.subr.bf16.mxu0 0
    %1766 = vmatpush1.bf16.msra.mxu0 0
    %1767 = vmatprep.subr.bf16.mxu0 0
    %1768 = vmatpush1.bf16.msra.mxu0 0
    %1769 = vmatprep.subr.bf16.mxu0 0
    %1770 = vmatpush1.bf16.msra.mxu0 0
    %1771 = vmatprep.subr.bf16.mxu0 0
    %1772 = vmatpush1.bf16.msra.mxu0 0
    %1773 = vmatprep.subr.bf16.mxu0 0
    %1774 = vmatpush1.bf16.msra.mxu0 0
    %1775 = vmatprep.subr.bf16.mxu0 0
    %1776 = vmatpush1.bf16.msra.mxu0 0
    %1777 = vmatprep.mubr.bf16.mxu0 %v954
    %1778 = vmatmul.mubr.bf16.gmra.mrb[0].mxu0 %v471
    %v1779 = vpop.f32.mrb[0].mxu0
    %v1780 = vadd.f32 0.0, %v1779
    %v1781 = vpop.f32.mrb[0].mxu0
    %v1782 = vadd.f32 0.0, %v1781
    %v1783 = vpop.f32.mrb[0].mxu0
    %v1784 = vadd.f32 0.0, %v1783
    %v1785 = vpop.f32.mrb[0].mxu0
    %v1786 = vadd.f32 0.0, %v1785
    %1787 = vdwg.mxu0
    %v1788 = vpack.c.bf16 %v1655, %v1651
    %v1789 = vpack.c.bf16 %v1657, %v1653
    %v1790 = vpack.c.bf16 %v1698, %v1694
    %v1791 = vpack.c.bf16 %v1700, %v1696
    %v1792 = vpack.c.bf16 %v1741, %v1737
    %v1793 = vpack.c.bf16 %v1743, %v1739
    %v1794 = vpack.c.bf16 %v1784, %v1780
    %v1795 = vpack.c.bf16 %v1786, %v1782
    %v1796 = vld [vmem:[%s11] sm:$0xf]
    %v1797 = vld [vmem:[%s11 + $0x4] sm:$0xf]
    %v1798 = vld [vmem:[%s11 + $0x8] sm:$0xf]
    %v1799 = vld [vmem:[%s11 + $0xc] sm:$0xf]
    %v1800 = vld [vmem:[%s11 + $0x10] sm:$0xf]
    %v1801 = vld [vmem:[%s11 + $0x14] sm:$0xf]
    %v1802 = vld [vmem:[%s11 + $0x18] sm:$0xf]
    %v1803 = vld [vmem:[%s11 + $0x1c] sm:$0xf]
    %v1804 = vld [vmem:[%s11 + $0x20] sm:$0xf]
    %v1805 = vld [vmem:[%s11 + $0x24] sm:$0xf]
    %v1806 = vld [vmem:[%s11 + $0x28] sm:$0xf]
    %v1807 = vld [vmem:[%s11 + $0x2c] sm:$0xf]
    %v1808 = vld [vmem:[%s11 + $0x30] sm:$0xf]
    %v1809 = vld [vmem:[%s11 + $0x34] sm:$0xf]
    %v1810 = vld [vmem:[%s11 + $0x38] sm:$0xf]
    %v1811 = vld [vmem:[%s11 + $0x3c] sm:$0xf]
    %v1812 = vld [vmem:[%s11 + $0x40] sm:$0xf]
    %v1813 = vld [vmem:[%s11 + $0x44] sm:$0xf]
    %v1814 = vld [vmem:[%s11 + $0x48] sm:$0xf]
    %v1815 = vld [vmem:[%s11 + $0x4c] sm:$0xf]
    %v1836 = vunpack.c.l.b16 %v1796
    %v1837 = vunpack.c.l.b16 %v1797
    %v1838 = vunpack.c.l.b16 %v1798
    %v1839 = vunpack.c.l.b16 %v1799
    %v1840 = vunpack.c.l.b16 %v1800
    %v1841 = vunpack.c.l.b16 %v1801
    %v1842 = vunpack.c.l.b16 %v1802
    %v1843 = vunpack.c.l.b16 %v1803
    %v1844 = vunpack.c.l.b16 %v1804
    %v1845 = vunpack.c.l.b16 %v1805
    %v1846 = vunpack.c.l.b16 %v1806
    %v1847 = vunpack.c.l.b16 %v1807
    %v1848 = vunpack.c.l.b16 %v1808
    %v1849 = vunpack.c.l.b16 %v1809
    %v1850 = vunpack.c.l.b16 %v1810
    %v1851 = vunpack.c.l.b16 %v1811
    %v1852 = vunpack.c.l.b16 %v1812
    %v1853 = vunpack.c.l.b16 %v1813
    %v1854 = vunpack.c.l.b16 %v1814
    %v1855 = vunpack.c.l.b16 %v1815
    %v1856 = vpack.c.b16 %v1837, %v1836
    %v1857 = vpack.c.b16 %v1839, %v1838
    %v1858 = vpack.c.b16 %v1841, %v1840
    %v1859 = vpack.c.b16 %v1843, %v1842
    %v1860 = vpack.c.b16 %v1845, %v1844
    %v1861 = vpack.c.b16 %v1847, %v1846
    %v1862 = vpack.c.b16 %v1849, %v1848
    %v1863 = vpack.c.b16 %v1851, %v1850
    %v1864 = vpack.c.b16 %v1853, %v1852
    %v1865 = vpack.c.b16 %v1855, %v1854
    %1876 = vmatprep.subr.bf16.mxu0 0
    %1877 = vmatpush1.bf16.msra.mxu0 %v1856
    %1878 = vmatprep.subr.bf16.mxu0 0
    %1879 = vmatpush1.bf16.msra.mxu0 %v1857
    %1880 = vmatprep.subr.bf16.mxu0 0
    %1881 = vmatpush1.bf16.msra.mxu0 %v1858
    %1882 = vmatprep.subr.bf16.mxu0 0
    %1883 = vmatpush1.bf16.msra.mxu0 %v1859
    %1884 = vmatprep.subr.bf16.mxu0 0
    %1885 = vmatpush1.bf16.msra.mxu0 %v1860
    %1886 = vmatprep.subr.bf16.mxu0 0
    %1887 = vmatpush1.bf16.msra.mxu0 %v1861
    %1888 = vmatprep.subr.bf16.mxu0 0
    %1889 = vmatpush1.bf16.msra.mxu0 %v1862
    %1890 = vmatprep.subr.bf16.mxu0 0
    %1891 = vmatpush1.bf16.msra.mxu0 %v1863
    %1892 = vmatprep.subr.bf16.mxu0 0
    %1893 = vmatpush1.bf16.msra.mxu0 %v1864
    %1894 = vmatprep.subr.bf16.mxu0 0
    %1895 = vmatpush1.bf16.msra.mxu0 %v1865
    %1896 = vmatprep.subr.bf16.mxu0 0
    %1897 = vmatpush1.bf16.msra.mxu0 0
    %1898 = vmatprep.subr.bf16.mxu0 0
    %1899 = vmatpush1.bf16.msra.mxu0 0
    %1900 = vmatprep.subr.bf16.mxu0 0
    %1901 = vmatpush1.bf16.msra.mxu0 0
    %1902 = vmatprep.subr.bf16.mxu0 0
    %1903 = vmatpush1.bf16.msra.mxu0 0
    %1904 = vmatprep.subr.bf16.mxu0 0
    %1905 = vmatpush1.bf16.msra.mxu0 0
    %1906 = vmatprep.subr.bf16.mxu0 0
    %1907 = vmatpush1.bf16.msra.mxu0 0
    %1908 = vmatprep.mubr.bf16.mxu0 %v954
    %1909 = vmatmul.mubr.bf16.gmra.mrb[0].mxu0 %v471
    %v1910 = vpop.f32.mrb[0].mxu0
    %v1911 = vadd.f32 0.0, %v1910
    %v1912 = vpop.f32.mrb[0].mxu0
    %v1913 = vpop.f32.mrb[0].mxu0
    %v1914 = vadd.f32 0.0, %v1913
    %v1915 = vpop.f32.mrb[0].mxu0
    %1916 = vdwg.mxu0
    %v1917 = vmul.bf16 %v1128, %v1788
    %v1918 = vmul.bf16 %v1129, %v1789
    %v1919 = vmul.bf16 %v1130, %v1790
    %v1920 = vmul.bf16 %v1131, %v1791
    %v1921 = vmul.bf16 %v1132, %v1792
    %v1922 = vmul.bf16 %v1133, %v1793
    %v1923 = vmul.bf16 %v1134, %v1794
    %v1924 = vmul.bf16 %v1135, %v1795
    %v1925 = vmul.bf16 %v1128, %v1128
    %v1926 = vmul.bf16 %v1129, %v1129
    %v1927 = vmul.bf16 %v1130, %v1130
    %v1928 = vmul.bf16 %v1131, %v1131
    %v1929 = vmul.bf16 %v1132, %v1132
    %v1930 = vmul.bf16 %v1133, %v1133
    %v1931 = vmul.bf16 %v1134, %v1134
    %v1932 = vmul.bf16 %v1135, %v1135
    %v1933 = vmul.bf16 %v1788, %v1788
    %v1934 = vmul.bf16 %v1789, %v1789
    %v1935 = vmul.bf16 %v1790, %v1790
    %v1936 = vmul.bf16 %v1791, %v1791
    %v1937 = vmul.bf16 %v1792, %v1792
    %v1938 = vmul.bf16 %v1793, %v1793
    %v1939 = vmul.bf16 %v1794, %v1794
    %v1940 = vmul.bf16 %v1795, %v1795
    %v1941 = vld [vmem:[%s12] sm:$0xf]
    %v1942 = vld [vmem:[%s12 + $0x4] sm:$0xf]
    %v1943 = vld [vmem:[%s12 + $0x8] sm:$0xf]
    %v1944 = vld [vmem:[%s12 + $0xc] sm:$0xf]
    %v1945 = vld [vmem:[%s12 + $0x10] sm:$0xf]
    %v1946 = vld [vmem:[%s12 + $0x14] sm:$0xf]
    %v1947 = vld [vmem:[%s12 + $0x18] sm:$0xf]
    %v1948 = vld [vmem:[%s12 + $0x1c] sm:$0xf]
    %v1949 = vld [vmem:[%s12 + $0x20] sm:$0xf]
    %v1950 = vld [vmem:[%s12 + $0x24] sm:$0xf]
    %v1951 = vld [vmem:[%s12 + $0x28] sm:$0xf]
    %v1952 = vld [vmem:[%s12 + $0x2c] sm:$0xf]
    %v1953 = vld [vmem:[%s12 + $0x30] sm:$0xf]
    %v1954 = vld [vmem:[%s12 + $0x34] sm:$0xf]
    %v1955 = vld [vmem:[%s12 + $0x38] sm:$0xf]
    %v1956 = vld [vmem:[%s12 + $0x3c] sm:$0xf]
    %v1957 = vld [vmem:[%s12 + $0x40] sm:$0xf]
    %v1958 = vld [vmem:[%s12 + $0x44] sm:$0xf]
    %v1959 = vld [vmem:[%s12 + $0x48] sm:$0xf]
    %v1960 = vld [vmem:[%s12 + $0x4c] sm:$0xf]
    %v1961 = vld [vmem:[%s12 + $0x50] sm:$0xf]
    %v1962 = vld [vmem:[%s12 + $0x54] sm:$0xf]
    %v1963 = vld [vmem:[%s12 + $0x58] sm:$0xf]
    %v1964 = vld [vmem:[%s12 + $0x5c] sm:$0xf]
    %v1965 = vld [vmem:[%s12 + $0x60] sm:$0xf]
    %v1966 = vld [vmem:[%s12 + $0x64] sm:$0xf]
    %v1967 = vld [vmem:[%s12 + $0x68] sm:$0xf]
    %v1968 = vld [vmem:[%s12 + $0x6c] sm:$0xf]
    %v1969 = vld [vmem:[%s12 + $0x70] sm:$0xf]
    %v1970 = vld [vmem:[%s12 + $0x74] sm:$0xf]
    %v1971 = vld [vmem:[%s12 + $0x78] sm:$0xf]
    %v1972 = vld [vmem:[%s12 + $0x7c] sm:$0xf]
    %v1973 = vld [vmem:[%s12 + $0x80] sm:$0xf]
    %v1974 = vld [vmem:[%s12 + $0x84] sm:$0xf]
    %v1975 = vld [vmem:[%s12 + $0x88] sm:$0xf]
    %v1976 = vld [vmem:[%s12 + $0x8c] sm:$0xf]
    %v1977 = vld [vmem:[%s12 + $0x90] sm:$0xf]
    %v1978 = vld [vmem:[%s12 + $0x94] sm:$0xf]
    %v1979 = vld [vmem:[%s12 + $0x98] sm:$0xf]
    %v1980 = vld [vmem:[%s12 + $0x9c] sm:$0xf]
    %v1981 = vld [vmem:[%s12 + $0xa0] sm:$0xf]
    %v1982 = vld [vmem:[%s12 + $0xa4] sm:$0xf]
    %v1983 = vld [vmem:[%s12 + $0xa8] sm:$0xf]
    %v1984 = vld [vmem:[%s12 + $0xac] sm:$0xf]
    %v1985 = vld [vmem:[%s12 + $0xb0] sm:$0xf]
    %v1986 = vld [vmem:[%s12 + $0xb4] sm:$0xf]
    %v1987 = vld [vmem:[%s12 + $0xb8] sm:$0xf]
    %v1988 = vld [vmem:[%s12 + $0xbc] sm:$0xf]
    %v1989 = vld [vmem:[%s12 + $0xc0] sm:$0xf]
    %v1990 = vld [vmem:[%s12 + $0xc4] sm:$0xf]
    %v1991 = vld [vmem:[%s12 + $0xc8] sm:$0xf]
    %v1992 = vld [vmem:[%s12 + $0xcc] sm:$0xf]
    %v1993 = vld [vmem:[%s12 + $0xd0] sm:$0xf]
    %v1994 = vld [vmem:[%s12 + $0xd4] sm:$0xf]
    %v1995 = vld [vmem:[%s12 + $0xd8] sm:$0xf]
    %v1996 = vld [vmem:[%s12 + $0xdc] sm:$0xf]
    %v1997 = vld [vmem:[%s12 + $0xe0] sm:$0xf]
    %v1998 = vld [vmem:[%s12 + $0xe4] sm:$0xf]
    %v1999 = vld [vmem:[%s12 + $0xe8] sm:$0xf]
    %v2000 = vld [vmem:[%s12 + $0xec] sm:$0xf]
    %v2001 = vld [vmem:[%s12 + $0xf0] sm:$0xf]
    %v2002 = vld [vmem:[%s12 + $0xf4] sm:$0xf]
    %v2003 = vld [vmem:[%s12 + $0xf8] sm:$0xf]
    %v2004 = vld [vmem:[%s12 + $0xfc] sm:$0xf]
    %v2005 = vld [vmem:[%s12 + $0x100] sm:$0xf]
    %v2006 = vld [vmem:[%s12 + $0x104] sm:$0xf]
    %v2007 = vld [vmem:[%s12 + $0x108] sm:$0xf]
    %v2008 = vld [vmem:[%s12 + $0x10c] sm:$0xf]
    %v2009 = vld [vmem:[%s12 + $0x110] sm:$0xf]
    %v2010 = vld [vmem:[%s12 + $0x114] sm:$0xf]
    %v2011 = vld [vmem:[%s12 + $0x118] sm:$0xf]
    %v2012 = vld [vmem:[%s12 + $0x11c] sm:$0xf]
    %v2013 = vld [vmem:[%s12 + $0x120] sm:$0xf]
    %v2014 = vld [vmem:[%s12 + $0x124] sm:$0xf]
    %v2015 = vld [vmem:[%s12 + $0x128] sm:$0xf]
    %v2016 = vld [vmem:[%s12 + $0x12c] sm:$0xf]
    %v2017 = vld [vmem:[%s12 + $0x130] sm:$0xf]
    %v2018 = vld [vmem:[%s12 + $0x134] sm:$0xf]
    %v2019 = vld [vmem:[%s12 + $0x138] sm:$0xf]
    %v2020 = vld [vmem:[%s12 + $0x13c] sm:$0xf]
    %v2021 = vld [vmem:[%s12 + $0x140] sm:$0xf]
    %v2022 = vld [vmem:[%s12 + $0x144] sm:$0xf]
    %v2023 = vld [vmem:[%s12 + $0x148] sm:$0xf]
    %v2024 = vld [vmem:[%s12 + $0x14c] sm:$0xf]
    %v2025 = vld [vmem:[%s12 + $0x150] sm:$0xf]
    %v2026 = vld [vmem:[%s12 + $0x154] sm:$0xf]
    %v2027 = vld [vmem:[%s12 + $0x158] sm:$0xf]
    %v2028 = vld [vmem:[%s12 + $0x15c] sm:$0xf]
    %v2029 = vld [vmem:[%s12 + $0x160] sm:$0xf]
    %v2030 = vld [vmem:[%s12 + $0x164] sm:$0xf]
    %v2031 = vld [vmem:[%s12 + $0x168] sm:$0xf]
    %v2032 = vld [vmem:[%s12 + $0x16c] sm:$0xf]
    %v2033 = vld [vmem:[%s12 + $0x170] sm:$0xf]
    %v2034 = vld [vmem:[%s12 + $0x174] sm:$0xf]
    %v2035 = vld [vmem:[%s12 + $0x178] sm:$0xf]
    %v2036 = vld [vmem:[%s12 + $0x17c] sm:$0xf]
    %v2037 = vld [vmem:[%s12 + $0x180] sm:$0xf]
    %v2038 = vld [vmem:[%s12 + $0x184] sm:$0xf]
    %v2039 = vld [vmem:[%s12 + $0x188] sm:$0xf]
    %v2040 = vld [vmem:[%s12 + $0x18c] sm:$0xf]
    %v2041 = vld [vmem:[%s12 + $0x190] sm:$0xf]
    %v2042 = vld [vmem:[%s12 + $0x194] sm:$0xf]
    %v2043 = vld [vmem:[%s12 + $0x198] sm:$0xf]
    %v2044 = vld [vmem:[%s12 + $0x19c] sm:$0xf]
    %v2045 = vld [vmem:[%s12 + $0x1a0] sm:$0xf]
    %v2046 = vld [vmem:[%s12 + $0x1a4] sm:$0xf]
    %v2047 = vld [vmem:[%s12 + $0x1a8] sm:$0xf]
    %v2048 = vld [vmem:[%s12 + $0x1ac] sm:$0xf]
    %v2049 = vld [vmem:[%s12 + $0x1b0] sm:$0xf]
    %v2050 = vld [vmem:[%s12 + $0x1b4] sm:$0xf]
    %v2051 = vld [vmem:[%s12 + $0x1b8] sm:$0xf]
    %v2052 = vld [vmem:[%s12 + $0x1bc] sm:$0xf]
    %v2053 = vld [vmem:[%s12 + $0x1c0] sm:$0xf]
    %v2054 = vld [vmem:[%s12 + $0x1c4] sm:$0xf]
    %v2055 = vld [vmem:[%s12 + $0x1c8] sm:$0xf]
    %v2056 = vld [vmem:[%s12 + $0x1cc] sm:$0xf]
    %v2057 = vld [vmem:[%s12 + $0x1d0] sm:$0xf]
    %v2058 = vld [vmem:[%s12 + $0x1d4] sm:$0xf]
    %v2059 = vld [vmem:[%s12 + $0x1d8] sm:$0xf]
    %v2060 = vld [vmem:[%s12 + $0x1dc] sm:$0xf]
    %v2181 = vunpack.c.l.b16 %v1941
    %v2182 = vunpack.c.l.b16 %v1942
    %v2183 = vunpack.c.l.b16 %v1943
    %v2184 = vunpack.c.l.b16 %v1944
    %v2185 = vunpack.c.l.b16 %v1945
    %v2186 = vunpack.c.l.b16 %v1946
    %v2187 = vunpack.c.l.b16 %v1947
    %v2188 = vunpack.c.l.b16 %v1948
    %v2189 = vunpack.c.l.b16 %v1949
    %v2190 = vunpack.c.l.b16 %v1950
    %v2191 = vunpack.c.l.b16 %v1951
    %v2192 = vunpack.c.l.b16 %v1952
    %v2193 = vunpack.c.l.b16 %v1953
    %v2194 = vunpack.c.l.b16 %v1954
    %v2195 = vunpack.c.l.b16 %v1955
    %v2196 = vunpack.c.l.b16 %v1956
    %v2197 = vunpack.c.l.b16 %v1957
    %v2198 = vunpack.c.l.b16 %v1958
    %v2199 = vunpack.c.l.b16 %v1959
    %v2200 = vunpack.c.l.b16 %v1960
    %v2201 = vunpack.c.l.b16 %v1961
    %v2202 = vunpack.c.l.b16 %v1962
    %v2203 = vunpack.c.l.b16 %v1963
    %v2204 = vunpack.c.l.b16 %v1964
    %v2205 = vunpack.c.l.b16 %v1965
    %v2206 = vunpack.c.l.b16 %v1966
    %v2207 = vunpack.c.l.b16 %v1967
    %v2208 = vunpack.c.l.b16 %v1968
    %v2209 = vunpack.c.l.b16 %v1969
    %v2210 = vunpack.c.l.b16 %v1970
    %v2211 = vunpack.c.l.b16 %v1971
    %v2212 = vunpack.c.l.b16 %v1972
    %v2213 = vunpack.c.l.b16 %v1973
    %v2214 = vunpack.c.l.b16 %v1974
    %v2215 = vunpack.c.l.b16 %v1975
    %v2216 = vunpack.c.l.b16 %v1976
    %v2217 = vunpack.c.l.b16 %v1977
    %v2218 = vunpack.c.l.b16 %v1978
    %v2219 = vunpack.c.l.b16 %v1979
    %v2220 = vunpack.c.l.b16 %v1980
    %v2221 = vunpack.c.l.b16 %v1981
    %v2222 = vunpack.c.l.b16 %v1982
    %v2223 = vunpack.c.l.b16 %v1983
    %v2224 = vunpack.c.l.b16 %v1984
    %v2225 = vunpack.c.l.b16 %v1985
    %v2226 = vunpack.c.l.b16 %v1986
    %v2227 = vunpack.c.l.b16 %v1987
    %v2228 = vunpack.c.l.b16 %v1988
    %v2229 = vunpack.c.l.b16 %v1989
    %v2230 = vunpack.c.l.b16 %v1990
    %v2231 = vunpack.c.l.b16 %v1991
    %v2232 = vunpack.c.l.b16 %v1992
    %v2233 = vunpack.c.l.b16 %v1993
    %v2234 = vunpack.c.l.b16 %v1994
    %v2235 = vunpack.c.l.b16 %v1995
    %v2236 = vunpack.c.l.b16 %v1996
    %v2237 = vunpack.c.l.b16 %v1997
    %v2238 = vunpack.c.l.b16 %v1998
    %v2239 = vunpack.c.l.b16 %v1999
    %v2240 = vunpack.c.l.b16 %v2000
    %v2241 = vunpack.c.l.b16 %v2001
    %v2242 = vunpack.c.l.b16 %v2002
    %v2243 = vunpack.c.l.b16 %v2003
    %v2244 = vunpack.c.l.b16 %v2004
    %v2245 = vunpack.c.l.b16 %v2005
    %v2246 = vunpack.c.l.b16 %v2006
    %v2247 = vunpack.c.l.b16 %v2007
    %v2248 = vunpack.c.l.b16 %v2008
    %v2249 = vunpack.c.l.b16 %v2009
    %v2250 = vunpack.c.l.b16 %v2010
    %v2251 = vunpack.c.l.b16 %v2011
    %v2252 = vunpack.c.l.b16 %v2012
    %v2253 = vunpack.c.l.b16 %v2013
    %v2254 = vunpack.c.l.b16 %v2014
    %v2255 = vunpack.c.l.b16 %v2015
    %v2256 = vunpack.c.l.b16 %v2016
    %v2257 = vunpack.c.l.b16 %v2017
    %v2258 = vunpack.c.l.b16 %v2018
    %v2259 = vunpack.c.l.b16 %v2019
    %v2260 = vunpack.c.l.b16 %v2020
    %v2261 = vunpack.c.l.b16 %v2021
    %v2262 = vunpack.c.l.b16 %v2022
    %v2263 = vunpack.c.l.b16 %v2023
    %v2264 = vunpack.c.l.b16 %v2024
    %v2265 = vunpack.c.l.b16 %v2025
    %v2266 = vunpack.c.l.b16 %v2026
    %v2267 = vunpack.c.l.b16 %v2027
    %v2268 = vunpack.c.l.b16 %v2028
    %v2269 = vunpack.c.l.b16 %v2029
    %v2270 = vunpack.c.l.b16 %v2030
    %v2271 = vunpack.c.l.b16 %v2031
    %v2272 = vunpack.c.l.b16 %v2032
    %v2273 = vunpack.c.l.b16 %v2033
    %v2274 = vunpack.c.l.b16 %v2034
    %v2275 = vunpack.c.l.b16 %v2035
    %v2276 = vunpack.c.l.b16 %v2036
    %v2277 = vunpack.c.l.b16 %v2037
    %v2278 = vunpack.c.l.b16 %v2038
    %v2279 = vunpack.c.l.b16 %v2039
    %v2280 = vunpack.c.l.b16 %v2040
    %v2281 = vunpack.c.l.b16 %v2041
    %v2282 = vunpack.c.l.b16 %v2042
    %v2283 = vunpack.c.l.b16 %v2043
    %v2284 = vunpack.c.l.b16 %v2044
    %v2285 = vunpack.c.l.b16 %v2045
    %v2286 = vunpack.c.l.b16 %v2046
    %v2287 = vunpack.c.l.b16 %v2047
    %v2288 = vunpack.c.l.b16 %v2048
    %v2289 = vunpack.c.l.b16 %v2049
    %v2290 = vunpack.c.l.b16 %v2050
    %v2291 = vunpack.c.l.b16 %v2051
    %v2292 = vunpack.c.l.b16 %v2052
    %v2293 = vunpack.c.l.b16 %v2053
    %v2294 = vunpack.c.l.b16 %v2054
    %v2295 = vunpack.c.l.b16 %v2055
    %v2296 = vunpack.c.l.b16 %v2056
    %v2297 = vunpack.c.l.b16 %v2057
    %v2298 = vunpack.c.l.b16 %v2058
    %v2299 = vunpack.c.l.b16 %v2059
    %v2300 = vunpack.c.l.b16 %v2060
    %v2301 = vpack.c.b16 %v2182, %v2181
    %v2302 = vpack.c.b16 %v2184, %v2183
    %v2303 = vpack.c.b16 %v2186, %v2185
    %v2304 = vpack.c.b16 %v2188, %v2187
    %v2305 = vpack.c.b16 %v2190, %v2189
    %v2306 = vpack.c.b16 %v2192, %v2191
    %v2307 = vpack.c.b16 %v2194, %v2193
    %v2308 = vpack.c.b16 %v2196, %v2195
    %v2309 = vpack.c.b16 %v2198, %v2197
    %v2310 = vpack.c.b16 %v2200, %v2199
    %v2311 = vpack.c.b16 %v2202, %v2201
    %v2312 = vpack.c.b16 %v2204, %v2203
    %v2313 = vpack.c.b16 %v2206, %v2205
    %v2314 = vpack.c.b16 %v2208, %v2207
    %v2315 = vpack.c.b16 %v2210, %v2209
    %v2316 = vpack.c.b16 %v2212, %v2211
    %v2317 = vpack.c.b16 %v2214, %v2213
    %v2318 = vpack.c.b16 %v2216, %v2215
    %v2319 = vpack.c.b16 %v2218, %v2217
    %v2320 = vpack.c.b16 %v2220, %v2219
    %v2321 = vpack.c.b16 %v2222, %v2221
    %v2322 = vpack.c.b16 %v2224, %v2223
    %v2323 = vpack.c.b16 %v2226, %v2225
    %v2324 = vpack.c.b16 %v2228, %v2227
    %v2325 = vpack.c.b16 %v2230, %v2229
    %v2326 = vpack.c.b16 %v2232, %v2231
    %v2327 = vpack.c.b16 %v2234, %v2233
    %v2328 = vpack.c.b16 %v2236, %v2235
    %v2329 = vpack.c.b16 %v2238, %v2237
    %v2330 = vpack.c.b16 %v2240, %v2239
    %v2331 = vpack.c.b16 %v2242, %v2241
    %v2332 = vpack.c.b16 %v2244, %v2243
    %v2333 = vpack.c.b16 %v2246, %v2245
    %v2334 = vpack.c.b16 %v2248, %v2247
    %v2335 = vpack.c.b16 %v2250, %v2249
    %v2336 = vpack.c.b16 %v2252, %v2251
    %v2337 = vpack.c.b16 %v2254, %v2253
    %v2338 = vpack.c.b16 %v2256, %v2255
    %v2339 = vpack.c.b16 %v2258, %v2257
    %v2340 = vpack.c.b16 %v2260, %v2259
    %v2341 = vpack.c.b16 %v2262, %v2261
    %v2342 = vpack.c.b16 %v2264, %v2263
    %v2343 = vpack.c.b16 %v2266, %v2265
    %v2344 = vpack.c.b16 %v2268, %v2267
    %v2345 = vpack.c.b16 %v2270, %v2269
    %v2346 = vpack.c.b16 %v2272, %v2271
    %v2347 = vpack.c.b16 %v2274, %v2273
    %v2348 = vpack.c.b16 %v2276, %v2275
    %v2349 = vpack.c.b16 %v2278, %v2277
    %v2350 = vpack.c.b16 %v2280, %v2279
    %v2351 = vpack.c.b16 %v2282, %v2281
    %v2352 = vpack.c.b16 %v2284, %v2283
    %v2353 = vpack.c.b16 %v2286, %v2285
    %v2354 = vpack.c.b16 %v2288, %v2287
    %v2355 = vpack.c.b16 %v2290, %v2289
    %v2356 = vpack.c.b16 %v2292, %v2291
    %v2357 = vpack.c.b16 %v2294, %v2293
    %v2358 = vpack.c.b16 %v2296, %v2295
    %v2359 = vpack.c.b16 %v2298, %v2297
    %v2360 = vpack.c.b16 %v2300, %v2299
    %v2422 = vsel %vm466, %v1924, 0
    %v2425 = vsel %vm466, %v1932, 0
    %v2428 = vsel %vm466, %v1940, 0
    %2430 = vmatprep.subr.bf16.mxu0 0
    %2431 = vmatpush1.bf16.msra.mxu0 %v2301
    %2432 = vmatprep.subr.bf16.mxu0 0
    %2433 = vmatpush1.bf16.msra.mxu0 %v2302
    %2434 = vmatprep.subr.bf16.mxu0 0
    %2435 = vmatpush1.bf16.msra.mxu0 %v2303
    %2436 = vmatprep.subr.bf16.mxu0 0
    %2437 = vmatpush1.bf16.msra.mxu0 %v2304
    %2438 = vmatprep.subr.bf16.mxu0 0
    %2439 = vmatpush1.bf16.msra.mxu0 %v2305
    %2440 = vmatprep.subr.bf16.mxu0 0
    %2441 = vmatpush1.bf16.msra.mxu0 %v2306
    %2442 = vmatprep.subr.bf16.mxu0 0
    %2443 = vmatpush1.bf16.msra.mxu0 %v2307
    %2444 = vmatprep.subr.bf16.mxu0 0
    %2445 = vmatpush1.bf16.msra.mxu0 %v2308
    %2446 = vmatprep.subr.bf16.mxu0 0
    %2447 = vmatpush1.bf16.msra.mxu0 %v2309
    %2448 = vmatprep.subr.bf16.mxu0 0
    %2449 = vmatpush1.bf16.msra.mxu0 %v2310
    %2450 = vmatprep.subr.bf16.mxu0 0
    %2451 = vmatpush1.bf16.msra.mxu0 %v2311
    %2452 = vmatprep.subr.bf16.mxu0 0
    %2453 = vmatpush1.bf16.msra.mxu0 %v2312
    %2454 = vmatprep.subr.bf16.mxu0 0
    %2455 = vmatpush1.bf16.msra.mxu0 %v2313
    %2456 = vmatprep.subr.bf16.mxu0 0
    %2457 = vmatpush1.bf16.msra.mxu0 %v2314
    %2458 = vmatprep.subr.bf16.mxu0 0
    %2459 = vmatpush1.bf16.msra.mxu0 %v2315
    %2460 = vmatprep.subr.bf16.mxu0 0
    %2461 = vmatpush1.bf16.msra.mxu0 %v2316
    %2462 = vmatprep.mubr.bf16.mxu0 %v1918
    %2463 = vmatmul.mubr.bf16.gmra.mrb[0].mxu0 %v1917
    %v2464 = vpop.f32.mrb[0].mxu0
    %v2465 = vadd.f32 0.0, %v2464
    %v2466 = vpop.f32.mrb[0].mxu0
    %v2467 = vpop.f32.mrb[0].mxu0
    %v2468 = vadd.f32 0.0, %v2467
    %v2469 = vpop.f32.mrb[0].mxu0
    %2470 = vmatprep.mubr.bf16.mxu0 %v1926
    %2471 = vmatmul.mubr.bf16.gmra.mrb[0].mxu0 %v1925
    %v2472 = vpop.f32.mrb[0].mxu0
    %v2473 = vadd.f32 0.0, %v2472
    %v2474 = vpop.f32.mrb[0].mxu0
    %v2475 = vpop.f32.mrb[0].mxu0
    %v2476 = vadd.f32 0.0, %v2475
    %v2477 = vpop.f32.mrb[0].mxu0
    %2478 = vmatprep.mubr.bf16.mxu0 %v1934
    %2479 = vmatmul.mubr.bf16.gmra.mrb[0].mxu0 %v1933
    %v2480 = vpop.f32.mrb[0].mxu0
    %v2481 = vadd.f32 0.0, %v2480
    %v2482 = vpop.f32.mrb[0].mxu0
    %v2483 = vpop.f32.mrb[0].mxu0
    %v2484 = vadd.f32 0.0, %v2483
    %v2485 = vpop.f32.mrb[0].mxu0
    %2486 = vdwg.mxu0
    %2487 = vmatprep.subr.bf16.mxu0 0
    %2488 = vmatpush1.bf16.msra.mxu0 %v2317
    %2489 = vmatprep.subr.bf16.mxu0 0
    %2490 = vmatpush1.bf16.msra.mxu0 %v2318
    %2491 = vmatprep.subr.bf16.mxu0 0
    %2492 = vmatpush1.bf16.msra.mxu0 %v2319
    %2493 = vmatprep.subr.bf16.mxu0 0
    %2494 = vmatpush1.bf16.msra.mxu0 %v2320
    %2495 = vmatprep.subr.bf16.mxu0 0
    %2496 = vmatpush1.bf16.msra.mxu0 %v2321
    %2497 = vmatprep.subr.bf16.mxu0 0
    %2498 = vmatpush1.bf16.msra.mxu0 %v2322
    %2499 = vmatprep.subr.bf16.mxu0 0
    %2500 = vmatpush1.bf16.msra.mxu0 %v2323
    %2501 = vmatprep.subr.bf16.mxu0 0
    %2502 = vmatpush1.bf16.msra.mxu0 %v2324
    %2503 = vmatprep.subr.bf16.mxu0 0
    %2504 = vmatpush1.bf16.msra.mxu0 %v2325
    %2505 = vmatprep.subr.bf16.mxu0 0
    %2506 = vmatpush1.bf16.msra.mxu0 %v2326
    %2507 = vmatprep.subr.bf16.mxu0 0
    %2508 = vmatpush1.bf16.msra.mxu0 %v2327
    %2509 = vmatprep.subr.bf16.mxu0 0
    %2510 = vmatpush1.bf16.msra.mxu0 %v2328
    %2511 = vmatprep.subr.bf16.mxu0 0
    %2512 = vmatpush1.bf16.msra.mxu0 %v2329
    %2513 = vmatprep.subr.bf16.mxu0 0
    %2514 = vmatpush1.bf16.msra.mxu0 %v2330
    %2515 = vmatprep.subr.bf16.mxu0 0
    %2516 = vmatpush1.bf16.msra.mxu0 %v2331
    %2517 = vmatprep.subr.bf16.mxu0 0
    %2518 = vmatpush1.bf16.msra.mxu0 %v2332
    %2519 = vmatprep.mubr.bf16.mxu0 %v1920
    %2520 = vmatmul.mubr.bf16.gmra.mrb[0].mxu0 %v1919
    %v2521 = vpop.f32.mrb[0].mxu0
    %v2522 = vadd.f32 %v2465, %v2521
    %v2523 = vpop.f32.mrb[0].mxu0
    %v2524 = vpop.f32.mrb[0].mxu0
    %v2525 = vadd.f32 %v2468, %v2524
    %v2526 = vpop.f32.mrb[0].mxu0
    %2527 = vmatprep.mubr.bf16.mxu0 %v1928
    %2528 = vmatmul.mubr.bf16.gmra.mrb[0].mxu0 %v1927
    %v2529 = vpop.f32.mrb[0].mxu0
    %v2530 = vadd.f32 %v2473, %v2529
    %v2531 = vpop.f32.mrb[0].mxu0
    %v2532 = vpop.f32.mrb[0].mxu0
    %v2533 = vadd.f32 %v2476, %v2532
    %v2534 = vpop.f32.mrb[0].mxu0
    %2535 = vmatprep.mubr.bf16.mxu0 %v1936
    %2536 = vmatmul.mubr.bf16.gmra.mrb[0].mxu0 %v1935
    %v2537 = vpop.f32.mrb[0].mxu0
    %v2538 = vadd.f32 %v2481, %v2537
    %v2539 = vpop.f32.mrb[0].mxu0
    %v2540 = vpop.f32.mrb[0].mxu0
    %v2541 = vadd.f32 %v2484, %v2540
    %v2542 = vpop.f32.mrb[0].mxu0
    %2543 = vdwg.mxu0
    %2544 = vmatprep.subr.bf16.mxu0 0
    %2545 = vmatpush1.bf16.msra.mxu0 %v2333
    %2546 = vmatprep.subr.bf16.mxu0 0
    %2547 = vmatpush1.bf16.msra.mxu0 %v2334
    %2548 = vmatprep.subr.bf16.mxu0 0
    %2549 = vmatpush1.bf16.msra.mxu0 %v2335
    %2550 = vmatprep.subr.bf16.mxu0 0
    %2551 = vmatpush1.bf16.msra.mxu0 %v2336
    %2552 = vmatprep.subr.bf16.mxu0 0
    %2553 = vmatpush1.bf16.msra.mxu0 %v2337
    %2554 = vmatprep.subr.bf16.mxu0 0
    %2555 = vmatpush1.bf16.msra.mxu0 %v2338
    %2556 = vmatprep.subr.bf16.mxu0 0
    %2557 = vmatpush1.bf16.msra.mxu0 %v2339
    %2558 = vmatprep.subr.bf16.mxu0 0
    %2559 = vmatpush1.bf16.msra.mxu0 %v2340
    %2560 = vmatprep.subr.bf16.mxu0 0
    %2561 = vmatpush1.bf16.msra.mxu0 %v2341
    %2562 = vmatprep.subr.bf16.mxu0 0
    %2563 = vmatpush1.bf16.msra.mxu0 %v2342
    %2564 = vmatprep.subr.bf16.mxu0 0
    %2565 = vmatpush1.bf16.msra.mxu0 %v2343
    %2566 = vmatprep.subr.bf16.mxu0 0
    %2567 = vmatpush1.bf16.msra.mxu0 %v2344
    %2568 = vmatprep.subr.bf16.mxu0 0
    %2569 = vmatpush1.bf16.msra.mxu0 %v2345
    %2570 = vmatprep.subr.bf16.mxu0 0
    %2571 = vmatpush1.bf16.msra.mxu0 %v2346
    %2572 = vmatprep.subr.bf16.mxu0 0
    %2573 = vmatpush1.bf16.msra.mxu0 %v2347
    %2574 = vmatprep.subr.bf16.mxu0 0
    %2575 = vmatpush1.bf16.msra.mxu0 %v2348
    %2576 = vmatprep.mubr.bf16.mxu0 %v1922
    %2577 = vmatmul.mubr.bf16.gmra.mrb[0].mxu0 %v1921
    %v2578 = vpop.f32.mrb[0].mxu0
    %v2579 = vadd.f32 %v2522, %v2578
    %v2580 = vpop.f32.mrb[0].mxu0
    %v2581 = vpop.f32.mrb[0].mxu0
    %v2582 = vadd.f32 %v2525, %v2581
    %v2583 = vpop.f32.mrb[0].mxu0
    %2584 = vmatprep.mubr.bf16.mxu0 %v1930
    %2585 = vmatmul.mubr.bf16.gmra.mrb[0].mxu0 %v1929
    %v2586 = vpop.f32.mrb[0].mxu0
    %v2587 = vadd.f32 %v2530, %v2586
    %v2588 = vpop.f32.mrb[0].mxu0
    %v2589 = vpop.f32.mrb[0].mxu0
    %v2590 = vadd.f32 %v2533, %v2589
    %v2591 = vpop.f32.mrb[0].mxu0
    %2592 = vmatprep.mubr.bf16.mxu0 %v1938
    %2593 = vmatmul.mubr.bf16.gmra.mrb[0].mxu0 %v1937
    %v2594 = vpop.f32.mrb[0].mxu0
    %v2595 = vadd.f32 %v2538, %v2594
    %v2596 = vpop.f32.mrb[0].mxu0
    %v2597 = vpop.f32.mrb[0].mxu0
    %v2598 = vadd.f32 %v2541, %v2597
    %v2599 = vpop.f32.mrb[0].mxu0
    %2600 = vdwg.mxu0
    %2601 = vmatprep.subr.bf16.mxu0 0
    %2602 = vmatpush1.bf16.msra.mxu0 %v2349
    %2603 = vmatprep.subr.bf16.mxu0 0
    %2604 = vmatpush1.bf16.msra.mxu0 %v2350
    %2605 = vmatprep.subr.bf16.mxu0 0
    %2606 = vmatpush1.bf16.msra.mxu0 %v2351
    %2607 = vmatprep.subr.bf16.mxu0 0
    %2608 = vmatpush1.bf16.msra.mxu0 %v2352
    %2609 = vmatprep.subr.bf16.mxu0 0
    %2610 = vmatpush1.bf16.msra.mxu0 %v2353
    %2611 = vmatprep.subr.bf16.mxu0 0
    %2612 = vmatpush1.bf16.msra.mxu0 %v2354
    %2613 = vmatprep.subr.bf16.mxu0 0
    %2614 = vmatpush1.bf16.msra.mxu0 %v2355
    %2615 = vmatprep.subr.bf16.mxu0 0
    %2616 = vmatpush1.bf16.msra.mxu0 %v2356
    %2617 = vmatprep.subr.bf16.mxu0 0
    %2618 = vmatpush1.bf16.msra.mxu0 %v2357
    %2619 = vmatprep.subr.bf16.mxu0 0
    %2620 = vmatpush1.bf16.msra.mxu0 %v2358
    %2621 = vmatprep.subr.bf16.mxu0 0
    %2622 = vmatpush1.bf16.msra.mxu0 %v2359
    %2623 = vmatprep.subr.bf16.mxu0 0
    %2624 = vmatpush1.bf16.msra.mxu0 %v2360
    %2625 = vmatprep.subr.bf16.mxu0 0
    %2626 = vmatpush1.bf16.msra.mxu0 0
    %2627 = vmatprep.subr.bf16.mxu0 0
    %2628 = vmatpush1.bf16.msra.mxu0 0
    %2629 = vmatprep.subr.bf16.mxu0 0
    %2630 = vmatpush1.bf16.msra.mxu0 0
    %2631 = vmatprep.subr.bf16.mxu0 0
    %2632 = vmatpush1.bf16.msra.mxu0 0
    %2633 = vmatprep.mubr.bf16.mxu0 %v2422
    %2634 = vmatmul.mubr.bf16.gmra.mrb[0].mxu0 %v1923
    %v2635 = vpop.f32.mrb[0].mxu0
    %v2636 = vadd.f32 %v2579, %v2635
    %v2637 = vpop.f32.mrb[0].mxu0
    %v2638 = vpop.f32.mrb[0].mxu0
    %v2639 = vadd.f32 %v2582, %v2638
    %v2640 = vpop.f32.mrb[0].mxu0
    %2641 = vmatprep.mubr.bf16.mxu0 %v2425
    %2642 = vmatmul.mubr.bf16.gmra.mrb[0].mxu0 %v1931
    %v2643 = vpop.f32.mrb[0].mxu0
    %v2644 = vadd.f32 %v2587, %v2643
    %v2645 = vpop.f32.mrb[0].mxu0
    %v2646 = vpop.f32.mrb[0].mxu0
    %v2647 = vadd.f32 %v2590, %v2646
    %v2648 = vpop.f32.mrb[0].mxu0
    %2649 = vmatprep.mubr.bf16.mxu0 %v2428
    %2650 = vmatmul.mubr.bf16.gmra.mrb[0].mxu0 %v1939
    %v2651 = vpop.f32.mrb[0].mxu0
    %v2652 = vadd.f32 %v2595, %v2651
    %v2653 = vpop.f32.mrb[0].mxu0
    %v2654 = vpop.f32.mrb[0].mxu0
    %v2655 = vadd.f32 %v2598, %v2654
    %v2656 = vpop.f32.mrb[0].mxu0
    %2657 = vdwg.mxu0
    %v2658 = vmax.f32 %v2644, 1e-16
    %v2659 = vmax.f32 %v2647, 1e-16
    %v2660 = vmax.f32 %v2652, 1e-16
    %v2661 = vmax.f32 %v2655, 1e-16
    %v2662 = vmul.f32 %v2658, %v2660
    %v2663 = vmul.f32 %v2659, %v2661
    %v2664 = vrsqrt.pop %v2662
    %v2665 = vrsqrt.pop %v2663
    %v2666 = vmul.f32 %v2636, %v2664
    %v2667 = vmul.f32 %v2639, %v2665
    %v2668 = vadd.f32 %v2666, %v1911
    %v2669 = vadd.f32 %v2667, %v1914
    %v2670 = vld [vmem:[%s13] sm:$0x1]
    %v2672 = vlaneseq
    %v2673 = vshrl.u32 %v2672, 7
    %v2674 = vsub.s32 0, %v2673
    %v2675 = vrot.slane %v2670, %v2674
    %v2677 = vadd.f32 %v2668, %v2675
    %v2678 = vadd.f32 %v2669, %v2675
    %v2679 = vmax.f32 %v2677, 0.0
    %v2680 = vmax.f32 %v2678, 0.0
    %v2681 = vpack.c.bf16 %v2680, %v2679
    %v2682 = vld [vmem:[%s14] sm:$0xf]
    %v2683 = vld [vmem:[%s14 + $0x4] sm:$0xf]
    %v2684 = vld [vmem:[%s14 + $0x8] sm:$0xf]
    %v2685 = vld [vmem:[%s14 + $0xc] sm:$0xf]
    %v2686 = vld [vmem:[%s15] sm:$0x1]
    %v2688 = vlaneseq
    %v2689 = vshrl.u32 %v2688, 7
    %v2690 = vsub.s32 0, %v2689
    %v2691 = vrot.slane %v2686, %v2690
    %v2697 = vunpack.c.l.b16 %v2682
    %v2698 = vunpack.c.l.b16 %v2683
    %v2699 = vunpack.c.l.b16 %v2684
    %v2700 = vunpack.c.l.b16 %v2685
    %v2701 = vpack.c.b16 %v2698, %v2697
    %v2702 = vpack.c.b16 %v2700, %v2699
    %v2706 = vsel %vm335, %v2681, 0
    %2708 = vmatprep.subr.bf16.mxu0 0
    %2709 = vmatpush1.bf16.msra.mxu0 %v2701
    %2710 = vmatprep.subr.bf16.mxu0 0
    %2711 = vmatpush1.bf16.msra.mxu0 %v2702
    %2712 = vmatprep.subr.bf16.mxu0 0
    %2713 = vmatpush1.bf16.msra.mxu0 0
    %2714 = vmatprep.subr.bf16.mxu0 0
    %2715 = vmatpush1.bf16.msra.mxu0 0
    %2716 = vmatprep.subr.bf16.mxu0 0
    %2717 = vmatpush1.bf16.msra.mxu0 0
    %2718 = vmatprep.subr.bf16.mxu0 0
    %2719 = vmatpush1.bf16.msra.mxu0 0
    %2720 = vmatprep.subr.bf16.mxu0 0
    %2721 = vmatpush1.bf16.msra.mxu0 0
    %2722 = vmatprep.subr.bf16.mxu0 0
    %2723 = vmatpush1.bf16.msra.mxu0 0
    %2724 = vmatprep.subr.bf16.mxu0 0
    %2725 = vmatpush1.bf16.msra.mxu0 0
    %2726 = vmatprep.subr.bf16.mxu0 0
    %2727 = vmatpush1.bf16.msra.mxu0 0
    %2728 = vmatprep.subr.bf16.mxu0 0
    %2729 = vmatpush1.bf16.msra.mxu0 0
    %2730 = vmatprep.subr.bf16.mxu0 0
    %2731 = vmatpush1.bf16.msra.mxu0 0
    %2732 = vmatprep.subr.bf16.mxu0 0
    %2733 = vmatpush1.bf16.msra.mxu0 0
    %2734 = vmatprep.subr.bf16.mxu0 0
    %2735 = vmatpush1.bf16.msra.mxu0 0
    %2736 = vmatprep.subr.bf16.mxu0 0
    %2737 = vmatpush1.bf16.msra.mxu0 0
    %2738 = vmatprep.subr.bf16.mxu0 0
    %2739 = vmatpush1.bf16.msra.mxu0 0
    %2740 = vmatprep.mubr.bf16.mxu0 0
    %2741 = vmatmul.mubr.bf16.gmra.mrb[0].mxu0 %v2706
    %v2742 = vpop.f32.mrb[0].mxu0
    %v2743 = vadd.f32 %v2691, %v2742
    %v2744 = vpop.f32.mrb[0].mxu0
    %v2745 = vpop.f32.mrb[0].mxu0
    %v2746 = vadd.f32 %v2691, %v2745
    %v2747 = vpop.f32.mrb[0].mxu0
    %2748 = vdwg.mxu0
    %vm2749 = vcmask 80896
    %v2750 = vsel %vm2749, %v2743, -inf
    %2751 = vmax.xlane.f32.xlu0 %v2750
    %v2752 = vpop.xlane.xlu0 %2751
    %v2753 = vsel %vm2749, %v2746, -inf
    %2754 = vmax.xlane.f32.xlu0 %v2753
    %v2755 = vpop.xlane.xlu0 %2754
    %v2756 = vsub.f32 %v2743, %v2752
    %v2757 = vsub.f32 %v2746, %v2755
    %v2758 = vmul.f32 %v2756, 1.442695
    %v2759 = vpow.pop %v2758
    %v2760 = vmul.f32 %v2757, 1.442695
    %v2761 = vpow.pop %v2760
    %v2762 = vsel %vm2749, %v2759, 0.0
    %2763 = vadd.xlane.f32.xlu0 %v2762
    %v2764 = vpop.xlane.xlu0 %2763
    %v2765 = vsel %vm2749, %v2761, 0.0
    %2766 = vadd.xlane.f32.xlu0 %v2765
    %v2767 = vpop.xlane.xlu0 %2766
    %v2768 = vrcp.pop %v2764
    %v2769 = vrcp.pop %v2767
    %v2770 = vmul.f32 %v2759, %v2768
    %v2771 = vmul.f32 %v2761, %v2769
    %v2772 = vunpack.c.l.bf16 %v67
    %v2773 = vunpack.c.h.bf16 %v67
    %v2774 = vunpack.c.l.bf16 %v68
    %v2775 = vunpack.c.h.bf16 %v68
    %2777 = vset.pattern.permute.xlu0 0
    %2778 = vperm.xlu0 %2777, %v2770
    %v2779 = vpop.permute.xlu0 %2778
    %2782 = vset.pattern.permute.xlu0 0
    %2783 = vperm.xlu0 %2782, %v2771
    %v2784 = vpop.permute.xlu0 %2783
    %v2786 = vmul.f32 %v2772, %v2779
    %v2787 = vmul.f32 %v2773, %v2779
    %v2788 = vmul.f32 %v2774, %v2784
    %v2789 = vmul.f32 %v2775, %v2784
    %2790 = vset.pattern.permute.xlu0 5
    %2791 = vperm.xlu0 %2790, %v2770
    %v2792 = vpop.permute.xlu0 %2791
    %2794 = vset.pattern.permute.xlu0 5
    %2795 = vperm.xlu0 %2794, %v2771
    %v2796 = vpop.permute.xlu0 %2795
    %v2798 = vmul.f32 %v436, %v2792
    %v2799 = vmul.f32 %v437, %v2796
    %v2800 = vunpack.c.l.bf16 %v69
    %v2801 = vunpack.c.h.bf16 %v69
    %v2802 = vunpack.c.l.bf16 %v70
    %v2803 = vunpack.c.h.bf16 %v70
    %2804 = vset.pattern.permute.xlu0 1
    %2805 = vperm.xlu0 %2804, %v2770
    %v2806 = vpop.permute.xlu0 %2805
    %2808 = vset.pattern.permute.xlu0 1
    %2809 = vperm.xlu0 %2808, %v2771
    %v2810 = vpop.permute.xlu0 %2809
    %v2812 = vmul.f32 %v2800, %v2806
    %v2813 = vmul.f32 %v2801, %v2806
    %v2814 = vmul.f32 %v2802, %v2810
    %v2815 = vmul.f32 %v2803, %v2810
    %v2816 = vadd.f32 %v2786, %v2812
    %v2817 = vadd.f32 %v2787, %v2813
    %v2818 = vadd.f32 %v2788, %v2814
    %v2819 = vadd.f32 %v2789, %v2815
    %2820 = vset.pattern.permute.xlu0 6
    %2821 = vperm.xlu0 %2820, %v2770
    %v2822 = vpop.permute.xlu0 %2821
    %2824 = vset.pattern.permute.xlu0 6
    %2825 = vperm.xlu0 %2824, %v2771
    %v2826 = vpop.permute.xlu0 %2825
    %v2828 = vmul.f32 %v438, %v2822
    %v2829 = vmul.f32 %v439, %v2826
    %v2830 = vadd.f32 %v2798, %v2828
    %v2831 = vadd.f32 %v2799, %v2829
    %v2832 = vunpack.c.l.bf16 %v71
    %v2833 = vunpack.c.h.bf16 %v71
    %v2834 = vunpack.c.l.bf16 %v72
    %v2835 = vunpack.c.h.bf16 %v72
    %2836 = vset.pattern.permute.xlu0 2
    %2837 = vperm.xlu0 %2836, %v2770
    %v2838 = vpop.permute.xlu0 %2837
    %2840 = vset.pattern.permute.xlu0 2
    %2841 = vperm.xlu0 %2840, %v2771
    %v2842 = vpop.permute.xlu0 %2841
    %v2844 = vmul.f32 %v2832, %v2838
    %v2845 = vmul.f32 %v2833, %v2838
    %v2846 = vmul.f32 %v2834, %v2842
    %v2847 = vmul.f32 %v2835, %v2842
    %v2848 = vadd.f32 %v2816, %v2844
    %v2849 = vadd.f32 %v2817, %v2845
    %v2850 = vadd.f32 %v2818, %v2846
    %v2851 = vadd.f32 %v2819, %v2847
    %2852 = vset.pattern.permute.xlu0 7
    %2853 = vperm.xlu0 %2852, %v2770
    %v2854 = vpop.permute.xlu0 %2853
    %2856 = vset.pattern.permute.xlu0 7
    %2857 = vperm.xlu0 %2856, %v2771
    %v2858 = vpop.permute.xlu0 %2857
    %v2860 = vmul.f32 %v440, %v2854
    %v2861 = vmul.f32 %v441, %v2858
    %v2862 = vadd.f32 %v2830, %v2860
    %v2863 = vadd.f32 %v2831, %v2861
    %v2864 = vunpack.c.l.bf16 %v73
    %v2865 = vunpack.c.h.bf16 %v73
    %v2866 = vunpack.c.l.bf16 %v74
    %v2867 = vunpack.c.h.bf16 %v74
    %2868 = vset.pattern.permute.xlu0 3
    %2869 = vperm.xlu0 %2868, %v2770
    %v2870 = vpop.permute.xlu0 %2869
    %2872 = vset.pattern.permute.xlu0 3
    %2873 = vperm.xlu0 %2872, %v2771
    %v2874 = vpop.permute.xlu0 %2873
    %v2876 = vmul.f32 %v2864, %v2870
    %v2877 = vmul.f32 %v2865, %v2870
    %v2878 = vmul.f32 %v2866, %v2874
    %v2879 = vmul.f32 %v2867, %v2874
    %v2880 = vadd.f32 %v2848, %v2876
    %v2881 = vadd.f32 %v2849, %v2877
    %v2882 = vadd.f32 %v2850, %v2878
    %v2883 = vadd.f32 %v2851, %v2879
    %2884 = vset.pattern.permute.xlu0 8
    %2885 = vperm.xlu0 %2884, %v2770
    %v2886 = vpop.permute.xlu0 %2885
    %2888 = vset.pattern.permute.xlu0 8
    %2889 = vperm.xlu0 %2888, %v2771
    %v2890 = vpop.permute.xlu0 %2889
    %v2892 = vmul.f32 %v442, %v2886
    %v2893 = vmul.f32 %v443, %v2890
    %v2894 = vadd.f32 %v2862, %v2892
    %v2895 = vadd.f32 %v2863, %v2893
    %v2896 = vunpack.c.l.bf16 %v75
    %v2897 = vunpack.c.h.bf16 %v75
    %v2898 = vunpack.c.l.bf16 %v76
    %v2899 = vunpack.c.h.bf16 %v76
    %2900 = vset.pattern.permute.xlu0 4
    %2901 = vperm.xlu0 %2900, %v2770
    %v2902 = vpop.permute.xlu0 %2901
    %2904 = vset.pattern.permute.xlu0 4
    %2905 = vperm.xlu0 %2904, %v2771
    %v2906 = vpop.permute.xlu0 %2905
    %v2908 = vmul.f32 %v2896, %v2902
    %v2909 = vmul.f32 %v2897, %v2902
    %v2910 = vmul.f32 %v2898, %v2906
    %v2911 = vmul.f32 %v2899, %v2906
    %v2912 = vadd.f32 %v2880, %v2908
    %v2913 = vadd.f32 %v2881, %v2909
    %v2914 = vadd.f32 %v2882, %v2910
    %v2915 = vadd.f32 %v2883, %v2911
    %2916 = vset.pattern.permute.xlu0 9
    %2917 = vperm.xlu0 %2916, %v2770
    %v2918 = vpop.permute.xlu0 %2917
    %2920 = vset.pattern.permute.xlu0 9
    %2921 = vperm.xlu0 %2920, %v2771
    %v2922 = vpop.permute.xlu0 %2921
    %v2924 = vmul.f32 %v444, %v2918
    %v2925 = vmul.f32 %v445, %v2922
    %v2926 = vadd.f32 %v2894, %v2924
    %v2927 = vadd.f32 %v2895, %v2925
    %2928 = vrot.lane.b32.xlu0 %v2770, 123
    %v2929 = vpop.permute.xlu0 %2928
    %2930 = vrot.lane.b32.xlu0 %v2771, 123
    %v2931 = vpop.permute.xlu0 %2930
    %vm2934 = vcmask 39936
    %v2935 = vsel %vm2934, %v2929, 0.0
    %2936 = vadd.xlane.f32.xlu0 %v2935
    %v2937 = vpop.xlane.xlu0 %2936
    %v2938 = vsel %vm2934, %v2931, 0.0
    %2939 = vadd.xlane.f32.xlu0 %v2938
    %v2940 = vpop.xlane.xlu0 %2939
    %v2941 = vpack.c.bf16 %v2927, %v2926
    %v2942 = vld [vmem:[%s7] sm:$0xff]
    %v2943 = vld [vmem:[%s7 + $0x8] sm:$0xff]
    %v2944 = vld [vmem:[%s7 + $0x10] sm:$0xff]
    %v2945 = vld [vmem:[%s7 + $0x18] sm:$0xff]
    %v2950 = vunpack.c.l.b16 %v2942
    %v2951 = vunpack.c.h.b16 %v2942
    %v2952 = vunpack.c.l.b16 %v2943
    %v2953 = vunpack.c.h.b16 %v2943
    %v2954 = vunpack.c.l.b16 %v2944
    %v2955 = vunpack.c.h.b16 %v2944
    %v2956 = vunpack.c.l.b16 %v2945
    %v2957 = vunpack.c.h.b16 %v2945
    %v2958 = vpack.c.b16 %v2952, %v2950
    %v2959 = vpack.c.b16 %v2953, %v2951
    %v2960 = vpack.c.b16 %v2956, %v2954
    %v2961 = vpack.c.b16 %v2957, %v2955
    %v2967 = vsel %vm335, %v2941, 0
    %2969 = vmatprep.subr.bf16.mxu0 %v2959
    %2970 = vmatpush1.bf16.msra.mxu0 %v2958
    %2971 = vmatprep.subr.bf16.mxu0 %v2961
    %2972 = vmatpush1.bf16.msra.mxu0 %v2960
    %2973 = vmatprep.subr.bf16.mxu0 0
    %2974 = vmatpush1.bf16.msra.mxu0 0
    %2975 = vmatprep.subr.bf16.mxu0 0
    %2976 = vmatpush1.bf16.msra.mxu0 0
    %2977 = vmatprep.subr.bf16.mxu0 0
    %2978 = vmatpush1.bf16.msra.mxu0 0
    %2979 = vmatprep.subr.bf16.mxu0 0
    %2980 = vmatpush1.bf16.msra.mxu0 0
    %2981 = vmatprep.subr.bf16.mxu0 0
    %2982 = vmatpush1.bf16.msra.mxu0 0
    %2983 = vmatprep.subr.bf16.mxu0 0
    %2984 = vmatpush1.bf16.msra.mxu0 0
    %2985 = vmatprep.subr.bf16.mxu0 0
    %2986 = vmatpush1.bf16.msra.mxu0 0
    %2987 = vmatprep.subr.bf16.mxu0 0
    %2988 = vmatpush1.bf16.msra.mxu0 0
    %2989 = vmatprep.subr.bf16.mxu0 0
    %2990 = vmatpush1.bf16.msra.mxu0 0
    %2991 = vmatprep.subr.bf16.mxu0 0
    %2992 = vmatpush1.bf16.msra.mxu0 0
    %2993 = vmatprep.subr.bf16.mxu0 0
    %2994 = vmatpush1.bf16.msra.mxu0 0
    %2995 = vmatprep.subr.bf16.mxu0 0
    %2996 = vmatpush1.bf16.msra.mxu0 0
    %2997 = vmatprep.subr.bf16.mxu0 0
    %2998 = vmatpush1.bf16.msra.mxu0 0
    %2999 = vmatprep.subr.bf16.mxu0 0
    %3000 = vmatpush1.bf16.msra.mxu0 0
    %3001 = vmatprep.mubr.bf16.mxu0 0
    %3002 = vmatmul.mubr.bf16.gmra.mrb[0].mxu0 %v2967
    %v3003 = vpop.f32.mrb[0].mxu0
    %v3004 = vadd.f32 0.0, %v3003
    %v3005 = vpop.f32.mrb[0].mxu0
    %v3006 = vadd.f32 0.0, %v3005
    %v3007 = vpop.f32.mrb[0].mxu0
    %v3008 = vadd.f32 0.0, %v3007
    %v3009 = vpop.f32.mrb[0].mxu0
    %v3010 = vadd.f32 0.0, %v3009
    %3011 = vdwg.mxu0
    %v3012 = vadd.f32 %v2912, %v3004
    %v3013 = vadd.f32 %v2913, %v3006
    %v3014 = vadd.f32 %v2914, %v3008
    %v3015 = vadd.f32 %v2915, %v3010
    %v3016 = vld [vmem:[%s8] sm:$0x3]
    %v3018 = vlaneseq
    %v3019 = vshrl.u32 %v3018, 7
    %v3020 = vsub.s32 0, %v3019
    %v3021 = vrot.slane %v3016, %v3020
    %v3022 = vlaneseq
    %v3023 = vshrl.u32 %v3022, 7
    %v3024 = vsub.s32 1, %v3023
    %v3025 = vrot.slane %v3016, %v3024
    %v3028 = vmul.f32 %v3021, %v2937
    %v3029 = vmul.f32 %v3025, %v2937
    %v3030 = vmul.f32 %v3021, %v2940
    %v3031 = vmul.f32 %v3025, %v2940
    %v3032 = vadd.f32 %v3012, %v3028
    %v3033 = vadd.f32 %v3013, %v3029
    %v3034 = vadd.f32 %v3014, %v3030
    %v3035 = vadd.f32 %v3015, %v3031
    %3037 = vset.pattern.permute.xlu0 10
    %3038 = vperm.xlu0 %3037, %v2743
    %v3039 = vpop.permute.xlu0 %3038
    %3042 = vset.pattern.permute.xlu0 10
    %3043 = vperm.xlu0 %3042, %v2746
    %v3044 = vpop.permute.xlu0 %3043
    %v3046 = vadd.f32 %v3032, %v3039
    %v3047 = vadd.f32 %v3033, %v3039
    %v3048 = vadd.f32 %v3034, %v3044
    %v3049 = vadd.f32 %v3035, %v3044
    %v3050 = vpack.c.bf16 %v3048, %v3046
    %v3051 = vpack.c.bf16 %v3049, %v3047
    %v3052 = vld [vmem:[%s16] sm:$0xff]
    %v3053 = vld [vmem:[%s16 + $0x8] sm:$0xff]
    %v3054 = vld [vmem:[%s16 + $0x10] sm:$0xff]
    %v3055 = vld [vmem:[%s16 + $0x18] sm:$0xff]
    %v3056 = vld [vmem:[%s16 + $0x20] sm:$0xff]
    %v3057 = vld [vmem:[%s16 + $0x28] sm:$0xff]
    %v3058 = vld [vmem:[%s16 + $0x30] sm:$0xff]
    %v3059 = vld [vmem:[%s16 + $0x38] sm:$0xff]
    %v3060 = vld [vmem:[%s16 + $0x40] sm:$0xff]
    %v3061 = vld [vmem:[%s16 + $0x48] sm:$0xff]
    %v3062 = vld [vmem:[%s16 + $0x50] sm:$0xff]
    %v3063 = vld [vmem:[%s16 + $0x58] sm:$0xff]
    %v3064 = vld [vmem:[%s16 + $0x60] sm:$0xff]
    %v3065 = vld [vmem:[%s16 + $0x68] sm:$0xff]
    %v3066 = vld [vmem:[%s16 + $0x70] sm:$0xff]
    %v3067 = vld [vmem:[%s16 + $0x78] sm:$0xff]
    %v3068 = vld [vmem:[%s16 + $0x80] sm:$0xff]
    %v3069 = vld [vmem:[%s16 + $0x88] sm:$0xff]
    %v3070 = vld [vmem:[%s16 + $0x90] sm:$0xff]
    %v3071 = vld [vmem:[%s16 + $0x98] sm:$0xff]
    %v3072 = vld [vmem:[%s16 + $0xa0] sm:$0xff]
    %v3073 = vld [vmem:[%s16 + $0xa8] sm:$0xff]
    %v3074 = vld [vmem:[%s16 + $0xb0] sm:$0xff]
    %v3075 = vld [vmem:[%s16 + $0xb8] sm:$0xff]
    %v3076 = vld [vmem:[%s16 + $0xc0] sm:$0xff]
    %v3077 = vld [vmem:[%s16 + $0xc8] sm:$0xff]
    %v3078 = vld [vmem:[%s16 + $0xd0] sm:$0xff]
    %v3079 = vld [vmem:[%s16 + $0xd8] sm:$0xff]
    %v3080 = vld [vmem:[%s16 + $0xe0] sm:$0xff]
    %v3081 = vld [vmem:[%s16 + $0xe8] sm:$0xff]
    %v3082 = vld [vmem:[%s16 + $0xf0] sm:$0xff]
    %v3083 = vld [vmem:[%s16 + $0xf8] sm:$0xff]
    %v3084 = vld [vmem:[%s16 + $0x100] sm:$0xff]
    %v3085 = vld [vmem:[%s16 + $0x108] sm:$0xff]
    %v3086 = vld [vmem:[%s16 + $0x110] sm:$0xff]
    %v3087 = vld [vmem:[%s16 + $0x118] sm:$0xff]
    %v3088 = vld [vmem:[%s16 + $0x120] sm:$0xff]
    %v3089 = vld [vmem:[%s16 + $0x128] sm:$0xff]
    %v3090 = vld [vmem:[%s16 + $0x130] sm:$0xff]
    %v3091 = vld [vmem:[%s16 + $0x138] sm:$0xff]
    %v3092 = vld [vmem:[%s16 + $0x140] sm:$0xff]
    %v3093 = vld [vmem:[%s16 + $0x148] sm:$0xff]
    %v3094 = vld [vmem:[%s16 + $0x150] sm:$0xff]
    %v3095 = vld [vmem:[%s16 + $0x158] sm:$0xff]
    %v3096 = vld [vmem:[%s16 + $0x160] sm:$0xff]
    %v3097 = vld [vmem:[%s16 + $0x168] sm:$0xff]
    %v3098 = vld [vmem:[%s16 + $0x170] sm:$0xff]
    %v3099 = vld [vmem:[%s16 + $0x178] sm:$0xff]
    %v3100 = vld [vmem:[%s16 + $0x180] sm:$0xff]
    %v3101 = vld [vmem:[%s16 + $0x188] sm:$0xff]
    %v3102 = vld [vmem:[%s16 + $0x190] sm:$0xff]
    %v3103 = vld [vmem:[%s16 + $0x198] sm:$0xff]
    %v3104 = vld [vmem:[%s16 + $0x1a0] sm:$0xff]
    %v3105 = vld [vmem:[%s16 + $0x1a8] sm:$0xff]
    %v3106 = vld [vmem:[%s16 + $0x1b0] sm:$0xff]
    %v3107 = vld [vmem:[%s16 + $0x1b8] sm:$0xff]
    %v3108 = vld [vmem:[%s16 + $0x1c0] sm:$0xff]
    %v3109 = vld [vmem:[%s16 + $0x1c8] sm:$0xff]
    %v3110 = vld [vmem:[%s16 + $0x1d0] sm:$0xff]
    %v3111 = vld [vmem:[%s16 + $0x1d8] sm:$0xff]
    %v3112 = vld [vmem:[%s16 + $0x1e0] sm:$0xff]
    %v3113 = vld [vmem:[%s16 + $0x1e8] sm:$0xff]
    %v3114 = vld [vmem:[%s16 + $0x1f0] sm:$0xff]
    %v3115 = vld [vmem:[%s16 + $0x1f8] sm:$0xff]
    %v3116 = vld [vmem:[%s17] sm:$0xf]
    %v3118 = vlaneseq
    %v3119 = vshrl.u32 %v3118, 7
    %v3120 = vsub.s32 0, %v3119
    %v3121 = vrot.slane %v3116, %v3120
    %v3122 = vlaneseq
    %v3123 = vshrl.u32 %v3122, 7
    %v3124 = vsub.s32 1, %v3123
    %v3125 = vrot.slane %v3116, %v3124
    %v3126 = vlaneseq
    %v3127 = vshrl.u32 %v3126, 7
    %v3128 = vsub.s32 2, %v3127
    %v3129 = vrot.slane %v3116, %v3128
    %v3130 = vlaneseq
    %v3131 = vshrl.u32 %v3130, 7
    %v3132 = vsub.s32 3, %v3131
    %v3133 = vrot.slane %v3116, %v3132
    %v3202 = vunpack.c.l.b16 %v3052
    %v3203 = vunpack.c.h.b16 %v3052
    %v3204 = vunpack.c.l.b16 %v3053
    %v3205 = vunpack.c.h.b16 %v3053
    %v3206 = vunpack.c.l.b16 %v3054
    %v3207 = vunpack.c.h.b16 %v3054
    %v3208 = vunpack.c.l.b16 %v3055
    %v3209 = vunpack.c.h.b16 %v3055
    %v3210 = vunpack.c.l.b16 %v3056
    %v3211 = vunpack.c.h.b16 %v3056
    %v3212 = vunpack.c.l.b16 %v3057
    %v3213 = vunpack.c.h.b16 %v3057
    %v3214 = vunpack.c.l.b16 %v3058
    %v3215 = vunpack.c.h.b16 %v3058
    %v3216 = vunpack.c.l.b16 %v3059
    %v3217 = vunpack.c.h.b16 %v3059
    %v3218 = vunpack.c.l.b16 %v3060
    %v3219 = vunpack.c.h.b16 %v3060
    %v3220 = vunpack.c.l.b16 %v3061
    %v3221 = vunpack.c.h.b16 %v3061
    %v3222 = vunpack.c.l.b16 %v3062
    %v3223 = vunpack.c.h.b16 %v3062
    %v3224 = vunpack.c.l.b16 %v3063
    %v3225 = vunpack.c.h.b16 %v3063
    %v3226 = vunpack.c.l.b16 %v3064
    %v3227 = vunpack.c.h.b16 %v3064
    %v3228 = vunpack.c.l.b16 %v3065
    %v3229 = vunpack.c.h.b16 %v3065
    %v3230 = vunpack.c.l.b16 %v3066
    %v3231 = vunpack.c.h.b16 %v3066
    %v3232 = vunpack.c.l.b16 %v3067
    %v3233 = vunpack.c.h.b16 %v3067
    %v3234 = vunpack.c.l.b16 %v3068
    %v3235 = vunpack.c.h.b16 %v3068
    %v3236 = vunpack.c.l.b16 %v3069
    %v3237 = vunpack.c.h.b16 %v3069
    %v3238 = vunpack.c.l.b16 %v3070
    %v3239 = vunpack.c.h.b16 %v3070
    %v3240 = vunpack.c.l.b16 %v3071
    %v3241 = vunpack.c.h.b16 %v3071
    %v3242 = vunpack.c.l.b16 %v3072
    %v3243 = vunpack.c.h.b16 %v3072
    %v3244 = vunpack.c.l.b16 %v3073
    %v3245 = vunpack.c.h.b16 %v3073
    %v3246 = vunpack.c.l.b16 %v3074
    %v3247 = vunpack.c.h.b16 %v3074
    %v3248 = vunpack.c.l.b16 %v3075
    %v3249 = vunpack.c.h.b16 %v3075
    %v3250 = vunpack.c.l.b16 %v3076
    %v3251 = vunpack.c.h.b16 %v3076
    %v3252 = vunpack.c.l.b16 %v3077
    %v3253 = vunpack.c.h.b16 %v3077
    %v3254 = vunpack.c.l.b16 %v3078
    %v3255 = vunpack.c.h.b16 %v3078
    %v3256 = vunpack.c.l.b16 %v3079
    %v3257 = vunpack.c.h.b16 %v3079
    %v3258 = vunpack.c.l.b16 %v3080
    %v3259 = vunpack.c.h.b16 %v3080
    %v3260 = vunpack.c.l.b16 %v3081
    %v3261 = vunpack.c.h.b16 %v3081
    %v3262 = vunpack.c.l.b16 %v3082
    %v3263 = vunpack.c.h.b16 %v3082
    %v3264 = vunpack.c.l.b16 %v3083
    %v3265 = vunpack.c.h.b16 %v3083
    %v3266 = vunpack.c.l.b16 %v3084
    %v3267 = vunpack.c.h.b16 %v3084
    %v3268 = vunpack.c.l.b16 %v3085
    %v3269 = vunpack.c.h.b16 %v3085
    %v3270 = vunpack.c.l.b16 %v3086
    %v3271 = vunpack.c.h.b16 %v3086
    %v3272 = vunpack.c.l.b16 %v3087
    %v3273 = vunpack.c.h.b16 %v3087
    %v3274 = vunpack.c.l.b16 %v3088
    %v3275 = vunpack.c.h.b16 %v3088
    %v3276 = vunpack.c.l.b16 %v3089
    %v3277 = vunpack.c.h.b16 %v3089
    %v3278 = vunpack.c.l.b16 %v3090
    %v3279 = vunpack.c.h.b16 %v3090
    %v3280 = vunpack.c.l.b16 %v3091
    %v3281 = vunpack.c.h.b16 %v3091
    %v3282 = vunpack.c.l.b16 %v3092
    %v3283 = vunpack.c.h.b16 %v3092
    %v3284 = vunpack.c.l.b16 %v3093
    %v3285 = vunpack.c.h.b16 %v3093
    %v3286 = vunpack.c.l.b16 %v3094
    %v3287 = vunpack.c.h.b16 %v3094
    %v3288 = vunpack.c.l.b16 %v3095
    %v3289 = vunpack.c.h.b16 %v3095
    %v3290 = vunpack.c.l.b16 %v3096
    %v3291 = vunpack.c.h.b16 %v3096
    %v3292 = vunpack.c.l.b16 %v3097
    %v3293 = vunpack.c.h.b16 %v3097
    %v3294 = vunpack.c.l.b16 %v3098
    %v3295 = vunpack.c.h.b16 %v3098
    %v3296 = vunpack.c.l.b16 %v3099
    %v3297 = vunpack.c.h.b16 %v3099
    %v3298 = vunpack.c.l.b16 %v3100
    %v3299 = vunpack.c.h.b16 %v3100
    %v3300 = vunpack.c.l.b16 %v3101
    %v3301 = vunpack.c.h.b16 %v3101
    %v3302 = vunpack.c.l.b16 %v3102
    %v3303 = vunpack.c.h.b16 %v3102
    %v3304 = vunpack.c.l.b16 %v3103
    %v3305 = vunpack.c.h.b16 %v3103
    %v3306 = vunpack.c.l.b16 %v3104
    %v3307 = vunpack.c.h.b16 %v3104
    %v3308 = vunpack.c.l.b16 %v3105
    %v3309 = vunpack.c.h.b16 %v3105
    %v3310 = vunpack.c.l.b16 %v3106
    %v3311 = vunpack.c.h.b16 %v3106
    %v3312 = vunpack.c.l.b16 %v3107
    %v3313 = vunpack.c.h.b16 %v3107
    %v3314 = vunpack.c.l.b16 %v3108
    %v3315 = vunpack.c.h.b16 %v3108
    %v3316 = vunpack.c.l.b16 %v3109
    %v3317 = vunpack.c.h.b16 %v3109
    %v3318 = vunpack.c.l.b16 %v3110
    %v3319 = vunpack.c.h.b16 %v3110
    %v3320 = vunpack.c.l.b16 %v3111
    %v3321 = vunpack.c.h.b16 %v3111
    %v3322 = vunpack.c.l.b16 %v3112
    %v3323 = vunpack.c.h.b16 %v3112
    %v3324 = vunpack.c.l.b16 %v3113
    %v3325 = vunpack.c.h.b16 %v3113
    %v3326 = vunpack.c.l.b16 %v3114
    %v3327 = vunpack.c.h.b16 %v3114
    %v3328 = vunpack.c.l.b16 %v3115
    %v3329 = vunpack.c.h.b16 %v3115
    %v3330 = vpack.c.b16 %v3206, %v3202
    %v3331 = vpack.c.b16 %v3207, %v3203
    %v3332 = vpack.c.b16 %v3208, %v3204
    %v3333 = vpack.c.b16 %v3209, %v3205
    %v3334 = vpack.c.b16 %v3214, %v3210
    %v3335 = vpack.c.b16 %v3215, %v3211
    %v3336 = vpack.c.b16 %v3216, %v3212
    %v3337 = vpack.c.b16 %v3217, %v3213
    %v3338 = vpack.c.b16 %v3222, %v3218
    %v3339 = vpack.c.b16 %v3223, %v3219
    %v3340 = vpack.c.b16 %v3224, %v3220
    %v3341 = vpack.c.b16 %v3225, %v3221
    %v3342 = vpack.c.b16 %v3230, %v3226
    %v3343 = vpack.c.b16 %v3231, %v3227
    %v3344 = vpack.c.b16 %v3232, %v3228
    %v3345 = vpack.c.b16 %v3233, %v3229
    %v3346 = vpack.c.b16 %v3238, %v3234
    %v3347 = vpack.c.b16 %v3239, %v3235
    %v3348 = vpack.c.b16 %v3240, %v3236
    %v3349 = vpack.c.b16 %v3241, %v3237
    %v3350 = vpack.c.b16 %v3246, %v3242
    %v3351 = vpack.c.b16 %v3247, %v3243
    %v3352 = vpack.c.b16 %v3248, %v3244
    %v3353 = vpack.c.b16 %v3249, %v3245
    %v3354 = vpack.c.b16 %v3254, %v3250
    %v3355 = vpack.c.b16 %v3255, %v3251
    %v3356 = vpack.c.b16 %v3256, %v3252
    %v3357 = vpack.c.b16 %v3257, %v3253
    %v3358 = vpack.c.b16 %v3262, %v3258
    %v3359 = vpack.c.b16 %v3263, %v3259
    %v3360 = vpack.c.b16 %v3264, %v3260
    %v3361 = vpack.c.b16 %v3265, %v3261
    %v3362 = vpack.c.b16 %v3270, %v3266
    %v3363 = vpack.c.b16 %v3271, %v3267
    %v3364 = vpack.c.b16 %v3272, %v3268
    %v3365 = vpack.c.b16 %v3273, %v3269
    %v3366 = vpack.c.b16 %v3278, %v3274
    %v3367 = vpack.c.b16 %v3279, %v3275
    %v3368 = vpack.c.b16 %v3280, %v3276
    %v3369 = vpack.c.b16 %v3281, %v3277
    %v3370 = vpack.c.b16 %v3286, %v3282
    %v3371 = vpack.c.b16 %v3287, %v3283
    %v3372 = vpack.c.b16 %v3288, %v3284
    %v3373 = vpack.c.b16 %v3289, %v3285
    %v3374 = vpack.c.b16 %v3294, %v3290
    %v3375 = vpack.c.b16 %v3295, %v3291
    %v3376 = vpack.c.b16 %v3296, %v3292
    %v3377 = vpack.c.b16 %v3297, %v3293
    %v3378 = vpack.c.b16 %v3302, %v3298
    %v3379 = vpack.c.b16 %v3303, %v3299
    %v3380 = vpack.c.b16 %v3304, %v3300
    %v3381 = vpack.c.b16 %v3305, %v3301
    %v3382 = vpack.c.b16 %v3310, %v3306
    %v3383 = vpack.c.b16 %v3311, %v3307
    %v3384 = vpack.c.b16 %v3312, %v3308
    %v3385 = vpack.c.b16 %v3313, %v3309
    %v3386 = vpack.c.b16 %v3318, %v3314
    %v3387 = vpack.c.b16 %v3319, %v3315
    %v3388 = vpack.c.b16 %v3320, %v3316
    %v3389 = vpack.c.b16 %v3321, %v3317
    %v3390 = vpack.c.b16 %v3326, %v3322
    %v3391 = vpack.c.b16 %v3327, %v3323
    %v3392 = vpack.c.b16 %v3328, %v3324
    %v3393 = vpack.c.b16 %v3329, %v3325
    %3458 = vmatprep.subr.bf16.mxu0 %v3331
    %3459 = vmatpush1.bf16.msra.mxu0 %v3330
    %3460 = vmatprep.subr.bf16.mxu0 %v3335
    %3461 = vmatpush1.bf16.msra.mxu0 %v3334
    %3462 = vmatprep.subr.bf16.mxu0 %v3339
    %3463 = vmatpush1.bf16.msra.mxu0 %v3338
    %3464 = vmatprep.subr.bf16.mxu0 %v3343
    %3465 = vmatpush1.bf16.msra.mxu0 %v3342
    %3466 = vmatprep.subr.bf16.mxu0 %v3347
    %3467 = vmatpush1.bf16.msra.mxu0 %v3346
    %3468 = vmatprep.subr.bf16.mxu0 %v3351
    %3469 = vmatpush1.bf16.msra.mxu0 %v3350
    %3470 = vmatprep.subr.bf16.mxu0 %v3355
    %3471 = vmatpush1.bf16.msra.mxu0 %v3354
    %3472 = vmatprep.subr.bf16.mxu0 %v3359
    %3473 = vmatpush1.bf16.msra.mxu0 %v3358
    %3474 = vmatprep.subr.bf16.mxu0 %v3363
    %3475 = vmatpush1.bf16.msra.mxu0 %v3362
    %3476 = vmatprep.subr.bf16.mxu0 %v3367
    %3477 = vmatpush1.bf16.msra.mxu0 %v3366
    %3478 = vmatprep.subr.bf16.mxu0 %v3371
    %3479 = vmatpush1.bf16.msra.mxu0 %v3370
    %3480 = vmatprep.subr.bf16.mxu0 %v3375
    %3481 = vmatpush1.bf16.msra.mxu0 %v3374
    %3482 = vmatprep.subr.bf16.mxu0 %v3379
    %3483 = vmatpush1.bf16.msra.mxu0 %v3378
    %3484 = vmatprep.subr.bf16.mxu0 %v3383
    %3485 = vmatpush1.bf16.msra.mxu0 %v3382
    %3486 = vmatprep.subr.bf16.mxu0 %v3387
    %3487 = vmatpush1.bf16.msra.mxu0 %v3386
    %3488 = vmatprep.subr.bf16.mxu0 %v3391
    %3489 = vmatpush1.bf16.msra.mxu0 %v3390
    %3490 = vmatprep.mubr.bf16.mxu0 %v3051
    %3491 = vmatmul.mubr.bf16.gmra.mrb[0].mxu0 %v3050
    %v3492 = vpop.f32.mrb[0].mxu0
    %v3493 = vadd.f32 %v3121, %v3492
    %v3494 = vpop.f32.mrb[0].mxu0
    %v3495 = vadd.f32 %v3125, %v3494
    %v3496 = vpop.f32.mrb[0].mxu0
    %v3497 = vadd.f32 %v3121, %v3496
    %v3498 = vpop.f32.mrb[0].mxu0
    %v3499 = vadd.f32 %v3125, %v3498
    %3500 = vdwg.mxu0
    %3501 = vmatprep.subr.bf16.mxu0 %v3333
    %3502 = vmatpush1.bf16.msra.mxu0 %v3332
    %3503 = vmatprep.subr.bf16.mxu0 %v3337
    %3504 = vmatpush1.bf16.msra.mxu0 %v3336
    %3505 = vmatprep.subr.bf16.mxu0 %v3341
    %3506 = vmatpush1.bf16.msra.mxu0 %v3340
    %3507 = vmatprep.subr.bf16.mxu0 %v3345
    %3508 = vmatpush1.bf16.msra.mxu0 %v3344
    %3509 = vmatprep.subr.bf16.mxu0 %v3349
    %3510 = vmatpush1.bf16.msra.mxu0 %v3348
    %3511 = vmatprep.subr.bf16.mxu0 %v3353
    %3512 = vmatpush1.bf16.msra.mxu0 %v3352
    %3513 = vmatprep.subr.bf16.mxu0 %v3357
    %3514 = vmatpush1.bf16.msra.mxu0 %v3356
    %3515 = vmatprep.subr.bf16.mxu0 %v3361
    %3516 = vmatpush1.bf16.msra.mxu0 %v3360
    %3517 = vmatprep.subr.bf16.mxu0 %v3365
    %3518 = vmatpush1.bf16.msra.mxu0 %v3364
    %3519 = vmatprep.subr.bf16.mxu0 %v3369
    %3520 = vmatpush1.bf16.msra.mxu0 %v3368
    %3521 = vmatprep.subr.bf16.mxu0 %v3373
    %3522 = vmatpush1.bf16.msra.mxu0 %v3372
    %3523 = vmatprep.subr.bf16.mxu0 %v3377
    %3524 = vmatpush1.bf16.msra.mxu0 %v3376
    %3525 = vmatprep.subr.bf16.mxu0 %v3381
    %3526 = vmatpush1.bf16.msra.mxu0 %v3380
    %3527 = vmatprep.subr.bf16.mxu0 %v3385
    %3528 = vmatpush1.bf16.msra.mxu0 %v3384
    %3529 = vmatprep.subr.bf16.mxu0 %v3389
    %3530 = vmatpush1.bf16.msra.mxu0 %v3388
    %3531 = vmatprep.subr.bf16.mxu0 %v3393
    %3532 = vmatpush1.bf16.msra.mxu0 %v3392
    %3533 = vmatprep.mubr.bf16.mxu0 %v3051
    %3534 = vmatmul.mubr.bf16.gmra.mrb[0].mxu0 %v3050
    %v3535 = vpop.f32.mrb[0].mxu0
    %v3536 = vadd.f32 %v3129, %v3535
    %v3537 = vpop.f32.mrb[0].mxu0
    %v3538 = vadd.f32 %v3133, %v3537
    %v3539 = vpop.f32.mrb[0].mxu0
    %v3540 = vadd.f32 %v3129, %v3539
    %v3541 = vpop.f32.mrb[0].mxu0
    %v3542 = vadd.f32 %v3133, %v3541
    %3543 = vdwg.mxu0
    %v3544 = vmax.f32 %v3493, 0.0
    %v3545 = vmax.f32 %v3495, 0.0
    %v3546 = vmax.f32 %v3536, 0.0
    %v3547 = vmax.f32 %v3538, 0.0
    %v3548 = vmax.f32 %v3497, 0.0
    %v3549 = vmax.f32 %v3499, 0.0
    %v3550 = vmax.f32 %v3540, 0.0
    %v3551 = vmax.f32 %v3542, 0.0
    %v3552 = vpack.c.bf16 %v3548, %v3544
    %v3553 = vpack.c.bf16 %v3549, %v3545
    %v3554 = vpack.c.bf16 %v3550, %v3546
    %v3555 = vpack.c.bf16 %v3551, %v3547
    %v3556 = vld [vmem:[%s18] sm:$0xf]
    %v3557 = vld [vmem:[%s18 + $0x4] sm:$0xf]
    %v3558 = vld [vmem:[%s18 + $0x8] sm:$0xf]
    %v3559 = vld [vmem:[%s18 + $0xc] sm:$0xf]
    %v3560 = vld [vmem:[%s18 + $0x10] sm:$0xf]
    %v3561 = vld [vmem:[%s18 + $0x14] sm:$0xf]
    %v3562 = vld [vmem:[%s18 + $0x18] sm:$0xf]
    %v3563 = vld [vmem:[%s18 + $0x1c] sm:$0xf]
    %v3564 = vld [vmem:[%s18 + $0x20] sm:$0xf]
    %v3565 = vld [vmem:[%s18 + $0x24] sm:$0xf]
    %v3566 = vld [vmem:[%s18 + $0x28] sm:$0xf]
    %v3567 = vld [vmem:[%s18 + $0x2c] sm:$0xf]
    %v3568 = vld [vmem:[%s18 + $0x30] sm:$0xf]
    %v3569 = vld [vmem:[%s18 + $0x34] sm:$0xf]
    %v3570 = vld [vmem:[%s18 + $0x38] sm:$0xf]
    %v3571 = vld [vmem:[%s18 + $0x3c] sm:$0xf]
    %v3572 = vld [vmem:[%s18 + $0x40] sm:$0xf]
    %v3573 = vld [vmem:[%s18 + $0x44] sm:$0xf]
    %v3574 = vld [vmem:[%s18 + $0x48] sm:$0xf]
    %v3575 = vld [vmem:[%s18 + $0x4c] sm:$0xf]
    %v3576 = vld [vmem:[%s18 + $0x50] sm:$0xf]
    %v3577 = vld [vmem:[%s18 + $0x54] sm:$0xf]
    %v3578 = vld [vmem:[%s18 + $0x58] sm:$0xf]
    %v3579 = vld [vmem:[%s18 + $0x5c] sm:$0xf]
    %v3580 = vld [vmem:[%s18 + $0x60] sm:$0xf]
    %v3581 = vld [vmem:[%s18 + $0x64] sm:$0xf]
    %v3582 = vld [vmem:[%s18 + $0x68] sm:$0xf]
    %v3583 = vld [vmem:[%s18 + $0x6c] sm:$0xf]
    %v3584 = vld [vmem:[%s18 + $0x70] sm:$0xf]
    %v3585 = vld [vmem:[%s18 + $0x74] sm:$0xf]
    %v3586 = vld [vmem:[%s18 + $0x78] sm:$0xf]
    %v3587 = vld [vmem:[%s18 + $0x7c] sm:$0xf]
    %v3588 = vld [vmem:[%s18 + $0x80] sm:$0xf]
    %v3589 = vld [vmem:[%s18 + $0x84] sm:$0xf]
    %v3590 = vld [vmem:[%s18 + $0x88] sm:$0xf]
    %v3591 = vld [vmem:[%s18 + $0x8c] sm:$0xf]
    %v3592 = vld [vmem:[%s18 + $0x90] sm:$0xf]
    %v3593 = vld [vmem:[%s18 + $0x94] sm:$0xf]
    %v3594 = vld [vmem:[%s18 + $0x98] sm:$0xf]
    %v3595 = vld [vmem:[%s18 + $0x9c] sm:$0xf]
    %v3596 = vld [vmem:[%s18 + $0xa0] sm:$0xf]
    %v3597 = vld [vmem:[%s18 + $0xa4] sm:$0xf]
    %v3598 = vld [vmem:[%s18 + $0xa8] sm:$0xf]
    %v3599 = vld [vmem:[%s18 + $0xac] sm:$0xf]
    %v3600 = vld [vmem:[%s18 + $0xb0] sm:$0xf]
    %v3601 = vld [vmem:[%s18 + $0xb4] sm:$0xf]
    %v3602 = vld [vmem:[%s18 + $0xb8] sm:$0xf]
    %v3603 = vld [vmem:[%s18 + $0xbc] sm:$0xf]
    %v3604 = vld [vmem:[%s18 + $0xc0] sm:$0xf]
    %v3605 = vld [vmem:[%s18 + $0xc4] sm:$0xf]
    %v3606 = vld [vmem:[%s18 + $0xc8] sm:$0xf]
    %v3607 = vld [vmem:[%s18 + $0xcc] sm:$0xf]
    %v3608 = vld [vmem:[%s18 + $0xd0] sm:$0xf]
    %v3609 = vld [vmem:[%s18 + $0xd4] sm:$0xf]
    %v3610 = vld [vmem:[%s18 + $0xd8] sm:$0xf]
    %v3611 = vld [vmem:[%s18 + $0xdc] sm:$0xf]
    %v3612 = vld [vmem:[%s18 + $0xe0] sm:$0xf]
    %v3613 = vld [vmem:[%s18 + $0xe4] sm:$0xf]
    %v3614 = vld [vmem:[%s18 + $0xe8] sm:$0xf]
    %v3615 = vld [vmem:[%s18 + $0xec] sm:$0xf]
    %v3616 = vld [vmem:[%s18 + $0xf0] sm:$0xf]
    %v3617 = vld [vmem:[%s18 + $0xf4] sm:$0xf]
    %v3618 = vld [vmem:[%s18 + $0xf8] sm:$0xf]
    %v3619 = vld [vmem:[%s18 + $0xfc] sm:$0xf]
    %v3620 = vld [vmem:[%s19] sm:$0x1]
    %v3622 = vlaneseq
    %v3623 = vshrl.u32 %v3622, 7
    %v3624 = vsub.s32 0, %v3623
    %v3625 = vrot.slane %v3620, %v3624
    %v3691 = vunpack.c.l.b16 %v3556
    %v3692 = vunpack.c.l.b16 %v3557
    %v3693 = vunpack.c.l.b16 %v3558
    %v3694 = vunpack.c.l.b16 %v3559
    %v3695 = vunpack.c.l.b16 %v3560
    %v3696 = vunpack.c.l.b16 %v3561
    %v3697 = vunpack.c.l.b16 %v3562
    %v3698 = vunpack.c.l.b16 %v3563
    %v3699 = vunpack.c.l.b16 %v3564
    %v3700 = vunpack.c.l.b16 %v3565
    %v3701 = vunpack.c.l.b16 %v3566
    %v3702 = vunpack.c.l.b16 %v3567
    %v3703 = vunpack.c.l.b16 %v3568
    %v3704 = vunpack.c.l.b16 %v3569
    %v3705 = vunpack.c.l.b16 %v3570
    %v3706 = vunpack.c.l.b16 %v3571
    %v3707 = vunpack.c.l.b16 %v3572
    %v3708 = vunpack.c.l.b16 %v3573
    %v3709 = vunpack.c.l.b16 %v3574
    %v3710 = vunpack.c.l.b16 %v3575
    %v3711 = vunpack.c.l.b16 %v3576
    %v3712 = vunpack.c.l.b16 %v3577
    %v3713 = vunpack.c.l.b16 %v3578
    %v3714 = vunpack.c.l.b16 %v3579
    %v3715 = vunpack.c.l.b16 %v3580
    %v3716 = vunpack.c.l.b16 %v3581
    %v3717 = vunpack.c.l.b16 %v3582
    %v3718 = vunpack.c.l.b16 %v3583
    %v3719 = vunpack.c.l.b16 %v3584
    %v3720 = vunpack.c.l.b16 %v3585
    %v3721 = vunpack.c.l.b16 %v3586
    %v3722 = vunpack.c.l.b16 %v3587
    %v3723 = vunpack.c.l.b16 %v3588
    %v3724 = vunpack.c.l.b16 %v3589
    %v3725 = vunpack.c.l.b16 %v3590
    %v3726 = vunpack.c.l.b16 %v3591
    %v3727 = vunpack.c.l.b16 %v3592
    %v3728 = vunpack.c.l.b16 %v3593
    %v3729 = vunpack.c.l.b16 %v3594
    %v3730 = vunpack.c.l.b16 %v3595
    %v3731 = vunpack.c.l.b16 %v3596
    %v3732 = vunpack.c.l.b16 %v3597
    %v3733 = vunpack.c.l.b16 %v3598
    %v3734 = vunpack.c.l.b16 %v3599
    %v3735 = vunpack.c.l.b16 %v3600
    %v3736 = vunpack.c.l.b16 %v3601
    %v3737 = vunpack.c.l.b16 %v3602
    %v3738 = vunpack.c.l.b16 %v3603
    %v3739 = vunpack.c.l.b16 %v3604
    %v3740 = vunpack.c.l.b16 %v3605
    %v3741 = vunpack.c.l.b16 %v3606
    %v3742 = vunpack.c.l.b16 %v3607
    %v3743 = vunpack.c.l.b16 %v3608
    %v3744 = vunpack.c.l.b16 %v3609
    %v3745 = vunpack.c.l.b16 %v3610
    %v3746 = vunpack.c.l.b16 %v3611
    %v3747 = vunpack.c.l.b16 %v3612
    %v3748 = vunpack.c.l.b16 %v3613
    %v3749 = vunpack.c.l.b16 %v3614
    %v3750 = vunpack.c.l.b16 %v3615
    %v3751 = vunpack.c.l.b16 %v3616
    %v3752 = vunpack.c.l.b16 %v3617
    %v3753 = vunpack.c.l.b16 %v3618
    %v3754 = vunpack.c.l.b16 %v3619
    %v3755 = vpack.c.b16 %v3692, %v3691
    %v3756 = vpack.c.b16 %v3694, %v3693
    %v3757 = vpack.c.b16 %v3696, %v3695
    %v3758 = vpack.c.b16 %v3698, %v3697
    %v3759 = vpack.c.b16 %v3700, %v3699
    %v3760 = vpack.c.b16 %v3702, %v3701
    %v3761 = vpack.c.b16 %v3704, %v3703
    %v3762 = vpack.c.b16 %v3706, %v3705
    %v3763 = vpack.c.b16 %v3708, %v3707
    %v3764 = vpack.c.b16 %v3710, %v3709
    %v3765 = vpack.c.b16 %v3712, %v3711
    %v3766 = vpack.c.b16 %v3714, %v3713
    %v3767 = vpack.c.b16 %v3716, %v3715
    %v3768 = vpack.c.b16 %v3718, %v3717
    %v3769 = vpack.c.b16 %v3720, %v3719
    %v3770 = vpack.c.b16 %v3722, %v3721
    %v3771 = vpack.c.b16 %v3724, %v3723
    %v3772 = vpack.c.b16 %v3726, %v3725
    %v3773 = vpack.c.b16 %v3728, %v3727
    %v3774 = vpack.c.b16 %v3730, %v3729
    %v3775 = vpack.c.b16 %v3732, %v3731
    %v3776 = vpack.c.b16 %v3734, %v3733
    %v3777 = vpack.c.b16 %v3736, %v3735
    %v3778 = vpack.c.b16 %v3738, %v3737
    %v3779 = vpack.c.b16 %v3740, %v3739
    %v3780 = vpack.c.b16 %v3742, %v3741
    %v3781 = vpack.c.b16 %v3744, %v3743
    %v3782 = vpack.c.b16 %v3746, %v3745
    %v3783 = vpack.c.b16 %v3748, %v3747
    %v3784 = vpack.c.b16 %v3750, %v3749
    %v3785 = vpack.c.b16 %v3752, %v3751
    %v3786 = vpack.c.b16 %v3754, %v3753
    %3819 = vmatprep.subr.bf16.mxu0 0
    %3820 = vmatpush1.bf16.msra.mxu0 %v3755
    %3821 = vmatprep.subr.bf16.mxu0 0
    %3822 = vmatpush1.bf16.msra.mxu0 %v3756
    %3823 = vmatprep.subr.bf16.mxu0 0
    %3824 = vmatpush1.bf16.msra.mxu0 %v3757
    %3825 = vmatprep.subr.bf16.mxu0 0
    %3826 = vmatpush1.bf16.msra.mxu0 %v3758
    %3827 = vmatprep.subr.bf16.mxu0 0
    %3828 = vmatpush1.bf16.msra.mxu0 %v3759
    %3829 = vmatprep.subr.bf16.mxu0 0
    %3830 = vmatpush1.bf16.msra.mxu0 %v3760
    %3831 = vmatprep.subr.bf16.mxu0 0
    %3832 = vmatpush1.bf16.msra.mxu0 %v3761
    %3833 = vmatprep.subr.bf16.mxu0 0
    %3834 = vmatpush1.bf16.msra.mxu0 %v3762
    %3835 = vmatprep.subr.bf16.mxu0 0
    %3836 = vmatpush1.bf16.msra.mxu0 %v3763
    %3837 = vmatprep.subr.bf16.mxu0 0
    %3838 = vmatpush1.bf16.msra.mxu0 %v3764
    %3839 = vmatprep.subr.bf16.mxu0 0
    %3840 = vmatpush1.bf16.msra.mxu0 %v3765
    %3841 = vmatprep.subr.bf16.mxu0 0
    %3842 = vmatpush1.bf16.msra.mxu0 %v3766
    %3843 = vmatprep.subr.bf16.mxu0 0
    %3844 = vmatpush1.bf16.msra.mxu0 %v3767
    %3845 = vmatprep.subr.bf16.mxu0 0
    %3846 = vmatpush1.bf16.msra.mxu0 %v3768
    %3847 = vmatprep.subr.bf16.mxu0 0
    %3848 = vmatpush1.bf16.msra.mxu0 %v3769
    %3849 = vmatprep.subr.bf16.mxu0 0
    %3850 = vmatpush1.bf16.msra.mxu0 %v3770
    %3851 = vmatprep.mubr.bf16.mxu0 %v3553
    %3852 = vmatmul.mubr.bf16.gmra.mrb[0].mxu0 %v3552
    %v3853 = vpop.f32.mrb[0].mxu0
    %v3854 = vadd.f32 %v3625, %v3853
    %v3855 = vpop.f32.mrb[0].mxu0
    %v3856 = vpop.f32.mrb[0].mxu0
    %v3857 = vadd.f32 %v3625, %v3856
    %v3858 = vpop.f32.mrb[0].mxu0
    %3859 = vdwg.mxu0
    %3860 = vmatprep.subr.bf16.mxu0 0
    %3861 = vmatpush1.bf16.msra.mxu0 %v3771
    %3862 = vmatprep.subr.bf16.mxu0 0
    %3863 = vmatpush1.bf16.msra.mxu0 %v3772
    %3864 = vmatprep.subr.bf16.mxu0 0
    %3865 = vmatpush1.bf16.msra.mxu0 %v3773
    %3866 = vmatprep.subr.bf16.mxu0 0
    %3867 = vmatpush1.bf16.msra.mxu0 %v3774
    %3868 = vmatprep.subr.bf16.mxu0 0
    %3869 = vmatpush1.bf16.msra.mxu0 %v3775
    %3870 = vmatprep.subr.bf16.mxu0 0
    %3871 = vmatpush1.bf16.msra.mxu0 %v3776
    %3872 = vmatprep.subr.bf16.mxu0 0
    %3873 = vmatpush1.bf16.msra.mxu0 %v3777
    %3874 = vmatprep.subr.bf16.mxu0 0
    %3875 = vmatpush1.bf16.msra.mxu0 %v3778
    %3876 = vmatprep.subr.bf16.mxu0 0
    %3877 = vmatpush1.bf16.msra.mxu0 %v3779
    %3878 = vmatprep.subr.bf16.mxu0 0
    %3879 = vmatpush1.bf16.msra.mxu0 %v3780
    %3880 = vmatprep.subr.bf16.mxu0 0
    %3881 = vmatpush1.bf16.msra.mxu0 %v3781
    %3882 = vmatprep.subr.bf16.mxu0 0
    %3883 = vmatpush1.bf16.msra.mxu0 %v3782
    %3884 = vmatprep.subr.bf16.mxu0 0
    %3885 = vmatpush1.bf16.msra.mxu0 %v3783
    %3886 = vmatprep.subr.bf16.mxu0 0
    %3887 = vmatpush1.bf16.msra.mxu0 %v3784
    %3888 = vmatprep.subr.bf16.mxu0 0
    %3889 = vmatpush1.bf16.msra.mxu0 %v3785
    %3890 = vmatprep.subr.bf16.mxu0 0
    %3891 = vmatpush1.bf16.msra.mxu0 %v3786
    %3892 = vmatprep.mubr.bf16.mxu0 %v3555
    %3893 = vmatmul.mubr.bf16.gmra.mrb[0].mxu0 %v3554
    %v3894 = vpop.f32.mrb[0].mxu0
    %v3895 = vadd.f32 %v3854, %v3894
    %v3896 = vpop.f32.mrb[0].mxu0
    %v3897 = vpop.f32.mrb[0].mxu0
    %v3898 = vadd.f32 %v3857, %v3897
    %v3899 = vpop.f32.mrb[0].mxu0
    %3900 = vdwg.mxu0
    %3901 = vst [vmem:[#allocation2] sm:$0xff] %v3895
    %3902 = vst [vmem:[#allocation2 + $0x8] sm:$0xff] %v3898
    // Predicated region
    $region82: #{mynet_forward.1} parent=1 // pred_check
      _
    $region83: #{mynet_forward.1} parent=1 // pred_check_branch
      %3904 = sbr.rel (0) target = $region85
    $region84: #{mynet_forward.1} parent=1 // pred_region
      %s3906 = ssub.s32 256, 256
      %3907 = vsyncadd [#allocation3], %s3906
      %s3908 = sshll.u32 [#allocation2], 4
      %s3909 = int_to_ptr.vmem [resolvable:$true] %s3908
      %3914 = dma.vmem_to_hbm [thread:$0]  %s3909, 256, %s20, [#allocation3], 128, 128, 8
    $region85: #{mynet_forward.1} parent=1 // pred_fallthru
      _
    // Predicated region
    $region86: #{mynet_forward.1} parent=1 // pred_check
      _
    $region87: #{mynet_forward.1} parent=1 // pred_check_branch
      %3916 = sbr.rel (0) target = $region89
    $region88: #{mynet_forward.1} parent=1 // pred_region
      %3917 = dma.done [#allocation3], 256
    $region89: #{mynet_forward.1} parent=1 // pred_fallthru
      _
    %3918 = vsyncpa [#allocation3], 1

</llo_original>
